<compile_context>
chip_gen: v7x
topology: tpu7x:2x2x1
jax: 0.10.0
libtpu: 0.0.40
codegen_flags: <defaults>
</compile_context>

<pallas_src>
import jax
import jax.numpy as jnp
from jax.experimental import pallas as pl
from jax.experimental.pallas import tpu as pltpu


# ----------------------------------------------------------------------------
# Kernel
# ----------------------------------------------------------------------------
def encoder_kernel(x_ref,
                   w1_ref, b1_ref,
                   w2_ref, b2_ref,
                   w3_ref, b3_ref,
                   w4_ref, b4_ref,
                   wh_ref, bh_ref,
                   head_out_ref):
    """Fused 4x(Linear+ReLU) + fused lane-dense [M | logvar | 0...] head."""

    def dense(h, w_ref, b_ref, relu):
        # bf16 matmul inputs (MXU-native), f32 accumulation + bias (+ ReLU).
        y = jnp.dot(h.astype(jnp.bfloat16), w_ref[...],
                    preferred_element_type=jnp.float32) + b_ref[...]
        return jnp.maximum(y, 0.0) if relu else y

    h = x_ref[...]
    h = dense(h, w1_ref, b1_ref, True)     # (TB, 768)
    h = dense(h, w2_ref, b2_ref, True)     # (TB, 512)
    h = dense(h, w3_ref, b3_ref, True)     # (TB, 256)
    h = dense(h, w4_ref, b4_ref, True)     # (TB, 128)  (64 real + 64 zero)
    out = dense(h, wh_ref, bh_ref, False)  # (TB, 128)  lane-dense head
    head_out_ref[...] = out.astype(head_out_ref.dtype)


# ----------------------------------------------------------------------------
# Wrapper
# ----------------------------------------------------------------------------
def _round_up(n, m):
    return ((n + m - 1) // m) * m


def _tb_cap_for_device():
    """Generation-aware max batch tile: v5-class MXU has 128 rows so 256 is
    plenty; v6e / v7x have 256-row MXUs and faster HBM -> 512."""
    try:
        kind = jax.devices()[0].device_kind.lower()
    except Exception:
        return 256
    for old in ("v2", "v3", "v4", "v5"):
        if old in kind:
            return 256
    return 512


def _pick_batch_tile(B, tb_cap):
    """Largest tile <= tb_cap keeping batch-padding waste under ~25%."""
    if B <= tb_cap:
        return _round_up(B, 8 if B <= 64 else 16)
    tb = tb_cap
    while tb > 64:
        Bp = _round_up(B, tb)
        if 4 * (Bp - B) <= Bp:          # padded rows < 25%
            return tb
        tb //= 2
    return tb


def encoder_forward(x, kernel_params, *, batch_tile=None):
    """Run the fused Encoder forward pass.

    x: (B, input_dim) f32.  kernel_params: output of prepare_kernel_params.
    Returns (M, logvar), each (B, latent_dim) f32.
    """
    B, input_dim = x.shape
    latent_dim = int(kernel_params["latent_dim"])
    head_cols = kernel_params["bhead"].shape[1]   # lane-padded (>= 2*latent)

    tb_cap = batch_tile if batch_tile is not None else _tb_cap_for_device()
    TB = _pick_batch_tile(B, tb_cap)
    Bp = _round_up(B, TB)
    if Bp != B:
        x = jnp.pad(x, ((0, Bp - B), (0, 0)))
    grid = (Bp // TB,)

    weight_args = (
        kernel_params["w1"], kernel_params["b1"],
        kernel_params["w2"], kernel_params["b2"],
        kernel_params["w3"], kernel_params["b3"],
        kernel_params["w4"], kernel_params["b4"],
        kernel_params["whead"], kernel_params["bhead"],
    )

    # Activations / outputs tile over the batch axis (lane-dense output).
    x_spec = pl.BlockSpec((TB, input_dim), lambda i: (i, 0))
    out_spec = pl.BlockSpec((TB, head_cols), lambda i: (i, 0))

    # Weights / biases: full-array blocks with a constant block index, so they
    # are DMA'd once and stay VMEM-resident across all batch tiles.
    def resident_spec(a):
        return pl.BlockSpec(a.shape, lambda i: (0, 0))

    in_specs = [x_spec] + [resident_spec(a) for a in weight_args]

    # VMEM sizing: weights (x2 buffering headroom) + double-buffered x/out
    # tiles + f32 intermediates + margin, capped at 32 MiB (v7x-safe).
    weight_bytes = sum(int(a.size) * a.dtype.itemsize for a in weight_args)
    hid_cols = sum(kernel_params[k].shape[1] for k in ("b1", "b2", "b3", "b4"))
    tile_bytes = TB * (input_dim + head_cols) * 4
    act_bytes = TB * hid_cols * 4
    vmem_bytes = int(2 * weight_bytes + 2 * tile_bytes + 2 * act_bytes) + (4 << 20)
    vmem_bytes = max(16 << 20, min(vmem_bytes, 32 << 20))

    head = pl.pallas_call(
        encoder_kernel,
        out_shape=jax.ShapeDtypeStruct((Bp, head_cols), jnp.float32),
        grid_spec=pltpu.PrefetchScalarGridSpec(
            num_scalar_prefetch=0,
            grid=grid,
            in_specs=in_specs,
            out_specs=out_spec,
        ),
        compiler_params=pltpu.CompilerParams(
            dimension_semantics=("parallel",),   # batch tiles are independent
            vmem_limit_bytes=vmem_bytes,
        ),
    )(x, *weight_args)

    head = head[:B]
    return head[:, :latent_dim], head[:, latent_dim:2 * latent_dim]


# ----------------------------------------------------------------------------
# Parameters
# ----------------------------------------------------------------------------
def init_encoder_params(key, input_dim, latent_dim):
    """torch.nn.Linear-style init; weights stored as (in, out), f32."""
    dims = [(input_dim, 684), (684, 512), (512, 256), (256, 64),
            (64, latent_dim), (64, latent_dim)]
    names = ["1", "2", "3", "4", "m", "v"]
    params = {}
    keys = jax.random.split(key, 2 * len(dims))
    for i, ((fan_in, fan_out), n) in enumerate(zip(dims, names)):
        bound = 1.0 / (fan_in ** 0.5)   # matches torch.nn.Linear default range
        params[f"w{n}"] = jax.random.uniform(
            keys[2 * i], (fan_in, fan_out),
            minval=-bound, maxval=bound, dtype=jnp.float32)
        params[f"b{n}"] = jax.random.uniform(
            keys[2 * i + 1], (1, fan_out),
            minval=-bound, maxval=bound, dtype=jnp.float32)
    return params


def prepare_kernel_params(params, *, hidden1_pad=768, hidden4_pad=128):
    """Exact zero-padding for lane density + bf16 weight cast.

    - hidden dim 684 -> 768 (zero weights/bias => ReLU(0)=0 extra units)
    - layer-4 width 64 -> 128 (same argument)
    - fused [M | logvar] head, rows 64 -> 128 and cols 2*latent -> >=128
    Biases stay f32 so bias-add + ReLU run in f32.
    """
    latent_dim = params["wm"].shape[1]

    pad1 = hidden1_pad - params["w1"].shape[1]
    w1 = jnp.pad(params["w1"], ((0, 0), (0, pad1)))
    b1 = jnp.pad(params["b1"], ((0, 0), (0, pad1)))
    w2 = jnp.pad(params["w2"], ((0, pad1), (0, 0)))

    pad4 = hidden4_pad - params["w4"].shape[1]
    w4 = jnp.pad(params["w4"], ((0, 0), (0, pad4)))
    b4 = jnp.pad(params["b4"], ((0, 0), (0, pad4)))

    whead = jnp.concatenate([params["wm"], params["wv"]], axis=1)
    bhead = jnp.concatenate([params["bm"], params["bv"]], axis=1)
    out_cols = max(_round_up(2 * latent_dim, 128), 128)
    padc = out_cols - whead.shape[1]
    whead = jnp.pad(whead, ((0, pad4), (0, padc)))   # rows 64->128, cols ->128
    bhead = jnp.pad(bhead, ((0, 0), (0, padc)))

    return {
        "w1": w1.astype(jnp.bfloat16), "b1": b1,
        "w2": w2.astype(jnp.bfloat16), "b2": params["b2"],
        "w3": params["w3"].astype(jnp.bfloat16), "b3": params["b3"],
        "w4": w4.astype(jnp.bfloat16), "b4": b4,
        "whead": whead.astype(jnp.bfloat16), "bhead": bhead,
        "latent_dim": latent_dim,
    }


# ----------------------------------------------------------------------------
# References
# ----------------------------------------------------------------------------
def encoder_forward_ref(x, kernel_params):
    """Pure-JAX reference with the same bf16-input / f32-accumulate math."""
    def dense(h, w, b, relu):
        y = jnp.dot(h.astype(jnp.bfloat16), w,
                    preferred_element_type=jnp.float32) + b
        return jnp.maximum(y, 0.0) if relu else y

    h = x
    for n in ("1", "2", "3", "4"):
        h = dense(h, kernel_params[f"w{n}"], kernel_params[f"b{n}"], True)
    out = dense(h, kernel_params["whead"], kernel_params["bhead"], False)
    L = int(kernel_params["latent_dim"])
    return out[:, :L], out[:, L:2 * L]


def encoder_forward_ref_f32(x, params):
    """Full-precision reference (original, unpadded f32 weights)."""
    h = x
    for n in ("1", "2", "3", "4"):
        h = jnp.maximum(h @ params[f"w{n}"] + params[f"b{n}"], 0.0)
    return h @ params["wm"] + params["bm"], h @ params["wv"] + params["bv"]


# ----------------------------------------------------------------------------
# Demo / self-check
# ----------------------------------------------------------------------------
if __name__ == "__main__":
    INPUT_DIM = 784    # flattened 28x28 image
    LATENT_DIM = 16
    BATCH = 8

    key = jax.random.PRNGKey(0)
    k_params, k_x = jax.random.split(key)

    raw_params = init_encoder_params(k_params, INPUT_DIM, LATENT_DIM)
    kparams = prepare_kernel_params(raw_params)
    x = jax.random.normal(k_x, (BATCH, INPUT_DIM), dtype=jnp.float32)

    m, logvar = encoder_forward(x, kparams)
    m = jax.block_until_ready(m)
    logvar = jax.block_until_ready(logvar)

    assert m.shape == (BATCH, LATENT_DIM) and logvar.shape == (BATCH, LATENT_DIM)

    # Exact-math check against a reference using the same bf16/f32 recipe.
    m_ref, lv_ref = encoder_forward_ref(x, kparams)
    assert jnp.allclose(m, m_ref, atol=2e-3, rtol=2e-3), \
        float(jnp.max(jnp.abs(m - m_ref)))
    assert jnp.allclose(logvar, lv_ref, atol=2e-3, rtol=2e-3), \
        float(jnp.max(jnp.abs(logvar - lv_ref)))

    # Loose sanity check against the full-f32 original semantics
    # (difference is only bf16 weight/activation quantization).
    m_f32, lv_f32 = encoder_forward_ref_f32(x, raw_params)
    assert jnp.allclose(m, m_f32, atol=5e-2, rtol=0), \
        float(jnp.max(jnp.abs(m - m_f32)))
    assert jnp.allclose(logvar, lv_f32, atol=5e-2, rtol=0), \
        float(jnp.max(jnp.abs(logvar - lv_f32)))

    print("KERNEL_OK")
</pallas_src>

<mosaic_0001>
module attributes {stable_mosaic.version = 11 : i64} {
  func.func @encoder_kernel(%arg0: i32, %arg1: memref<8x784xf32, #tpu.memory_space<vmem>>, %arg2: memref<784x768xbf16, #tpu.memory_space<vmem>>, %arg3: memref<1x768xf32, #tpu.memory_space<vmem>>, %arg4: memref<768x512xbf16, #tpu.memory_space<vmem>>, %arg5: memref<1x512xf32, #tpu.memory_space<vmem>>, %arg6: memref<512x256xbf16, #tpu.memory_space<vmem>>, %arg7: memref<1x256xf32, #tpu.memory_space<vmem>>, %arg8: memref<256x128xbf16, #tpu.memory_space<vmem>>, %arg9: memref<1x128xf32, #tpu.memory_space<vmem>>, %arg10: memref<128x128xbf16, #tpu.memory_space<vmem>>, %arg11: memref<1x128xf32, #tpu.memory_space<vmem>>, %arg12: memref<8x128xf32, #tpu.memory_space<vmem>>) attributes {dimension_semantics = [#tpu.dimension_semantics<parallel>], iteration_bounds = array<i64: 1>, scalar_prefetch = 0 : i64, scratch_operands = 0 : i64, tpu.core_type = #tpu.core_type<tc>, window_params = [{transform_indices = @transform_0, window_bounds = array<i64: 8, 784>}, {pipeline_mode = #tpu.pipeline_mode<synchronous>, transform_indices = @transform_1, window_bounds = array<i64: 784, 768>}, {pipeline_mode = #tpu.pipeline_mode<synchronous>, transform_indices = @transform_2, window_bounds = array<i64: 1, 768>}, {pipeline_mode = #tpu.pipeline_mode<synchronous>, transform_indices = @transform_3, window_bounds = array<i64: 768, 512>}, {pipeline_mode = #tpu.pipeline_mode<synchronous>, transform_indices = @transform_4, window_bounds = array<i64: 1, 512>}, {pipeline_mode = #tpu.pipeline_mode<synchronous>, transform_indices = @transform_5, window_bounds = array<i64: 512, 256>}, {pipeline_mode = #tpu.pipeline_mode<synchronous>, transform_indices = @transform_6, window_bounds = array<i64: 1, 256>}, {pipeline_mode = #tpu.pipeline_mode<synchronous>, transform_indices = @transform_7, window_bounds = array<i64: 256, 128>}, {pipeline_mode = #tpu.pipeline_mode<synchronous>, transform_indices = @transform_8, window_bounds = array<i64: 1, 128>}, {pipeline_mode = #tpu.pipeline_mode<synchronous>, transform_indices = @transform_9, window_bounds = array<i64: 128, 128>}, {pipeline_mode = #tpu.pipeline_mode<synchronous>, transform_indices = @transform_10, window_bounds = array<i64: 1, 128>}, {transform_indices = @transform_11, window_bounds = array<i64: 8, 128>}]} {
    %c0 = arith.constant 0 : index
    %c0_0 = arith.constant 0 : index
    %0 = vector.load %arg1[%c0, %c0_0] : memref<8x784xf32, #tpu.memory_space<vmem>>, vector<8x784xf32>
    %1 = arith.truncf %0 : vector<8x784xf32> to vector<8x784xbf16>
    %c0_1 = arith.constant 0 : index
    %c0_2 = arith.constant 0 : index
    %2 = vector.load %arg2[%c0_1, %c0_2] : memref<784x768xbf16, #tpu.memory_space<vmem>>, vector<784x768xbf16>
    %cst = arith.constant dense<0.000000e+00> : vector<8x768xf32>
    %3 = tpu.matmul %1, %2, %cst {dimension_numbers = #tpu.dot_dimension_numbers<[1], [0], [0], [1], [0, 0, 1, 1], [], []>} : vector<8x784xbf16>, vector<784x768xbf16>, vector<8x768xf32> -> vector<8x768xf32>
    %c0_3 = arith.constant 0 : index
    %c0_4 = arith.constant 0 : index
    %4 = vector.load %arg3[%c0_3, %c0_4] : memref<1x768xf32, #tpu.memory_space<vmem>>, vector<1x768xf32>
    %5 = vector.broadcast %4 : vector<1x768xf32> to vector<8x768xf32>
    %6 = arith.addf %3, %5 : vector<8x768xf32>
    %cst_5 = arith.constant 0.000000e+00 : f32
    %7 = vector.broadcast %cst_5 : f32 to vector<8x768xf32>
    %8 = arith.maximumf %6, %7 : vector<8x768xf32>
    %9 = arith.truncf %8 : vector<8x768xf32> to vector<8x768xbf16>
    %c0_6 = arith.constant 0 : index
    %c0_7 = arith.constant 0 : index
    %10 = vector.load %arg4[%c0_6, %c0_7] : memref<768x512xbf16, #tpu.memory_space<vmem>>, vector<768x512xbf16>
    %cst_8 = arith.constant dense<0.000000e+00> : vector<8x512xf32>
    %11 = tpu.matmul %9, %10, %cst_8 {dimension_numbers = #tpu.dot_dimension_numbers<[1], [0], [0], [1], [0, 0, 1, 1], [], []>} : vector<8x768xbf16>, vector<768x512xbf16>, vector<8x512xf32> -> vector<8x512xf32>
    %c0_9 = arith.constant 0 : index
    %c0_10 = arith.constant 0 : index
    %12 = vector.load %arg5[%c0_9, %c0_10] : memref<1x512xf32, #tpu.memory_space<vmem>>, vector<1x512xf32>
    %13 = vector.broadcast %12 : vector<1x512xf32> to vector<8x512xf32>
    %14 = arith.addf %11, %13 : vector<8x512xf32>
    %cst_11 = arith.constant 0.000000e+00 : f32
    %15 = vector.broadcast %cst_11 : f32 to vector<8x512xf32>
    %16 = arith.maximumf %14, %15 : vector<8x512xf32>
    %17 = arith.truncf %16 : vector<8x512xf32> to vector<8x512xbf16>
    %c0_12 = arith.constant 0 : index
    %c0_13 = arith.constant 0 : index
    %18 = vector.load %arg6[%c0_12, %c0_13] : memref<512x256xbf16, #tpu.memory_space<vmem>>, vector<512x256xbf16>
    %cst_14 = arith.constant dense<0.000000e+00> : vector<8x256xf32>
    %19 = tpu.matmul %17, %18, %cst_14 {dimension_numbers = #tpu.dot_dimension_numbers<[1], [0], [0], [1], [0, 0, 1, 1], [], []>} : vector<8x512xbf16>, vector<512x256xbf16>, vector<8x256xf32> -> vector<8x256xf32>
    %c0_15 = arith.constant 0 : index
    %c0_16 = arith.constant 0 : index
    %20 = vector.load %arg7[%c0_15, %c0_16] : memref<1x256xf32, #tpu.memory_space<vmem>>, vector<1x256xf32>
    %21 = vector.broadcast %20 : vector<1x256xf32> to vector<8x256xf32>
    %22 = arith.addf %19, %21 : vector<8x256xf32>
    %cst_17 = arith.constant 0.000000e+00 : f32
    %23 = vector.broadcast %cst_17 : f32 to vector<8x256xf32>
    %24 = arith.maximumf %22, %23 : vector<8x256xf32>
    %25 = arith.truncf %24 : vector<8x256xf32> to vector<8x256xbf16>
    %c0_18 = arith.constant 0 : index
    %c0_19 = arith.constant 0 : index
    %26 = vector.load %arg8[%c0_18, %c0_19] : memref<256x128xbf16, #tpu.memory_space<vmem>>, vector<256x128xbf16>
    %cst_20 = arith.constant dense<0.000000e+00> : vector<8x128xf32>
    %27 = tpu.matmul %25, %26, %cst_20 {dimension_numbers = #tpu.dot_dimension_numbers<[1], [0], [0], [1], [0, 0, 1, 1], [], []>} : vector<8x256xbf16>, vector<256x128xbf16>, vector<8x128xf32> -> vector<8x128xf32>
    %c0_21 = arith.constant 0 : index
    %c0_22 = arith.constant 0 : index
    %28 = vector.load %arg9[%c0_21, %c0_22] : memref<1x128xf32, #tpu.memory_space<vmem>>, vector<1x128xf32>
    %29 = vector.broadcast %28 : vector<1x128xf32> to vector<8x128xf32>
    %30 = arith.addf %27, %29 : vector<8x128xf32>
    %cst_23 = arith.constant 0.000000e+00 : f32
    %31 = vector.broadcast %cst_23 : f32 to vector<8x128xf32>
    %32 = arith.maximumf %30, %31 : vector<8x128xf32>
    %33 = arith.truncf %32 : vector<8x128xf32> to vector<8x128xbf16>
    %c0_24 = arith.constant 0 : index
    %c0_25 = arith.constant 0 : index
    %34 = vector.load %arg10[%c0_24, %c0_25] : memref<128x128xbf16, #tpu.memory_space<vmem>>, vector<128x128xbf16>
    %cst_26 = arith.constant dense<0.000000e+00> : vector<8x128xf32>
    %35 = tpu.matmul %33, %34, %cst_26 {dimension_numbers = #tpu.dot_dimension_numbers<[1], [0], [0], [1], [0, 0, 1, 1], [], []>} : vector<8x128xbf16>, vector<128x128xbf16>, vector<8x128xf32> -> vector<8x128xf32>
    %c0_27 = arith.constant 0 : index
    %c0_28 = arith.constant 0 : index
    %36 = vector.load %arg11[%c0_27, %c0_28] : memref<1x128xf32, #tpu.memory_space<vmem>>, vector<1x128xf32>
    %37 = vector.broadcast %36 : vector<1x128xf32> to vector<8x128xf32>
    %38 = arith.addf %35, %37 : vector<8x128xf32>
    %c0_29 = arith.constant 0 : index
    %c0_30 = arith.constant 0 : index
    %39 = vector.load %arg12[%c0_29, %c0_30] : memref<8x128xf32, #tpu.memory_space<vmem>>, vector<8x128xf32>
    tpu.vector_store %arg12[%c0_29, %c0_30], %38 {strides = array<i32>} : memref<8x128xf32, #tpu.memory_space<vmem>>, vector<8x128xf32>,
    return
  }
  func.func @transform_0(%arg0: i32) -> (i32, i32) {
    %c0_i32 = arith.constant 0 : i32
    %c0_i32_0 = arith.constant 0 : i32
    return %arg0, %c0_i32 : i32, i32
  }
  func.func @transform_1(%arg0: i32) -> (i32, i32) {
    %c0_i32 = arith.constant 0 : i32
    %c0_i32_0 = arith.constant 0 : i32
    %c0_i32_1 = arith.constant 0 : i32
    return %c0_i32, %c0_i32_0 : i32, i32
  }
  func.func @transform_2(%arg0: i32) -> (i32, i32) {
    %c0_i32 = arith.constant 0 : i32
    %c0_i32_0 = arith.constant 0 : i32
    %c0_i32_1 = arith.constant 0 : i32
    return %c0_i32, %c0_i32_0 : i32, i32
  }
  func.func @transform_3(%arg0: i32) -> (i32, i32) {
    %c0_i32 = arith.constant 0 : i32
    %c0_i32_0 = arith.constant 0 : i32
    %c0_i32_1 = arith.constant 0 : i32
    return %c0_i32, %c0_i32_0 : i32, i32
  }
  func.func @transform_4(%arg0: i32) -> (i32, i32) {
    %c0_i32 = arith.constant 0 : i32
    %c0_i32_0 = arith.constant 0 : i32
    %c0_i32_1 = arith.constant 0 : i32
    return %c0_i32, %c0_i32_0 : i32, i32
  }
  func.func @transform_5(%arg0: i32) -> (i32, i32) {
    %c0_i32 = arith.constant 0 : i32
    %c0_i32_0 = arith.constant 0 : i32
    %c0_i32_1 = arith.constant 0 : i32
    return %c0_i32, %c0_i32_0 : i32, i32
  }
  func.func @transform_6(%arg0: i32) -> (i32, i32) {
    %c0_i32 = arith.constant 0 : i32
    %c0_i32_0 = arith.constant 0 : i32
    %c0_i32_1 = arith.constant 0 : i32
    return %c0_i32, %c0_i32_0 : i32, i32
  }
  func.func @transform_7(%arg0: i32) -> (i32, i32) {
    %c0_i32 = arith.constant 0 : i32
    %c0_i32_0 = arith.constant 0 : i32
    %c0_i32_1 = arith.constant 0 : i32
    return %c0_i32, %c0_i32_0 : i32, i32
  }
  func.func @transform_8(%arg0: i32) -> (i32, i32) {
    %c0_i32 = arith.constant 0 : i32
    %c0_i32_0 = arith.constant 0 : i32
    %c0_i32_1 = arith.constant 0 : i32
    return %c0_i32, %c0_i32_0 : i32, i32
  }
  func.func @transform_9(%arg0: i32) -> (i32, i32) {
    %c0_i32 = arith.constant 0 : i32
    %c0_i32_0 = arith.constant 0 : i32
    %c0_i32_1 = arith.constant 0 : i32
    return %c0_i32, %c0_i32_0 : i32, i32
  }
  func.func @transform_10(%arg0: i32) -> (i32, i32) {
    %c0_i32 = arith.constant 0 : i32
    %c0_i32_0 = arith.constant 0 : i32
    %c0_i32_1 = arith.constant 0 : i32
    return %c0_i32, %c0_i32_0 : i32, i32
  }
  func.func @transform_11(%arg0: i32) -> (i32, i32) {
    %c0_i32 = arith.constant 0 : i32
    %c0_i32_0 = arith.constant 0 : i32
    return %arg0, %c0_i32 : i32, i32
  }
}

</mosaic_0001>

<llo_original>
// kernel: tpu_custom_call.1
$region0: #{tpu_custom_call.1}
  #allocation0 [shape = 'u32[]', space=smem, size = 0x4, offset = 0x4, fixed_abs, tag = 'smem constant byte address 0x4 - core index']
  #allocation1 [shape = 'u32[144,128]{1,0:T(1,128)}', space=vmem, size = 0x12000, scoped, tag = 'internal scratch']
  %s0 = inlined_call_operand.hbm [shape: f32[8,784], index: 0, kind: input, shape index: {}]
  %s1 = inlined_call_operand.hbm [shape: bf16[784,768], index: 1, kind: input, shape index: {}]
  %s2 = inlined_call_operand.hbm [shape: f32[1,768], index: 2, kind: input, shape index: {}]
  %s3 = inlined_call_operand.hbm [shape: bf16[768,512], index: 3, kind: input, shape index: {}]
  %s4 = inlined_call_operand.hbm [shape: f32[1,512], index: 4, kind: input, shape index: {}]
  %s5 = inlined_call_operand.hbm [shape: bf16[512,256], index: 5, kind: input, shape index: {}]
  %s6 = inlined_call_operand.hbm [shape: f32[1,256], index: 6, kind: input, shape index: {}]
  %s7 = inlined_call_operand.hbm [shape: bf16[256,128], index: 7, kind: input, shape index: {}]
  %s8 = inlined_call_operand.hbm [shape: f32[1,128], index: 8, kind: input, shape index: {}]
  %s9 = inlined_call_operand.hbm [shape: bf16[128,128], index: 9, kind: input, shape index: {}]
  %s10 = inlined_call_operand.hbm [shape: f32[1,128], index: 10, kind: input, shape index: {}]
  %s11 = inlined_call_operand.hbm [shape: f32[8,128], index: 11, kind: output, shape index: {}]
  %s12 = sld [smem:[#allocation0]]
  $region98: #{tpu_custom_call.1} parent=0
    _
  %s14 = ssub.s32 1, %s12
  %s15 = scalar_select 0, %s14, %s12
  $region1: #{tpu_custom_call.1} parent=0
    #allocation2 [shape = 'u8[28672]{0}', space=vmem, size = 0x7000, scoped, tag = 'input window, operand 0, single buffered']
    #allocation3 [shape = 's32[1]{0}', space=sflag, size = 0x4, scoped, tag = 'scoped memory for tpu_custom_call.1']
    #allocation4 [shape = 's32[1]{0}', space=sflag, size = 0x4, scoped, tag = 'scoped memory for tpu_custom_call.1']
    #allocation5 [shape = 'u8[1204224]{0}', space=vmem, size = 0x126000, scoped, tag = 'input window, operand 1, single buffered']
    #allocation6 [shape = 's32[1]{0}', space=sflag, size = 0x4, scoped, tag = 'scoped memory for tpu_custom_call.1']
    #allocation7 [shape = 'u8[3072]{0}', space=vmem, size = 0xc00, scoped, tag = 'input window, operand 2, single buffered']
    #allocation8 [shape = 'u8[786432]{0}', space=vmem, size = 0xc0000, scoped, tag = 'input window, operand 3, single buffered']
    #allocation9 [shape = 's32[1]{0}', space=sflag, size = 0x4, scoped, tag = 'scoped memory for tpu_custom_call.1']
    #allocation10 [shape = 'u8[2048]{0}', space=vmem, size = 0x800, scoped, tag = 'input window, operand 4, single buffered']
    #allocation11 [shape = 'u8[262144]{0}', space=vmem, size = 0x40000, scoped, tag = 'input window, operand 5, single buffered']
    #allocation12 [shape = 's32[1]{0}', space=sflag, size = 0x4, scoped, tag = 'scoped memory for tpu_custom_call.1']
    #allocation13 [shape = 'u8[1024]{0}', space=vmem, size = 0x400, scoped, tag = 'input window, operand 6, single buffered']
    #allocation14 [shape = 'u8[65536]{0}', space=vmem, size = 0x10000, scoped, tag = 'input window, operand 7, single buffered']
    #allocation15 [shape = 's32[1]{0}', space=sflag, size = 0x4, scoped, tag = 'scoped memory for tpu_custom_call.1']
    #allocation16 [shape = 'u8[512]{0}', space=vmem, size = 0x400, scoped, tag = 'input window, operand 8, single buffered']
    #allocation17 [shape = 'u8[32768]{0}', space=vmem, size = 0x8000, scoped, tag = 'input window, operand 9, single buffered']
    #allocation18 [shape = 's32[1]{0}', space=sflag, size = 0x4, scoped, tag = 'scoped memory for tpu_custom_call.1']
    #allocation19 [shape = 'u8[512]{0}', space=vmem, size = 0x400, scoped, tag = 'input window, operand 10, single buffered']
    #allocation20 [shape = 'u8[4096]{0}', space=vmem, size = 0x1000, scoped, tag = 'output window, operand 0, single buffered']
    %16 = vsyncpa [#allocation3], 0
    %17 = vsyncpa [#allocation6], 0
    %18 = vsyncpa [#allocation9], 0
    %19 = vsyncpa [#allocation12], 0
    %20 = vsyncpa [#allocation15], 0
    %21 = vsyncpa [#allocation18], 0
    %22 = vsyncpa [#allocation4], 0
    // Predicated region
    $region2: #{tpu_custom_call.1} parent=1 // pred_check
      _
    $region3: #{tpu_custom_call.1} parent=1 // pred_check_branch
      %24 = sbr.rel (0) target = $region5
    $region4: #{tpu_custom_call.1} parent=1 // pred_region
      %s26 = ssub.s32 896, 896
      %27 = vsyncadd [#allocation3], %s26
      %s29 = sshll.u32 [#allocation2], 4
      %s30 = int_to_ptr.vmem [resolvable:$true] %s29
      %32 = dma.hbm_to_vmem [thread:$0]  %s0, 896, %s30, [#allocation3]
    $region5: #{tpu_custom_call.1} parent=1 // pred_fallthru
      _
    // Predicated region
    $region6: #{tpu_custom_call.1} parent=1 // pred_check
      _
    $region7: #{tpu_custom_call.1} parent=1 // pred_check_branch
      %34 = sbr.rel (0) target = $region9
    $region8: #{tpu_custom_call.1} parent=1 // pred_region
      %s36 = ssub.s32 37632, 37632
      %37 = vsyncadd [#allocation6], %s36
      %s38 = sshll.u32 [#allocation5], 4
      %s39 = int_to_ptr.vmem [resolvable:$true] %s38
      %44 = dma.hbm_to_vmem [thread:$0]  %s1, 37632, %s39, [#allocation6], 384, 384, 24
    $region9: #{tpu_custom_call.1} parent=1 // pred_fallthru
      _
    // Predicated region
    $region10: #{tpu_custom_call.1} parent=1 // pred_check
      _
    $region11: #{tpu_custom_call.1} parent=1 // pred_check_branch
      %46 = sbr.rel (0) target = $region13
    $region12: #{tpu_custom_call.1} parent=1 // pred_region
      %s48 = ssub.s32 96, 96
      %49 = vsyncadd [#allocation6], %s48
      %s51 = sshll.u32 [#allocation7], 4
      %s52 = int_to_ptr.vmem [resolvable:$true] %s51
      %54 = dma.hbm_to_vmem [thread:$0]  %s2, 96, %s52, [#allocation6]
    $region13: #{tpu_custom_call.1} parent=1 // pred_fallthru
      _
    // Predicated region
    $region14: #{tpu_custom_call.1} parent=1 // pred_check
      _
    $region15: #{tpu_custom_call.1} parent=1 // pred_check_branch
      %56 = sbr.rel (0) target = $region17
    $region16: #{tpu_custom_call.1} parent=1 // pred_region
      %s58 = ssub.s32 24576, 24576
      %59 = vsyncadd [#allocation9], %s58
      %s60 = sshll.u32 [#allocation8], 4
      %s61 = int_to_ptr.vmem [resolvable:$true] %s60
      %66 = dma.hbm_to_vmem [thread:$0]  %s3, 24576, %s61, [#allocation9], 256, 256, 16
    $region17: #{tpu_custom_call.1} parent=1 // pred_fallthru
      _
    // Predicated region
    $region18: #{tpu_custom_call.1} parent=1 // pred_check
      _
    $region19: #{tpu_custom_call.1} parent=1 // pred_check_branch
      %68 = sbr.rel (0) target = $region21
    $region20: #{tpu_custom_call.1} parent=1 // pred_region
      %s70 = ssub.s32 64, 64
      %71 = vsyncadd [#allocation9], %s70
      %s73 = sshll.u32 [#allocation10], 4
      %s74 = int_to_ptr.vmem [resolvable:$true] %s73
      %76 = dma.hbm_to_vmem [thread:$0]  %s4, 64, %s74, [#allocation9]
    $region21: #{tpu_custom_call.1} parent=1 // pred_fallthru
      _
    // Predicated region
    $region22: #{tpu_custom_call.1} parent=1 // pred_check
      _
    $region23: #{tpu_custom_call.1} parent=1 // pred_check_branch
      %78 = sbr.rel (0) target = $region25
    $region24: #{tpu_custom_call.1} parent=1 // pred_region
      %s80 = ssub.s32 8192, 8192
      %81 = vsyncadd [#allocation12], %s80
      %s82 = sshll.u32 [#allocation11], 4
      %s83 = int_to_ptr.vmem [resolvable:$true] %s82
      %88 = dma.hbm_to_vmem [thread:$0]  %s5, 8192, %s83, [#allocation12], 128, 128, 8
    $region25: #{tpu_custom_call.1} parent=1 // pred_fallthru
      _
    // Predicated region
    $region26: #{tpu_custom_call.1} parent=1 // pred_check
      _
    $region27: #{tpu_custom_call.1} parent=1 // pred_check_branch
      %90 = sbr.rel (0) target = $region29
    $region28: #{tpu_custom_call.1} parent=1 // pred_region
      %s92 = ssub.s32 32, 32
      %93 = vsyncadd [#allocation12], %s92
      %s95 = sshll.u32 [#allocation13], 4
      %s96 = int_to_ptr.vmem [resolvable:$true] %s95
      %98 = dma.hbm_to_vmem [thread:$0]  %s6, 32, %s96, [#allocation12]
    $region29: #{tpu_custom_call.1} parent=1 // pred_fallthru
      _
    // Predicated region
    $region30: #{tpu_custom_call.1} parent=1 // pred_check
      _
    $region31: #{tpu_custom_call.1} parent=1 // pred_check_branch
      %100 = sbr.rel (0) target = $region33
    $region32: #{tpu_custom_call.1} parent=1 // pred_region
      %s102 = ssub.s32 2048, 2048
      %103 = vsyncadd [#allocation15], %s102
      %s104 = sshll.u32 [#allocation14], 4
      %s105 = int_to_ptr.vmem [resolvable:$true] %s104
      %110 = dma.hbm_to_vmem [thread:$0]  %s7, 2048, %s105, [#allocation15], 64, 64, 4
    $region33: #{tpu_custom_call.1} parent=1 // pred_fallthru
      _
    // Predicated region
    $region34: #{tpu_custom_call.1} parent=1 // pred_check
      _
    $region35: #{tpu_custom_call.1} parent=1 // pred_check_branch
      %112 = sbr.rel (0) target = $region37
    $region36: #{tpu_custom_call.1} parent=1 // pred_region
      %s114 = ssub.s32 16, 16
      %115 = vsyncadd [#allocation15], %s114
      %s117 = sshll.u32 [#allocation16], 4
      %s118 = int_to_ptr.vmem [resolvable:$true] %s117
      %120 = dma.hbm_to_vmem [thread:$0]  %s8, 16, %s118, [#allocation15]
    $region37: #{tpu_custom_call.1} parent=1 // pred_fallthru
      _
    // Predicated region
    $region38: #{tpu_custom_call.1} parent=1 // pred_check
      _
    $region39: #{tpu_custom_call.1} parent=1 // pred_check_branch
      %122 = sbr.rel (0) target = $region41
    $region40: #{tpu_custom_call.1} parent=1 // pred_region
      %s124 = ssub.s32 1024, 1024
      %125 = vsyncadd [#allocation18], %s124
      %s126 = sshll.u32 [#allocation17], 4
      %s127 = int_to_ptr.vmem [resolvable:$true] %s126
      %132 = dma.hbm_to_vmem [thread:$0]  %s9, 1024, %s127, [#allocation18], 64, 64, 4
    $region41: #{tpu_custom_call.1} parent=1 // pred_fallthru
      _
    // Predicated region
    $region42: #{tpu_custom_call.1} parent=1 // pred_check
      _
    $region43: #{tpu_custom_call.1} parent=1 // pred_check_branch
      %134 = sbr.rel (0) target = $region45
    $region44: #{tpu_custom_call.1} parent=1 // pred_region
      %s136 = ssub.s32 16, 16
      %137 = vsyncadd [#allocation18], %s136
      %s139 = sshll.u32 [#allocation19], 4
      %s140 = int_to_ptr.vmem [resolvable:$true] %s139
      %142 = dma.hbm_to_vmem [thread:$0]  %s10, 16, %s140, [#allocation18]
    $region45: #{tpu_custom_call.1} parent=1 // pred_fallthru
      _
    // Predicated region
    $region46: #{tpu_custom_call.1} parent=1 // pred_check
      _
    $region47: #{tpu_custom_call.1} parent=1 // pred_check_branch
      %144 = sbr.rel (0) target = $region49
    $region48: #{tpu_custom_call.1} parent=1 // pred_region
      %145 = dma.done [#allocation3], 896
    $region49: #{tpu_custom_call.1} parent=1 // pred_fallthru
      _
    // Predicated region
    $region50: #{tpu_custom_call.1} parent=1 // pred_check
      _
    $region51: #{tpu_custom_call.1} parent=1 // pred_check_branch
      %147 = sbr.rel (0) target = $region53
    $region52: #{tpu_custom_call.1} parent=1 // pred_region
      %148 = dma.done [#allocation6], 37632
    $region53: #{tpu_custom_call.1} parent=1 // pred_fallthru
      _
    // Predicated region
    $region54: #{tpu_custom_call.1} parent=1 // pred_check
      _
    $region55: #{tpu_custom_call.1} parent=1 // pred_check_branch
      %150 = sbr.rel (0) target = $region57
    $region56: #{tpu_custom_call.1} parent=1 // pred_region
      %151 = dma.done [#allocation6], 96
    $region57: #{tpu_custom_call.1} parent=1 // pred_fallthru
      _
    // Predicated region
    $region58: #{tpu_custom_call.1} parent=1 // pred_check
      _
    $region59: #{tpu_custom_call.1} parent=1 // pred_check_branch
      %153 = sbr.rel (0) target = $region61
    $region60: #{tpu_custom_call.1} parent=1 // pred_region
      %154 = dma.done [#allocation9], 24576
    $region61: #{tpu_custom_call.1} parent=1 // pred_fallthru
      _
    // Predicated region
    $region62: #{tpu_custom_call.1} parent=1 // pred_check
      _
    $region63: #{tpu_custom_call.1} parent=1 // pred_check_branch
      %156 = sbr.rel (0) target = $region65
    $region64: #{tpu_custom_call.1} parent=1 // pred_region
      %157 = dma.done [#allocation9], 64
    $region65: #{tpu_custom_call.1} parent=1 // pred_fallthru
      _
    // Predicated region
    $region66: #{tpu_custom_call.1} parent=1 // pred_check
      _
    $region67: #{tpu_custom_call.1} parent=1 // pred_check_branch
      %159 = sbr.rel (0) target = $region69
    $region68: #{tpu_custom_call.1} parent=1 // pred_region
      %160 = dma.done [#allocation12], 8192
    $region69: #{tpu_custom_call.1} parent=1 // pred_fallthru
      _
    // Predicated region
    $region70: #{tpu_custom_call.1} parent=1 // pred_check
      _
    $region71: #{tpu_custom_call.1} parent=1 // pred_check_branch
      %162 = sbr.rel (0) target = $region73
    $region72: #{tpu_custom_call.1} parent=1 // pred_region
      %163 = dma.done [#allocation12], 32
    $region73: #{tpu_custom_call.1} parent=1 // pred_fallthru
      _
    // Predicated region
    $region74: #{tpu_custom_call.1} parent=1 // pred_check
      _
    $region75: #{tpu_custom_call.1} parent=1 // pred_check_branch
      %165 = sbr.rel (0) target = $region77
    $region76: #{tpu_custom_call.1} parent=1 // pred_region
      %166 = dma.done [#allocation15], 2048
    $region77: #{tpu_custom_call.1} parent=1 // pred_fallthru
      _
    // Predicated region
    $region78: #{tpu_custom_call.1} parent=1 // pred_check
      _
    $region79: #{tpu_custom_call.1} parent=1 // pred_check_branch
      %168 = sbr.rel (0) target = $region81
    $region80: #{tpu_custom_call.1} parent=1 // pred_region
      %169 = dma.done [#allocation15], 16
    $region81: #{tpu_custom_call.1} parent=1 // pred_fallthru
      _
    // Predicated region
    $region82: #{tpu_custom_call.1} parent=1 // pred_check
      _
    $region83: #{tpu_custom_call.1} parent=1 // pred_check_branch
      %171 = sbr.rel (0) target = $region85
    $region84: #{tpu_custom_call.1} parent=1 // pred_region
      %172 = dma.done [#allocation18], 1024
    $region85: #{tpu_custom_call.1} parent=1 // pred_fallthru
      _
    // Predicated region
    $region86: #{tpu_custom_call.1} parent=1 // pred_check
      _
    $region87: #{tpu_custom_call.1} parent=1 // pred_check_branch
      %174 = sbr.rel (0) target = $region89
    $region88: #{tpu_custom_call.1} parent=1 // pred_region
      %175 = dma.done [#allocation18], 16
    $region89: #{tpu_custom_call.1} parent=1 // pred_fallthru
      _
    %v177 = vld [vmem:[#allocation2] sm:$0xff]
    %v178 = vld [vmem:[#allocation2 + $0x8] sm:$0xff]
    %v179 = vld [vmem:[#allocation2 + $0x10] sm:$0xff]
    %v180 = vld [vmem:[#allocation2 + $0x18] sm:$0xff]
    %v181 = vld [vmem:[#allocation2 + $0x20] sm:$0xff]
    %v182 = vld [vmem:[#allocation2 + $0x28] sm:$0xff]
    %v183 = vld [vmem:[#allocation2 + $0x30] sm:$0xff]
    %v184 = vpack.c.bf16 %v177, %v177
    %v185 = vpack.c.bf16 %v178, %v178
    %v186 = vpack.c.bf16 %v179, %v179
    %v187 = vpack.c.bf16 %v180, %v180
    %v188 = vpack.c.bf16 %v181, %v181
    %v189 = vpack.c.bf16 %v182, %v182
    %v190 = vpack.c.bf16 %v183, %v183
    %v191 = vld [vmem:[#allocation5] sm:$0xff]
    %v192 = vld [vmem:[#allocation5 + $0x8] sm:$0xff]
    %v193 = vld [vmem:[#allocation5 + $0x10] sm:$0xff]
    %v194 = vld [vmem:[#allocation5 + $0x18] sm:$0xff]
    %v195 = vld [vmem:[#allocation5 + $0x20] sm:$0xff]
    %v196 = vld [vmem:[#allocation5 + $0x28] sm:$0xff]
    %v197 = vld [vmem:[#allocation5 + $0x30] sm:$0xff]
    %v198 = vld [vmem:[#allocation5 + $0x38] sm:$0xff]
    %v199 = vld [vmem:[#allocation5 + $0x40] sm:$0xff]
    %v200 = vld [vmem:[#allocation5 + $0x48] sm:$0xff]
    %v201 = vld [vmem:[#allocation5 + $0x50] sm:$0xff]
    %v202 = vld [vmem:[#allocation5 + $0x58] sm:$0xff]
    %v203 = vld [vmem:[#allocation5 + $0x60] sm:$0xff]
    %v204 = vld [vmem:[#allocation5 + $0x68] sm:$0xff]
    %v205 = vld [vmem:[#allocation5 + $0x70] sm:$0xff]
    %v206 = vld [vmem:[#allocation5 + $0x78] sm:$0xff]
    %v207 = vld [vmem:[#allocation5 + $0x80] sm:$0xff]
    %v208 = vld [vmem:[#allocation5 + $0x88] sm:$0xff]
    %v209 = vld [vmem:[#allocation5 + $0x90] sm:$0xff]
    %v210 = vld [vmem:[#allocation5 + $0x98] sm:$0xff]
    %v211 = vld [vmem:[#allocation5 + $0xa0] sm:$0xff]
    %v212 = vld [vmem:[#allocation5 + $0xa8] sm:$0xff]
    %v213 = vld [vmem:[#allocation5 + $0xb0] sm:$0xff]
    %v214 = vld [vmem:[#allocation5 + $0xb8] sm:$0xff]
    %v215 = vld [vmem:[#allocation5 + $0xc0] sm:$0xff]
    %v216 = vld [vmem:[#allocation5 + $0xc8] sm:$0xff]
    %v217 = vld [vmem:[#allocation5 + $0xd0] sm:$0xff]
    %v218 = vld [vmem:[#allocation5 + $0xd8] sm:$0xff]
    %v219 = vld [vmem:[#allocation5 + $0xe0] sm:$0xff]
    %v220 = vld [vmem:[#allocation5 + $0xe8] sm:$0xff]
    %v221 = vld [vmem:[#allocation5 + $0xf0] sm:$0xff]
    %v222 = vld [vmem:[#allocation5 + $0xf8] sm:$0xff]
    %v223 = vld [vmem:[#allocation5 + $0x100] sm:$0xff]
    %v224 = vld [vmem:[#allocation5 + $0x108] sm:$0xff]
    %v225 = vld [vmem:[#allocation5 + $0x110] sm:$0xff]
    %v226 = vld [vmem:[#allocation5 + $0x118] sm:$0xff]
    %v227 = vld [vmem:[#allocation5 + $0x120] sm:$0xff]
    %v228 = vld [vmem:[#allocation5 + $0x128] sm:$0xff]
    %v229 = vld [vmem:[#allocation5 + $0x130] sm:$0xff]
    %v230 = vld [vmem:[#allocation5 + $0x138] sm:$0xff]
    %v231 = vld [vmem:[#allocation5 + $0x140] sm:$0xff]
    %v232 = vld [vmem:[#allocation5 + $0x148] sm:$0xff]
    %v233 = vld [vmem:[#allocation5 + $0x150] sm:$0xff]
    %v234 = vld [vmem:[#allocation5 + $0x158] sm:$0xff]
    %v235 = vld [vmem:[#allocation5 + $0x160] sm:$0xff]
    %v236 = vld [vmem:[#allocation5 + $0x168] sm:$0xff]
    %v237 = vld [vmem:[#allocation5 + $0x170] sm:$0xff]
    %v238 = vld [vmem:[#allocation5 + $0x178] sm:$0xff]
    %v239 = vld [vmem:[#allocation5 + $0x180] sm:$0xff]
    %v240 = vld [vmem:[#allocation5 + $0x188] sm:$0xff]
    %v241 = vld [vmem:[#allocation5 + $0x190] sm:$0xff]
    %v242 = vld [vmem:[#allocation5 + $0x198] sm:$0xff]
    %v243 = vld [vmem:[#allocation5 + $0x1a0] sm:$0xff]
    %v244 = vld [vmem:[#allocation5 + $0x1a8] sm:$0xff]
    %v245 = vld [vmem:[#allocation5 + $0x1b0] sm:$0xff]
    %v246 = vld [vmem:[#allocation5 + $0x1b8] sm:$0xff]
    %v247 = vld [vmem:[#allocation5 + $0x1c0] sm:$0xff]
    %v248 = vld [vmem:[#allocation5 + $0x1c8] sm:$0xff]
    %v249 = vld [vmem:[#allocation5 + $0x1d0] sm:$0xff]
    %v250 = vld [vmem:[#allocation5 + $0x1d8] sm:$0xff]
    %v251 = vld [vmem:[#allocation5 + $0x1e0] sm:$0xff]
    %v252 = vld [vmem:[#allocation5 + $0x1e8] sm:$0xff]
    %v253 = vld [vmem:[#allocation5 + $0x1f0] sm:$0xff]
    %v254 = vld [vmem:[#allocation5 + $0x1f8] sm:$0xff]
    %v255 = vld [vmem:[#allocation5 + $0x200] sm:$0xff]
    %v256 = vld [vmem:[#allocation5 + $0x208] sm:$0xff]
    %v257 = vld [vmem:[#allocation5 + $0x210] sm:$0xff]
    %v258 = vld [vmem:[#allocation5 + $0x218] sm:$0xff]
    %v259 = vld [vmem:[#allocation5 + $0x220] sm:$0xff]
    %v260 = vld [vmem:[#allocation5 + $0x228] sm:$0xff]
    %v261 = vld [vmem:[#allocation5 + $0x230] sm:$0xff]
    %v262 = vld [vmem:[#allocation5 + $0x238] sm:$0xff]
    %v263 = vld [vmem:[#allocation5 + $0x240] sm:$0xff]
    %v264 = vld [vmem:[#allocation5 + $0x248] sm:$0xff]
    %v265 = vld [vmem:[#allocation5 + $0x250] sm:$0xff]
    %v266 = vld [vmem:[#allocation5 + $0x258] sm:$0xff]
    %v267 = vld [vmem:[#allocation5 + $0x260] sm:$0xff]
    %v268 = vld [vmem:[#allocation5 + $0x268] sm:$0xff]
    %v269 = vld [vmem:[#allocation5 + $0x270] sm:$0xff]
    %v270 = vld [vmem:[#allocation5 + $0x278] sm:$0xff]
    %v271 = vld [vmem:[#allocation5 + $0x280] sm:$0xff]
    %v272 = vld [vmem:[#allocation5 + $0x288] sm:$0xff]
    %v273 = vld [vmem:[#allocation5 + $0x290] sm:$0xff]
    %v274 = vld [vmem:[#allocation5 + $0x298] sm:$0xff]
    %v275 = vld [vmem:[#allocation5 + $0x2a0] sm:$0xff]
    %v276 = vld [vmem:[#allocation5 + $0x2a8] sm:$0xff]
    %v277 = vld [vmem:[#allocation5 + $0x2b0] sm:$0xff]
    %v278 = vld [vmem:[#allocation5 + $0x2b8] sm:$0xff]
    %v279 = vld [vmem:[#allocation5 + $0x2c0] sm:$0xff]
    %v280 = vld [vmem:[#allocation5 + $0x2c8] sm:$0xff]
    %v281 = vld [vmem:[#allocation5 + $0x2d0] sm:$0xff]
    %v282 = vld [vmem:[#allocation5 + $0x2d8] sm:$0xff]
    %v283 = vld [vmem:[#allocation5 + $0x2e0] sm:$0xff]
    %v284 = vld [vmem:[#allocation5 + $0x2e8] sm:$0xff]
    %v285 = vld [vmem:[#allocation5 + $0x2f0] sm:$0xff]
    %v286 = vld [vmem:[#allocation5 + $0x2f8] sm:$0xff]
    %v287 = vld [vmem:[#allocation5 + $0x300] sm:$0xff]
    %v288 = vld [vmem:[#allocation5 + $0x308] sm:$0xff]
    %v289 = vld [vmem:[#allocation5 + $0x310] sm:$0xff]
    %v290 = vld [vmem:[#allocation5 + $0x318] sm:$0xff]
    %v291 = vld [vmem:[#allocation5 + $0x320] sm:$0xff]
    %v292 = vld [vmem:[#allocation5 + $0x328] sm:$0xff]
    %v293 = vld [vmem:[#allocation5 + $0x330] sm:$0xff]
    %v294 = vld [vmem:[#allocation5 + $0x338] sm:$0xff]
    %v295 = vld [vmem:[#allocation5 + $0x340] sm:$0xff]
    %v296 = vld [vmem:[#allocation5 + $0x348] sm:$0xff]
    %v297 = vld [vmem:[#allocation5 + $0x350] sm:$0xff]
    %v298 = vld [vmem:[#allocation5 + $0x358] sm:$0xff]
    %v299 = vld [vmem:[#allocation5 + $0x360] sm:$0xff]
    %v300 = vld [vmem:[#allocation5 + $0x368] sm:$0xff]
    %v301 = vld [vmem:[#allocation5 + $0x370] sm:$0xff]
    %v302 = vld [vmem:[#allocation5 + $0x378] sm:$0xff]
    %v303 = vld [vmem:[#allocation5 + $0x380] sm:$0xff]
    %v304 = vld [vmem:[#allocation5 + $0x388] sm:$0xff]
    %v305 = vld [vmem:[#allocation5 + $0x390] sm:$0xff]
    %v306 = vld [vmem:[#allocation5 + $0x398] sm:$0xff]
    %v307 = vld [vmem:[#allocation5 + $0x3a0] sm:$0xff]
    %v308 = vld [vmem:[#allocation5 + $0x3a8] sm:$0xff]
    %v309 = vld [vmem:[#allocation5 + $0x3b0] sm:$0xff]
    %v310 = vld [vmem:[#allocation5 + $0x3b8] sm:$0xff]
    %v311 = vld [vmem:[#allocation5 + $0x3c0] sm:$0xff]
    %v312 = vld [vmem:[#allocation5 + $0x3c8] sm:$0xff]
    %v313 = vld [vmem:[#allocation5 + $0x3d0] sm:$0xff]
    %v314 = vld [vmem:[#allocation5 + $0x3d8] sm:$0xff]
    %v315 = vld [vmem:[#allocation5 + $0x3e0] sm:$0xff]
    %v316 = vld [vmem:[#allocation5 + $0x3e8] sm:$0xff]
    %v317 = vld [vmem:[#allocation5 + $0x3f0] sm:$0xff]
    %v318 = vld [vmem:[#allocation5 + $0x3f8] sm:$0xff]
    %v319 = vld [vmem:[#allocation5 + $0x400] sm:$0xff]
    %v320 = vld [vmem:[#allocation5 + $0x408] sm:$0xff]
    %v321 = vld [vmem:[#allocation5 + $0x410] sm:$0xff]
    %v322 = vld [vmem:[#allocation5 + $0x418] sm:$0xff]
    %v323 = vld [vmem:[#allocation5 + $0x420] sm:$0xff]
    %v324 = vld [vmem:[#allocation5 + $0x428] sm:$0xff]
    %v325 = vld [vmem:[#allocation5 + $0x430] sm:$0xff]
    %v326 = vld [vmem:[#allocation5 + $0x438] sm:$0xff]
    %v327 = vld [vmem:[#allocation5 + $0x440] sm:$0xff]
    %v328 = vld [vmem:[#allocation5 + $0x448] sm:$0xff]
    %v329 = vld [vmem:[#allocation5 + $0x450] sm:$0xff]
    %v330 = vld [vmem:[#allocation5 + $0x458] sm:$0xff]
    %v331 = vld [vmem:[#allocation5 + $0x460] sm:$0xff]
    %v332 = vld [vmem:[#allocation5 + $0x468] sm:$0xff]
    %v333 = vld [vmem:[#allocation5 + $0x470] sm:$0xff]
    %v334 = vld [vmem:[#allocation5 + $0x478] sm:$0xff]
    %v335 = vld [vmem:[#allocation5 + $0x480] sm:$0xff]
    %v336 = vld [vmem:[#allocation5 + $0x488] sm:$0xff]
    %v337 = vld [vmem:[#allocation5 + $0x490] sm:$0xff]
    %v338 = vld [vmem:[#allocation5 + $0x498] sm:$0xff]
    %v339 = vld [vmem:[#allocation5 + $0x4a0] sm:$0xff]
    %v340 = vld [vmem:[#allocation5 + $0x4a8] sm:$0xff]
    %v341 = vld [vmem:[#allocation5 + $0x4b0] sm:$0xff]
    %v342 = vld [vmem:[#allocation5 + $0x4b8] sm:$0xff]
    %v343 = vld [vmem:[#allocation5 + $0x4c0] sm:$0xff]
    %v344 = vld [vmem:[#allocation5 + $0x4c8] sm:$0xff]
    %v345 = vld [vmem:[#allocation5 + $0x4d0] sm:$0xff]
    %v346 = vld [vmem:[#allocation5 + $0x4d8] sm:$0xff]
    %v347 = vld [vmem:[#allocation5 + $0x4e0] sm:$0xff]
    %v348 = vld [vmem:[#allocation5 + $0x4e8] sm:$0xff]
    %v349 = vld [vmem:[#allocation5 + $0x4f0] sm:$0xff]
    %v350 = vld [vmem:[#allocation5 + $0x4f8] sm:$0xff]
    %v351 = vld [vmem:[#allocation5 + $0x500] sm:$0xff]
    %v352 = vld [vmem:[#allocation5 + $0x508] sm:$0xff]
    %v353 = vld [vmem:[#allocation5 + $0x510] sm:$0xff]
    %v354 = vld [vmem:[#allocation5 + $0x518] sm:$0xff]
    %v355 = vld [vmem:[#allocation5 + $0x520] sm:$0xff]
    %v356 = vld [vmem:[#allocation5 + $0x528] sm:$0xff]
    %v357 = vld [vmem:[#allocation5 + $0x530] sm:$0xff]
    %v358 = vld [vmem:[#allocation5 + $0x538] sm:$0xff]
    %v359 = vld [vmem:[#allocation5 + $0x540] sm:$0xff]
    %v360 = vld [vmem:[#allocation5 + $0x548] sm:$0xff]
    %v361 = vld [vmem:[#allocation5 + $0x550] sm:$0xff]
    %v362 = vld [vmem:[#allocation5 + $0x558] sm:$0xff]
    %v363 = vld [vmem:[#allocation5 + $0x560] sm:$0xff]
    %v364 = vld [vmem:[#allocation5 + $0x568] sm:$0xff]
    %v365 = vld [vmem:[#allocation5 + $0x570] sm:$0xff]
    %v366 = vld [vmem:[#allocation5 + $0x578] sm:$0xff]
    %v367 = vld [vmem:[#allocation5 + $0x580] sm:$0xff]
    %v368 = vld [vmem:[#allocation5 + $0x588] sm:$0xff]
    %v369 = vld [vmem:[#allocation5 + $0x590] sm:$0xff]
    %v370 = vld [vmem:[#allocation5 + $0x598] sm:$0xff]
    %v371 = vld [vmem:[#allocation5 + $0x5a0] sm:$0xff]
    %v372 = vld [vmem:[#allocation5 + $0x5a8] sm:$0xff]
    %v373 = vld [vmem:[#allocation5 + $0x5b0] sm:$0xff]
    %v374 = vld [vmem:[#allocation5 + $0x5b8] sm:$0xff]
    %v375 = vld [vmem:[#allocation5 + $0x5c0] sm:$0xff]
    %v376 = vld [vmem:[#allocation5 + $0x5c8] sm:$0xff]
    %v377 = vld [vmem:[#allocation5 + $0x5d0] sm:$0xff]
    %v378 = vld [vmem:[#allocation5 + $0x5d8] sm:$0xff]
    %v379 = vld [vmem:[#allocation5 + $0x5e0] sm:$0xff]
    %v380 = vld [vmem:[#allocation5 + $0x5e8] sm:$0xff]
    %v381 = vld [vmem:[#allocation5 + $0x5f0] sm:$0xff]
    %v382 = vld [vmem:[#allocation5 + $0x5f8] sm:$0xff]
    %v383 = vld [vmem:[#allocation5 + $0x600] sm:$0xff]
    %v384 = vld [vmem:[#allocation5 + $0x608] sm:$0xff]
    %v385 = vld [vmem:[#allocation5 + $0x610] sm:$0xff]
    %v386 = vld [vmem:[#allocation5 + $0x618] sm:$0xff]
    %v387 = vld [vmem:[#allocation5 + $0x620] sm:$0xff]
    %v388 = vld [vmem:[#allocation5 + $0x628] sm:$0xff]
    %v389 = vld [vmem:[#allocation5 + $0x630] sm:$0xff]
    %v390 = vld [vmem:[#allocation5 + $0x638] sm:$0xff]
    %v391 = vld [vmem:[#allocation5 + $0x640] sm:$0xff]
    %v392 = vld [vmem:[#allocation5 + $0x648] sm:$0xff]
    %v393 = vld [vmem:[#allocation5 + $0x650] sm:$0xff]
    %v394 = vld [vmem:[#allocation5 + $0x658] sm:$0xff]
    %v395 = vld [vmem:[#allocation5 + $0x660] sm:$0xff]
    %v396 = vld [vmem:[#allocation5 + $0x668] sm:$0xff]
    %v397 = vld [vmem:[#allocation5 + $0x670] sm:$0xff]
    %v398 = vld [vmem:[#allocation5 + $0x678] sm:$0xff]
    %v399 = vld [vmem:[#allocation5 + $0x680] sm:$0xff]
    %v400 = vld [vmem:[#allocation5 + $0x688] sm:$0xff]
    %v401 = vld [vmem:[#allocation5 + $0x690] sm:$0xff]
    %v402 = vld [vmem:[#allocation5 + $0x698] sm:$0xff]
    %v403 = vld [vmem:[#allocation5 + $0x6a0] sm:$0xff]
    %v404 = vld [vmem:[#allocation5 + $0x6a8] sm:$0xff]
    %v405 = vld [vmem:[#allocation5 + $0x6b0] sm:$0xff]
    %v406 = vld [vmem:[#allocation5 + $0x6b8] sm:$0xff]
    %v407 = vld [vmem:[#allocation5 + $0x6c0] sm:$0xff]
    %v408 = vld [vmem:[#allocation5 + $0x6c8] sm:$0xff]
    %v409 = vld [vmem:[#allocation5 + $0x6d0] sm:$0xff]
    %v410 = vld [vmem:[#allocation5 + $0x6d8] sm:$0xff]
    %v411 = vld [vmem:[#allocation5 + $0x6e0] sm:$0xff]
    %v412 = vld [vmem:[#allocation5 + $0x6e8] sm:$0xff]
    %v413 = vld [vmem:[#allocation5 + $0x6f0] sm:$0xff]
    %v414 = vld [vmem:[#allocation5 + $0x6f8] sm:$0xff]
    %v415 = vld [vmem:[#allocation5 + $0x700] sm:$0xff]
    %v416 = vld [vmem:[#allocation5 + $0x708] sm:$0xff]
    %v417 = vld [vmem:[#allocation5 + $0x710] sm:$0xff]
    %v418 = vld [vmem:[#allocation5 + $0x718] sm:$0xff]
    %v419 = vld [vmem:[#allocation5 + $0x720] sm:$0xff]
    %v420 = vld [vmem:[#allocation5 + $0x728] sm:$0xff]
    %v421 = vld [vmem:[#allocation5 + $0x730] sm:$0xff]
    %v422 = vld [vmem:[#allocation5 + $0x738] sm:$0xff]
    %v423 = vld [vmem:[#allocation5 + $0x740] sm:$0xff]
    %v424 = vld [vmem:[#allocation5 + $0x748] sm:$0xff]
    %v425 = vld [vmem:[#allocation5 + $0x750] sm:$0xff]
    %v426 = vld [vmem:[#allocation5 + $0x758] sm:$0xff]
    %v427 = vld [vmem:[#allocation5 + $0x760] sm:$0xff]
    %v428 = vld [vmem:[#allocation5 + $0x768] sm:$0xff]
    %v429 = vld [vmem:[#allocation5 + $0x770] sm:$0xff]
    %v430 = vld [vmem:[#allocation5 + $0x778] sm:$0xff]
    %v431 = vld [vmem:[#allocation5 + $0x780] sm:$0xff]
    %v432 = vld [vmem:[#allocation5 + $0x788] sm:$0xff]
    %v433 = vld [vmem:[#allocation5 + $0x790] sm:$0xff]
    %v434 = vld [vmem:[#allocation5 + $0x798] sm:$0xff]
    %v435 = vld [vmem:[#allocation5 + $0x7a0] sm:$0xff]
    %v436 = vld [vmem:[#allocation5 + $0x7a8] sm:$0xff]
    %v437 = vld [vmem:[#allocation5 + $0x7b0] sm:$0xff]
    %v438 = vld [vmem:[#allocation5 + $0x7b8] sm:$0xff]
    %v439 = vld [vmem:[#allocation5 + $0x7c0] sm:$0xff]
    %v440 = vld [vmem:[#allocation5 + $0x7c8] sm:$0xff]
    %v441 = vld [vmem:[#allocation5 + $0x7d0] sm:$0xff]
    %v442 = vld [vmem:[#allocation5 + $0x7d8] sm:$0xff]
    %v443 = vld [vmem:[#allocation5 + $0x7e0] sm:$0xff]
    %v444 = vld [vmem:[#allocation5 + $0x7e8] sm:$0xff]
    %v445 = vld [vmem:[#allocation5 + $0x7f0] sm:$0xff]
    %v446 = vld [vmem:[#allocation5 + $0x7f8] sm:$0xff]
    %v447 = vld [vmem:[#allocation5 + $0x800] sm:$0xff]
    %v448 = vld [vmem:[#allocation5 + $0x808] sm:$0xff]
    %v449 = vld [vmem:[#allocation5 + $0x810] sm:$0xff]
    %v450 = vld [vmem:[#allocation5 + $0x818] sm:$0xff]
    %v451 = vld [vmem:[#allocation5 + $0x820] sm:$0xff]
    %v452 = vld [vmem:[#allocation5 + $0x828] sm:$0xff]
    %v453 = vld [vmem:[#allocation5 + $0x830] sm:$0xff]
    %v454 = vld [vmem:[#allocation5 + $0x838] sm:$0xff]
    %v455 = vld [vmem:[#allocation5 + $0x840] sm:$0xff]
    %v456 = vld [vmem:[#allocation5 + $0x848] sm:$0xff]
    %v457 = vld [vmem:[#allocation5 + $0x850] sm:$0xff]
    %v458 = vld [vmem:[#allocation5 + $0x858] sm:$0xff]
    %v459 = vld [vmem:[#allocation5 + $0x860] sm:$0xff]
    %v460 = vld [vmem:[#allocation5 + $0x868] sm:$0xff]
    %v461 = vld [vmem:[#allocation5 + $0x870] sm:$0xff]
    %v462 = vld [vmem:[#allocation5 + $0x878] sm:$0xff]
    %v463 = vld [vmem:[#allocation5 + $0x880] sm:$0xff]
    %v464 = vld [vmem:[#allocation5 + $0x888] sm:$0xff]
    %v465 = vld [vmem:[#allocation5 + $0x890] sm:$0xff]
    %v466 = vld [vmem:[#allocation5 + $0x898] sm:$0xff]
    %v467 = vld [vmem:[#allocation5 + $0x8a0] sm:$0xff]
    %v468 = vld [vmem:[#allocation5 + $0x8a8] sm:$0xff]
    %v469 = vld [vmem:[#allocation5 + $0x8b0] sm:$0xff]
    %v470 = vld [vmem:[#allocation5 + $0x8b8] sm:$0xff]
    %v471 = vld [vmem:[#allocation5 + $0x8c0] sm:$0xff]
    %v472 = vld [vmem:[#allocation5 + $0x8c8] sm:$0xff]
    %v473 = vld [vmem:[#allocation5 + $0x8d0] sm:$0xff]
    %v474 = vld [vmem:[#allocation5 + $0x8d8] sm:$0xff]
    %v475 = vld [vmem:[#allocation5 + $0x8e0] sm:$0xff]
    %v476 = vld [vmem:[#allocation5 + $0x8e8] sm:$0xff]
    %v477 = vld [vmem:[#allocation5 + $0x8f0] sm:$0xff]
    %v478 = vld [vmem:[#allocation5 + $0x8f8] sm:$0xff]
    %v479 = vld [vmem:[#allocation5 + $0x900] sm:$0xff]
    %v480 = vld [vmem:[#allocation5 + $0x908] sm:$0xff]
    %v481 = vld [vmem:[#allocation5 + $0x910] sm:$0xff]
    %v482 = vld [vmem:[#allocation5 + $0x918] sm:$0xff]
    %v483 = vld [vmem:[#allocation5 + $0x920] sm:$0xff]
    %v484 = vld [vmem:[#allocation5 + $0x928] sm:$0xff]
    %v485 = vld [vmem:[#allocation7] sm:$0x3f]
    %v487 = vlaneseq
    %v488 = vshrl.u32 %v487, 7
    %v489 = vsub.s32 0, %v488
    %v490 = vrot.slane %v485, %v489
    %v491 = vlaneseq
    %v492 = vshrl.u32 %v491, 7
    %v493 = vsub.s32 1, %v492
    %v494 = vrot.slane %v485, %v493
    %v495 = vlaneseq
    %v496 = vshrl.u32 %v495, 7
    %v497 = vsub.s32 2, %v496
    %v498 = vrot.slane %v485, %v497
    %v499 = vlaneseq
    %v500 = vshrl.u32 %v499, 7
    %v501 = vsub.s32 3, %v500
    %v502 = vrot.slane %v485, %v501
    %v503 = vlaneseq
    %v504 = vshrl.u32 %v503, 7
    %v505 = vsub.s32 4, %v504
    %v506 = vrot.slane %v485, %v505
    %v507 = vlaneseq
    %v508 = vshrl.u32 %v507, 7
    %v509 = vsub.s32 5, %v508
    %v510 = vrot.slane %v485, %v509
    %v811 = vunpack.c.l.b16 %v191
    %v812 = vunpack.c.h.b16 %v191
    %v813 = vunpack.c.l.b16 %v192
    %v814 = vunpack.c.h.b16 %v192
    %v815 = vunpack.c.l.b16 %v193
    %v816 = vunpack.c.h.b16 %v193
    %v817 = vunpack.c.l.b16 %v194
    %v818 = vunpack.c.h.b16 %v194
    %v819 = vunpack.c.l.b16 %v195
    %v820 = vunpack.c.h.b16 %v195
    %v821 = vunpack.c.l.b16 %v196
    %v822 = vunpack.c.h.b16 %v196
    %v823 = vunpack.c.l.b16 %v197
    %v824 = vunpack.c.h.b16 %v197
    %v825 = vunpack.c.l.b16 %v198
    %v826 = vunpack.c.h.b16 %v198
    %v827 = vunpack.c.l.b16 %v199
    %v828 = vunpack.c.h.b16 %v199
    %v829 = vunpack.c.l.b16 %v200
    %v830 = vunpack.c.h.b16 %v200
    %v831 = vunpack.c.l.b16 %v201
    %v832 = vunpack.c.h.b16 %v201
    %v833 = vunpack.c.l.b16 %v202
    %v834 = vunpack.c.h.b16 %v202
    %v835 = vunpack.c.l.b16 %v203
    %v836 = vunpack.c.h.b16 %v203
    %v837 = vunpack.c.l.b16 %v204
    %v838 = vunpack.c.h.b16 %v204
    %v839 = vunpack.c.l.b16 %v205
    %v840 = vunpack.c.h.b16 %v205
    %v841 = vunpack.c.l.b16 %v206
    %v842 = vunpack.c.h.b16 %v206
    %v843 = vunpack.c.l.b16 %v207
    %v844 = vunpack.c.h.b16 %v207
    %v845 = vunpack.c.l.b16 %v208
    %v846 = vunpack.c.h.b16 %v208
    %v847 = vunpack.c.l.b16 %v209
    %v848 = vunpack.c.h.b16 %v209
    %v849 = vunpack.c.l.b16 %v210
    %v850 = vunpack.c.h.b16 %v210
    %v851 = vunpack.c.l.b16 %v211
    %v852 = vunpack.c.h.b16 %v211
    %v853 = vunpack.c.l.b16 %v212
    %v854 = vunpack.c.h.b16 %v212
    %v855 = vunpack.c.l.b16 %v213
    %v856 = vunpack.c.h.b16 %v213
    %v857 = vunpack.c.l.b16 %v214
    %v858 = vunpack.c.h.b16 %v214
    %v859 = vunpack.c.l.b16 %v215
    %v860 = vunpack.c.h.b16 %v215
    %v861 = vunpack.c.l.b16 %v216
    %v862 = vunpack.c.h.b16 %v216
    %v863 = vunpack.c.l.b16 %v217
    %v864 = vunpack.c.h.b16 %v217
    %v865 = vunpack.c.l.b16 %v218
    %v866 = vunpack.c.h.b16 %v218
    %v867 = vunpack.c.l.b16 %v219
    %v868 = vunpack.c.h.b16 %v219
    %v869 = vunpack.c.l.b16 %v220
    %v870 = vunpack.c.h.b16 %v220
    %v871 = vunpack.c.l.b16 %v221
    %v872 = vunpack.c.h.b16 %v221
    %v873 = vunpack.c.l.b16 %v222
    %v874 = vunpack.c.h.b16 %v222
    %v875 = vunpack.c.l.b16 %v223
    %v876 = vunpack.c.h.b16 %v223
    %v877 = vunpack.c.l.b16 %v224
    %v878 = vunpack.c.h.b16 %v224
    %v879 = vunpack.c.l.b16 %v225
    %v880 = vunpack.c.h.b16 %v225
    %v881 = vunpack.c.l.b16 %v226
    %v882 = vunpack.c.h.b16 %v226
    %v883 = vunpack.c.l.b16 %v227
    %v884 = vunpack.c.h.b16 %v227
    %v885 = vunpack.c.l.b16 %v228
    %v886 = vunpack.c.h.b16 %v228
    %v887 = vunpack.c.l.b16 %v229
    %v888 = vunpack.c.h.b16 %v229
    %v889 = vunpack.c.l.b16 %v230
    %v890 = vunpack.c.h.b16 %v230
    %v891 = vunpack.c.l.b16 %v231
    %v892 = vunpack.c.h.b16 %v231
    %v893 = vunpack.c.l.b16 %v232
    %v894 = vunpack.c.h.b16 %v232
    %v895 = vunpack.c.l.b16 %v233
    %v896 = vunpack.c.h.b16 %v233
    %v897 = vunpack.c.l.b16 %v234
    %v898 = vunpack.c.h.b16 %v234
    %v899 = vunpack.c.l.b16 %v235
    %v900 = vunpack.c.h.b16 %v235
    %v901 = vunpack.c.l.b16 %v236
    %v902 = vunpack.c.h.b16 %v236
    %v903 = vunpack.c.l.b16 %v237
    %v904 = vunpack.c.h.b16 %v237
    %v905 = vunpack.c.l.b16 %v238
    %v906 = vunpack.c.h.b16 %v238
    %v907 = vunpack.c.l.b16 %v239
    %v908 = vunpack.c.h.b16 %v239
    %v909 = vunpack.c.l.b16 %v240
    %v910 = vunpack.c.h.b16 %v240
    %v911 = vunpack.c.l.b16 %v241
    %v912 = vunpack.c.h.b16 %v241
    %v913 = vunpack.c.l.b16 %v242
    %v914 = vunpack.c.h.b16 %v242
    %v915 = vunpack.c.l.b16 %v243
    %v916 = vunpack.c.h.b16 %v243
    %v917 = vunpack.c.l.b16 %v244
    %v918 = vunpack.c.h.b16 %v244
    %v919 = vunpack.c.l.b16 %v245
    %v920 = vunpack.c.h.b16 %v245
    %v921 = vunpack.c.l.b16 %v246
    %v922 = vunpack.c.h.b16 %v246
    %v923 = vunpack.c.l.b16 %v247
    %v924 = vunpack.c.h.b16 %v247
    %v925 = vunpack.c.l.b16 %v248
    %v926 = vunpack.c.h.b16 %v248
    %v927 = vunpack.c.l.b16 %v249
    %v928 = vunpack.c.h.b16 %v249
    %v929 = vunpack.c.l.b16 %v250
    %v930 = vunpack.c.h.b16 %v250
    %v931 = vunpack.c.l.b16 %v251
    %v932 = vunpack.c.h.b16 %v251
    %v933 = vunpack.c.l.b16 %v252
    %v934 = vunpack.c.h.b16 %v252
    %v935 = vunpack.c.l.b16 %v253
    %v936 = vunpack.c.h.b16 %v253
    %v937 = vunpack.c.l.b16 %v254
    %v938 = vunpack.c.h.b16 %v254
    %v939 = vunpack.c.l.b16 %v255
    %v940 = vunpack.c.h.b16 %v255
    %v941 = vunpack.c.l.b16 %v256
    %v942 = vunpack.c.h.b16 %v256
    %v943 = vunpack.c.l.b16 %v257
    %v944 = vunpack.c.h.b16 %v257
    %v945 = vunpack.c.l.b16 %v258
    %v946 = vunpack.c.h.b16 %v258
    %v947 = vunpack.c.l.b16 %v259
    %v948 = vunpack.c.h.b16 %v259
    %v949 = vunpack.c.l.b16 %v260
    %v950 = vunpack.c.h.b16 %v260
    %v951 = vunpack.c.l.b16 %v261
    %v952 = vunpack.c.h.b16 %v261
    %v953 = vunpack.c.l.b16 %v262
    %v954 = vunpack.c.h.b16 %v262
    %v955 = vunpack.c.l.b16 %v263
    %v956 = vunpack.c.h.b16 %v263
    %v957 = vunpack.c.l.b16 %v264
    %v958 = vunpack.c.h.b16 %v264
    %v959 = vunpack.c.l.b16 %v265
    %v960 = vunpack.c.h.b16 %v265
    %v961 = vunpack.c.l.b16 %v266
    %v962 = vunpack.c.h.b16 %v266
    %v963 = vunpack.c.l.b16 %v267
    %v964 = vunpack.c.h.b16 %v267
    %v965 = vunpack.c.l.b16 %v268
    %v966 = vunpack.c.h.b16 %v268
    %v967 = vunpack.c.l.b16 %v269
    %v968 = vunpack.c.h.b16 %v269
    %v969 = vunpack.c.l.b16 %v270
    %v970 = vunpack.c.h.b16 %v270
    %v971 = vunpack.c.l.b16 %v271
    %v972 = vunpack.c.h.b16 %v271
    %v973 = vunpack.c.l.b16 %v272
    %v974 = vunpack.c.h.b16 %v272
    %v975 = vunpack.c.l.b16 %v273
    %v976 = vunpack.c.h.b16 %v273
    %v977 = vunpack.c.l.b16 %v274
    %v978 = vunpack.c.h.b16 %v274
    %v979 = vunpack.c.l.b16 %v275
    %v980 = vunpack.c.h.b16 %v275
    %v981 = vunpack.c.l.b16 %v276
    %v982 = vunpack.c.h.b16 %v276
    %v983 = vunpack.c.l.b16 %v277
    %v984 = vunpack.c.h.b16 %v277
    %v985 = vunpack.c.l.b16 %v278
    %v986 = vunpack.c.h.b16 %v278
    %v987 = vunpack.c.l.b16 %v279
    %v988 = vunpack.c.h.b16 %v279
    %v989 = vunpack.c.l.b16 %v280
    %v990 = vunpack.c.h.b16 %v280
    %v991 = vunpack.c.l.b16 %v281
    %v992 = vunpack.c.h.b16 %v281
    %v993 = vunpack.c.l.b16 %v282
    %v994 = vunpack.c.h.b16 %v282
    %v995 = vunpack.c.l.b16 %v283
    %v996 = vunpack.c.h.b16 %v283
    %v997 = vunpack.c.l.b16 %v284
    %v998 = vunpack.c.h.b16 %v284
    %v999 = vunpack.c.l.b16 %v285
    %v1000 = vunpack.c.h.b16 %v285
    %v1001 = vunpack.c.l.b16 %v286
    %v1002 = vunpack.c.h.b16 %v286
    %v1003 = vunpack.c.l.b16 %v287
    %v1004 = vunpack.c.h.b16 %v287
    %v1005 = vunpack.c.l.b16 %v288
    %v1006 = vunpack.c.h.b16 %v288
    %v1007 = vunpack.c.l.b16 %v289
    %v1008 = vunpack.c.h.b16 %v289
    %v1009 = vunpack.c.l.b16 %v290
    %v1010 = vunpack.c.h.b16 %v290
    %v1011 = vunpack.c.l.b16 %v291
    %v1012 = vunpack.c.h.b16 %v291
    %v1013 = vunpack.c.l.b16 %v292
    %v1014 = vunpack.c.h.b16 %v292
    %v1015 = vunpack.c.l.b16 %v293
    %v1016 = vunpack.c.h.b16 %v293
    %v1017 = vunpack.c.l.b16 %v294
    %v1018 = vunpack.c.h.b16 %v294
    %v1019 = vunpack.c.l.b16 %v295
    %v1020 = vunpack.c.h.b16 %v295
    %v1021 = vunpack.c.l.b16 %v296
    %v1022 = vunpack.c.h.b16 %v296
    %v1023 = vunpack.c.l.b16 %v297
    %v1024 = vunpack.c.h.b16 %v297
    %v1025 = vunpack.c.l.b16 %v298
    %v1026 = vunpack.c.h.b16 %v298
    %v1027 = vunpack.c.l.b16 %v299
    %v1028 = vunpack.c.h.b16 %v299
    %v1029 = vunpack.c.l.b16 %v300
    %v1030 = vunpack.c.h.b16 %v300
    %v1031 = vunpack.c.l.b16 %v301
    %v1032 = vunpack.c.h.b16 %v301
    %v1033 = vunpack.c.l.b16 %v302
    %v1034 = vunpack.c.h.b16 %v302
    %v1035 = vunpack.c.l.b16 %v303
    %v1036 = vunpack.c.h.b16 %v303
    %v1037 = vunpack.c.l.b16 %v304
    %v1038 = vunpack.c.h.b16 %v304
    %v1039 = vunpack.c.l.b16 %v305
    %v1040 = vunpack.c.h.b16 %v305
    %v1041 = vunpack.c.l.b16 %v306
    %v1042 = vunpack.c.h.b16 %v306
    %v1043 = vunpack.c.l.b16 %v307
    %v1044 = vunpack.c.h.b16 %v307
    %v1045 = vunpack.c.l.b16 %v308
    %v1046 = vunpack.c.h.b16 %v308
    %v1047 = vunpack.c.l.b16 %v309
    %v1048 = vunpack.c.h.b16 %v309
    %v1049 = vunpack.c.l.b16 %v310
    %v1050 = vunpack.c.h.b16 %v310
    %v1051 = vunpack.c.l.b16 %v311
    %v1052 = vunpack.c.h.b16 %v311
    %v1053 = vunpack.c.l.b16 %v312
    %v1054 = vunpack.c.h.b16 %v312
    %v1055 = vunpack.c.l.b16 %v313
    %v1056 = vunpack.c.h.b16 %v313
    %v1057 = vunpack.c.l.b16 %v314
    %v1058 = vunpack.c.h.b16 %v314
    %v1059 = vunpack.c.l.b16 %v315
    %v1060 = vunpack.c.h.b16 %v315
    %v1061 = vunpack.c.l.b16 %v316
    %v1062 = vunpack.c.h.b16 %v316
    %v1063 = vunpack.c.l.b16 %v317
    %v1064 = vunpack.c.h.b16 %v317
    %v1065 = vunpack.c.l.b16 %v318
    %v1066 = vunpack.c.h.b16 %v318
    %v1067 = vunpack.c.l.b16 %v319
    %v1068 = vunpack.c.h.b16 %v319
    %v1069 = vunpack.c.l.b16 %v320
    %v1070 = vunpack.c.h.b16 %v320
    %v1071 = vunpack.c.l.b16 %v321
    %v1072 = vunpack.c.h.b16 %v321
    %v1073 = vunpack.c.l.b16 %v322
    %v1074 = vunpack.c.h.b16 %v322
    %v1075 = vunpack.c.l.b16 %v323
    %v1076 = vunpack.c.h.b16 %v323
    %v1077 = vunpack.c.l.b16 %v324
    %v1078 = vunpack.c.h.b16 %v324
    %v1079 = vunpack.c.l.b16 %v325
    %v1080 = vunpack.c.h.b16 %v325
    %v1081 = vunpack.c.l.b16 %v326
    %v1082 = vunpack.c.h.b16 %v326
    %v1083 = vunpack.c.l.b16 %v327
    %v1084 = vunpack.c.h.b16 %v327
    %v1085 = vunpack.c.l.b16 %v328
    %v1086 = vunpack.c.h.b16 %v328
    %v1087 = vunpack.c.l.b16 %v329
    %v1088 = vunpack.c.h.b16 %v329
    %v1089 = vunpack.c.l.b16 %v330
    %v1090 = vunpack.c.h.b16 %v330
    %v1091 = vunpack.c.l.b16 %v331
    %v1092 = vunpack.c.h.b16 %v331
    %v1093 = vunpack.c.l.b16 %v332
    %v1094 = vunpack.c.h.b16 %v332
    %v1095 = vunpack.c.l.b16 %v333
    %v1096 = vunpack.c.h.b16 %v333
    %v1097 = vunpack.c.l.b16 %v334
    %v1098 = vunpack.c.h.b16 %v334
    %v1099 = vunpack.c.l.b16 %v335
    %v1100 = vunpack.c.h.b16 %v335
    %v1101 = vunpack.c.l.b16 %v336
    %v1102 = vunpack.c.h.b16 %v336
    %v1103 = vunpack.c.l.b16 %v337
    %v1104 = vunpack.c.h.b16 %v337
    %v1105 = vunpack.c.l.b16 %v338
    %v1106 = vunpack.c.h.b16 %v338
    %v1107 = vunpack.c.l.b16 %v339
    %v1108 = vunpack.c.h.b16 %v339
    %v1109 = vunpack.c.l.b16 %v340
    %v1110 = vunpack.c.h.b16 %v340
    %v1111 = vunpack.c.l.b16 %v341
    %v1112 = vunpack.c.h.b16 %v341
    %v1113 = vunpack.c.l.b16 %v342
    %v1114 = vunpack.c.h.b16 %v342
    %v1115 = vunpack.c.l.b16 %v343
    %v1116 = vunpack.c.h.b16 %v343
    %v1117 = vunpack.c.l.b16 %v344
    %v1118 = vunpack.c.h.b16 %v344
    %v1119 = vunpack.c.l.b16 %v345
    %v1120 = vunpack.c.h.b16 %v345
    %v1121 = vunpack.c.l.b16 %v346
    %v1122 = vunpack.c.h.b16 %v346
    %v1123 = vunpack.c.l.b16 %v347
    %v1124 = vunpack.c.h.b16 %v347
    %v1125 = vunpack.c.l.b16 %v348
    %v1126 = vunpack.c.h.b16 %v348
    %v1127 = vunpack.c.l.b16 %v349
    %v1128 = vunpack.c.h.b16 %v349
    %v1129 = vunpack.c.l.b16 %v350
    %v1130 = vunpack.c.h.b16 %v350
    %v1131 = vunpack.c.l.b16 %v351
    %v1132 = vunpack.c.h.b16 %v351
    %v1133 = vunpack.c.l.b16 %v352
    %v1134 = vunpack.c.h.b16 %v352
    %v1135 = vunpack.c.l.b16 %v353
    %v1136 = vunpack.c.h.b16 %v353
    %v1137 = vunpack.c.l.b16 %v354
    %v1138 = vunpack.c.h.b16 %v354
    %v1139 = vunpack.c.l.b16 %v355
    %v1140 = vunpack.c.h.b16 %v355
    %v1141 = vunpack.c.l.b16 %v356
    %v1142 = vunpack.c.h.b16 %v356
    %v1143 = vunpack.c.l.b16 %v357
    %v1144 = vunpack.c.h.b16 %v357
    %v1145 = vunpack.c.l.b16 %v358
    %v1146 = vunpack.c.h.b16 %v358
    %v1147 = vunpack.c.l.b16 %v359
    %v1148 = vunpack.c.h.b16 %v359
    %v1149 = vunpack.c.l.b16 %v360
    %v1150 = vunpack.c.h.b16 %v360
    %v1151 = vunpack.c.l.b16 %v361
    %v1152 = vunpack.c.h.b16 %v361
    %v1153 = vunpack.c.l.b16 %v362
    %v1154 = vunpack.c.h.b16 %v362
    %v1155 = vunpack.c.l.b16 %v363
    %v1156 = vunpack.c.h.b16 %v363
    %v1157 = vunpack.c.l.b16 %v364
    %v1158 = vunpack.c.h.b16 %v364
    %v1159 = vunpack.c.l.b16 %v365
    %v1160 = vunpack.c.h.b16 %v365
    %v1161 = vunpack.c.l.b16 %v366
    %v1162 = vunpack.c.h.b16 %v366
    %v1163 = vunpack.c.l.b16 %v367
    %v1164 = vunpack.c.h.b16 %v367
    %v1165 = vunpack.c.l.b16 %v368
    %v1166 = vunpack.c.h.b16 %v368
    %v1167 = vunpack.c.l.b16 %v369
    %v1168 = vunpack.c.h.b16 %v369
    %v1169 = vunpack.c.l.b16 %v370
    %v1170 = vunpack.c.h.b16 %v370
    %v1171 = vunpack.c.l.b16 %v371
    %v1172 = vunpack.c.h.b16 %v371
    %v1173 = vunpack.c.l.b16 %v372
    %v1174 = vunpack.c.h.b16 %v372
    %v1175 = vunpack.c.l.b16 %v373
    %v1176 = vunpack.c.h.b16 %v373
    %v1177 = vunpack.c.l.b16 %v374
    %v1178 = vunpack.c.h.b16 %v374
    %v1179 = vunpack.c.l.b16 %v375
    %v1180 = vunpack.c.h.b16 %v375
    %v1181 = vunpack.c.l.b16 %v376
    %v1182 = vunpack.c.h.b16 %v376
    %v1183 = vunpack.c.l.b16 %v377
    %v1184 = vunpack.c.h.b16 %v377
    %v1185 = vunpack.c.l.b16 %v378
    %v1186 = vunpack.c.h.b16 %v378
    %v1187 = vunpack.c.l.b16 %v379
    %v1188 = vunpack.c.h.b16 %v379
    %v1189 = vunpack.c.l.b16 %v380
    %v1190 = vunpack.c.h.b16 %v380
    %v1191 = vunpack.c.l.b16 %v381
    %v1192 = vunpack.c.h.b16 %v381
    %v1193 = vunpack.c.l.b16 %v382
    %v1194 = vunpack.c.h.b16 %v382
    %v1195 = vunpack.c.l.b16 %v383
    %v1196 = vunpack.c.h.b16 %v383
    %v1197 = vunpack.c.l.b16 %v384
    %v1198 = vunpack.c.h.b16 %v384
    %v1199 = vunpack.c.l.b16 %v385
    %v1200 = vunpack.c.h.b16 %v385
    %v1201 = vunpack.c.l.b16 %v386
    %v1202 = vunpack.c.h.b16 %v386
    %v1203 = vunpack.c.l.b16 %v387
    %v1204 = vunpack.c.h.b16 %v387
    %v1205 = vunpack.c.l.b16 %v388
    %v1206 = vunpack.c.h.b16 %v388
    %v1207 = vunpack.c.l.b16 %v389
    %v1208 = vunpack.c.h.b16 %v389
    %v1209 = vunpack.c.l.b16 %v390
    %v1210 = vunpack.c.h.b16 %v390
    %v1211 = vunpack.c.l.b16 %v391
    %v1212 = vunpack.c.h.b16 %v391
    %v1213 = vunpack.c.l.b16 %v392
    %v1214 = vunpack.c.h.b16 %v392
    %v1215 = vunpack.c.l.b16 %v393
    %v1216 = vunpack.c.h.b16 %v393
    %v1217 = vunpack.c.l.b16 %v394
    %v1218 = vunpack.c.h.b16 %v394
    %v1219 = vunpack.c.l.b16 %v395
    %v1220 = vunpack.c.h.b16 %v395
    %v1221 = vunpack.c.l.b16 %v396
    %v1222 = vunpack.c.h.b16 %v396
    %v1223 = vunpack.c.l.b16 %v397
    %v1224 = vunpack.c.h.b16 %v397
    %v1225 = vunpack.c.l.b16 %v398
    %v1226 = vunpack.c.h.b16 %v398
    %v1227 = vunpack.c.l.b16 %v399
    %v1228 = vunpack.c.h.b16 %v399
    %v1229 = vunpack.c.l.b16 %v400
    %v1230 = vunpack.c.h.b16 %v400
    %v1231 = vunpack.c.l.b16 %v401
    %v1232 = vunpack.c.h.b16 %v401
    %v1233 = vunpack.c.l.b16 %v402
    %v1234 = vunpack.c.h.b16 %v402
    %v1235 = vunpack.c.l.b16 %v403
    %v1236 = vunpack.c.h.b16 %v403
    %v1237 = vunpack.c.l.b16 %v404
    %v1238 = vunpack.c.h.b16 %v404
    %v1239 = vunpack.c.l.b16 %v405
    %v1240 = vunpack.c.h.b16 %v405
    %v1241 = vunpack.c.l.b16 %v406
    %v1242 = vunpack.c.h.b16 %v406
    %v1243 = vunpack.c.l.b16 %v407
    %v1244 = vunpack.c.h.b16 %v407
    %v1245 = vunpack.c.l.b16 %v408
    %v1246 = vunpack.c.h.b16 %v408
    %v1247 = vunpack.c.l.b16 %v409
    %v1248 = vunpack.c.h.b16 %v409
    %v1249 = vunpack.c.l.b16 %v410
    %v1250 = vunpack.c.h.b16 %v410
    %v1251 = vunpack.c.l.b16 %v411
    %v1252 = vunpack.c.h.b16 %v411
    %v1253 = vunpack.c.l.b16 %v412
    %v1254 = vunpack.c.h.b16 %v412
    %v1255 = vunpack.c.l.b16 %v413
    %v1256 = vunpack.c.h.b16 %v413
    %v1257 = vunpack.c.l.b16 %v414
    %v1258 = vunpack.c.h.b16 %v414
    %v1259 = vunpack.c.l.b16 %v415
    %v1260 = vunpack.c.h.b16 %v415
    %v1261 = vunpack.c.l.b16 %v416
    %v1262 = vunpack.c.h.b16 %v416
    %v1263 = vunpack.c.l.b16 %v417
    %v1264 = vunpack.c.h.b16 %v417
    %v1265 = vunpack.c.l.b16 %v418
    %v1266 = vunpack.c.h.b16 %v418
    %v1267 = vunpack.c.l.b16 %v419
    %v1268 = vunpack.c.h.b16 %v419
    %v1269 = vunpack.c.l.b16 %v420
    %v1270 = vunpack.c.h.b16 %v420
    %v1271 = vunpack.c.l.b16 %v421
    %v1272 = vunpack.c.h.b16 %v421
    %v1273 = vunpack.c.l.b16 %v422
    %v1274 = vunpack.c.h.b16 %v422
    %v1275 = vunpack.c.l.b16 %v423
    %v1276 = vunpack.c.h.b16 %v423
    %v1277 = vunpack.c.l.b16 %v424
    %v1278 = vunpack.c.h.b16 %v424
    %v1279 = vunpack.c.l.b16 %v425
    %v1280 = vunpack.c.h.b16 %v425
    %v1281 = vunpack.c.l.b16 %v426
    %v1282 = vunpack.c.h.b16 %v426
    %v1283 = vunpack.c.l.b16 %v427
    %v1284 = vunpack.c.h.b16 %v427
    %v1285 = vunpack.c.l.b16 %v428
    %v1286 = vunpack.c.h.b16 %v428
    %v1287 = vunpack.c.l.b16 %v429
    %v1288 = vunpack.c.h.b16 %v429
    %v1289 = vunpack.c.l.b16 %v430
    %v1290 = vunpack.c.h.b16 %v430
    %v1291 = vunpack.c.l.b16 %v431
    %v1292 = vunpack.c.h.b16 %v431
    %v1293 = vunpack.c.l.b16 %v432
    %v1294 = vunpack.c.h.b16 %v432
    %v1295 = vunpack.c.l.b16 %v433
    %v1296 = vunpack.c.h.b16 %v433
    %v1297 = vunpack.c.l.b16 %v434
    %v1298 = vunpack.c.h.b16 %v434
    %v1299 = vunpack.c.l.b16 %v435
    %v1300 = vunpack.c.h.b16 %v435
    %v1301 = vunpack.c.l.b16 %v436
    %v1302 = vunpack.c.h.b16 %v436
    %v1303 = vunpack.c.l.b16 %v437
    %v1304 = vunpack.c.h.b16 %v437
    %v1305 = vunpack.c.l.b16 %v438
    %v1306 = vunpack.c.h.b16 %v438
    %v1307 = vunpack.c.l.b16 %v439
    %v1308 = vunpack.c.h.b16 %v439
    %v1309 = vunpack.c.l.b16 %v440
    %v1310 = vunpack.c.h.b16 %v440
    %v1311 = vunpack.c.l.b16 %v441
    %v1312 = vunpack.c.h.b16 %v441
    %v1313 = vunpack.c.l.b16 %v442
    %v1314 = vunpack.c.h.b16 %v442
    %v1315 = vunpack.c.l.b16 %v443
    %v1316 = vunpack.c.h.b16 %v443
    %v1317 = vunpack.c.l.b16 %v444
    %v1318 = vunpack.c.h.b16 %v444
    %v1319 = vunpack.c.l.b16 %v445
    %v1320 = vunpack.c.h.b16 %v445
    %v1321 = vunpack.c.l.b16 %v446
    %v1322 = vunpack.c.h.b16 %v446
    %v1323 = vunpack.c.l.b16 %v447
    %v1324 = vunpack.c.h.b16 %v447
    %v1325 = vunpack.c.l.b16 %v448
    %v1326 = vunpack.c.h.b16 %v448
    %v1327 = vunpack.c.l.b16 %v449
    %v1328 = vunpack.c.h.b16 %v449
    %v1329 = vunpack.c.l.b16 %v450
    %v1330 = vunpack.c.h.b16 %v450
    %v1331 = vunpack.c.l.b16 %v451
    %v1332 = vunpack.c.h.b16 %v451
    %v1333 = vunpack.c.l.b16 %v452
    %v1334 = vunpack.c.h.b16 %v452
    %v1335 = vunpack.c.l.b16 %v453
    %v1336 = vunpack.c.h.b16 %v453
    %v1337 = vunpack.c.l.b16 %v454
    %v1338 = vunpack.c.h.b16 %v454
    %v1339 = vunpack.c.l.b16 %v455
    %v1340 = vunpack.c.h.b16 %v455
    %v1341 = vunpack.c.l.b16 %v456
    %v1342 = vunpack.c.h.b16 %v456
    %v1343 = vunpack.c.l.b16 %v457
    %v1344 = vunpack.c.h.b16 %v457
    %v1345 = vunpack.c.l.b16 %v458
    %v1346 = vunpack.c.h.b16 %v458
    %v1347 = vunpack.c.l.b16 %v459
    %v1348 = vunpack.c.h.b16 %v459
    %v1349 = vunpack.c.l.b16 %v460
    %v1350 = vunpack.c.h.b16 %v460
    %v1351 = vunpack.c.l.b16 %v461
    %v1352 = vunpack.c.h.b16 %v461
    %v1353 = vunpack.c.l.b16 %v462
    %v1354 = vunpack.c.h.b16 %v462
    %v1355 = vunpack.c.l.b16 %v463
    %v1356 = vunpack.c.h.b16 %v463
    %v1357 = vunpack.c.l.b16 %v464
    %v1358 = vunpack.c.h.b16 %v464
    %v1359 = vunpack.c.l.b16 %v465
    %v1360 = vunpack.c.h.b16 %v465
    %v1361 = vunpack.c.l.b16 %v466
    %v1362 = vunpack.c.h.b16 %v466
    %v1363 = vunpack.c.l.b16 %v467
    %v1364 = vunpack.c.h.b16 %v467
    %v1365 = vunpack.c.l.b16 %v468
    %v1366 = vunpack.c.h.b16 %v468
    %v1367 = vunpack.c.l.b16 %v469
    %v1368 = vunpack.c.h.b16 %v469
    %v1369 = vunpack.c.l.b16 %v470
    %v1370 = vunpack.c.h.b16 %v470
    %v1371 = vunpack.c.l.b16 %v471
    %v1372 = vunpack.c.h.b16 %v471
    %v1373 = vunpack.c.l.b16 %v472
    %v1374 = vunpack.c.h.b16 %v472
    %v1375 = vunpack.c.l.b16 %v473
    %v1376 = vunpack.c.h.b16 %v473
    %v1377 = vunpack.c.l.b16 %v474
    %v1378 = vunpack.c.h.b16 %v474
    %v1379 = vunpack.c.l.b16 %v475
    %v1380 = vunpack.c.h.b16 %v475
    %v1381 = vunpack.c.l.b16 %v476
    %v1382 = vunpack.c.h.b16 %v476
    %v1383 = vunpack.c.l.b16 %v477
    %v1384 = vunpack.c.h.b16 %v477
    %v1385 = vunpack.c.l.b16 %v478
    %v1386 = vunpack.c.h.b16 %v478
    %v1387 = vunpack.c.l.b16 %v479
    %v1388 = vunpack.c.h.b16 %v479
    %v1389 = vunpack.c.l.b16 %v480
    %v1390 = vunpack.c.h.b16 %v480
    %v1391 = vunpack.c.l.b16 %v481
    %v1392 = vunpack.c.h.b16 %v481
    %v1393 = vunpack.c.l.b16 %v482
    %v1394 = vunpack.c.h.b16 %v482
    %v1395 = vunpack.c.l.b16 %v483
    %v1396 = vunpack.c.h.b16 %v483
    %v1397 = vunpack.c.l.b16 %v484
    %v1398 = vunpack.c.h.b16 %v484
    %v1399 = vpack.c.b16 %v817, %v811
    %v1400 = vpack.c.b16 %v818, %v812
    %v1401 = vpack.c.b16 %v819, %v813
    %v1402 = vpack.c.b16 %v820, %v814
    %v1403 = vpack.c.b16 %v821, %v815
    %v1404 = vpack.c.b16 %v822, %v816
    %v1405 = vpack.c.b16 %v829, %v823
    %v1406 = vpack.c.b16 %v830, %v824
    %v1407 = vpack.c.b16 %v831, %v825
    %v1408 = vpack.c.b16 %v832, %v826
    %v1409 = vpack.c.b16 %v833, %v827
    %v1410 = vpack.c.b16 %v834, %v828
    %v1411 = vpack.c.b16 %v841, %v835
    %v1412 = vpack.c.b16 %v842, %v836
    %v1413 = vpack.c.b16 %v843, %v837
    %v1414 = vpack.c.b16 %v844, %v838
    %v1415 = vpack.c.b16 %v845, %v839
    %v1416 = vpack.c.b16 %v846, %v840
    %v1417 = vpack.c.b16 %v853, %v847
    %v1418 = vpack.c.b16 %v854, %v848
    %v1419 = vpack.c.b16 %v855, %v849
    %v1420 = vpack.c.b16 %v856, %v850
    %v1421 = vpack.c.b16 %v857, %v851
    %v1422 = vpack.c.b16 %v858, %v852
    %v1423 = vpack.c.b16 %v865, %v859
    %v1424 = vpack.c.b16 %v866, %v860
    %v1425 = vpack.c.b16 %v867, %v861
    %v1426 = vpack.c.b16 %v868, %v862
    %v1427 = vpack.c.b16 %v869, %v863
    %v1428 = vpack.c.b16 %v870, %v864
    %v1429 = vpack.c.b16 %v877, %v871
    %v1430 = vpack.c.b16 %v878, %v872
    %v1431 = vpack.c.b16 %v879, %v873
    %v1432 = vpack.c.b16 %v880, %v874
    %v1433 = vpack.c.b16 %v881, %v875
    %v1434 = vpack.c.b16 %v882, %v876
    %v1435 = vpack.c.b16 %v889, %v883
    %v1436 = vpack.c.b16 %v890, %v884
    %v1437 = vpack.c.b16 %v891, %v885
    %v1438 = vpack.c.b16 %v892, %v886
    %v1439 = vpack.c.b16 %v893, %v887
    %v1440 = vpack.c.b16 %v894, %v888
    %v1441 = vpack.c.b16 %v901, %v895
    %v1442 = vpack.c.b16 %v902, %v896
    %v1443 = vpack.c.b16 %v903, %v897
    %v1444 = vpack.c.b16 %v904, %v898
    %v1445 = vpack.c.b16 %v905, %v899
    %v1446 = vpack.c.b16 %v906, %v900
    %v1447 = vpack.c.b16 %v913, %v907
    %v1448 = vpack.c.b16 %v914, %v908
    %v1449 = vpack.c.b16 %v915, %v909
    %v1450 = vpack.c.b16 %v916, %v910
    %v1451 = vpack.c.b16 %v917, %v911
    %v1452 = vpack.c.b16 %v918, %v912
    %v1453 = vpack.c.b16 %v925, %v919
    %v1454 = vpack.c.b16 %v926, %v920
    %v1455 = vpack.c.b16 %v927, %v921
    %v1456 = vpack.c.b16 %v928, %v922
    %v1457 = vpack.c.b16 %v929, %v923
    %v1458 = vpack.c.b16 %v930, %v924
    %v1459 = vpack.c.b16 %v937, %v931
    %v1460 = vpack.c.b16 %v938, %v932
    %v1461 = vpack.c.b16 %v939, %v933
    %v1462 = vpack.c.b16 %v940, %v934
    %v1463 = vpack.c.b16 %v941, %v935
    %v1464 = vpack.c.b16 %v942, %v936
    %v1465 = vpack.c.b16 %v949, %v943
    %v1466 = vpack.c.b16 %v950, %v944
    %v1467 = vpack.c.b16 %v951, %v945
    %v1468 = vpack.c.b16 %v952, %v946
    %v1469 = vpack.c.b16 %v953, %v947
    %v1470 = vpack.c.b16 %v954, %v948
    %v1471 = vpack.c.b16 %v961, %v955
    %v1472 = vpack.c.b16 %v962, %v956
    %v1473 = vpack.c.b16 %v963, %v957
    %v1474 = vpack.c.b16 %v964, %v958
    %v1475 = vpack.c.b16 %v965, %v959
    %v1476 = vpack.c.b16 %v966, %v960
    %v1477 = vpack.c.b16 %v973, %v967
    %v1478 = vpack.c.b16 %v974, %v968
    %v1479 = vpack.c.b16 %v975, %v969
    %v1480 = vpack.c.b16 %v976, %v970
    %v1481 = vpack.c.b16 %v977, %v971
    %v1482 = vpack.c.b16 %v978, %v972
    %v1483 = vpack.c.b16 %v985, %v979
    %v1484 = vpack.c.b16 %v986, %v980
    %v1485 = vpack.c.b16 %v987, %v981
    %v1486 = vpack.c.b16 %v988, %v982
    %v1487 = vpack.c.b16 %v989, %v983
    %v1488 = vpack.c.b16 %v990, %v984
    %v1489 = vpack.c.b16 %v997, %v991
    %v1490 = vpack.c.b16 %v998, %v992
    %v1491 = vpack.c.b16 %v999, %v993
    %v1492 = vpack.c.b16 %v1000, %v994
    %v1493 = vpack.c.b16 %v1001, %v995
    %v1494 = vpack.c.b16 %v1002, %v996
    %v1495 = vpack.c.b16 %v1009, %v1003
    %v1496 = vpack.c.b16 %v1010, %v1004
    %v1497 = vpack.c.b16 %v1011, %v1005
    %v1498 = vpack.c.b16 %v1012, %v1006
    %v1499 = vpack.c.b16 %v1013, %v1007
    %v1500 = vpack.c.b16 %v1014, %v1008
    %v1501 = vpack.c.b16 %v1021, %v1015
    %v1502 = vpack.c.b16 %v1022, %v1016
    %v1503 = vpack.c.b16 %v1023, %v1017
    %v1504 = vpack.c.b16 %v1024, %v1018
    %v1505 = vpack.c.b16 %v1025, %v1019
    %v1506 = vpack.c.b16 %v1026, %v1020
    %v1507 = vpack.c.b16 %v1033, %v1027
    %v1508 = vpack.c.b16 %v1034, %v1028
    %v1509 = vpack.c.b16 %v1035, %v1029
    %v1510 = vpack.c.b16 %v1036, %v1030
    %v1511 = vpack.c.b16 %v1037, %v1031
    %v1512 = vpack.c.b16 %v1038, %v1032
    %v1513 = vpack.c.b16 %v1045, %v1039
    %v1514 = vpack.c.b16 %v1046, %v1040
    %v1515 = vpack.c.b16 %v1047, %v1041
    %v1516 = vpack.c.b16 %v1048, %v1042
    %v1517 = vpack.c.b16 %v1049, %v1043
    %v1518 = vpack.c.b16 %v1050, %v1044
    %v1519 = vpack.c.b16 %v1057, %v1051
    %v1520 = vpack.c.b16 %v1058, %v1052
    %v1521 = vpack.c.b16 %v1059, %v1053
    %v1522 = vpack.c.b16 %v1060, %v1054
    %v1523 = vpack.c.b16 %v1061, %v1055
    %v1524 = vpack.c.b16 %v1062, %v1056
    %v1525 = vpack.c.b16 %v1069, %v1063
    %v1526 = vpack.c.b16 %v1070, %v1064
    %v1527 = vpack.c.b16 %v1071, %v1065
    %v1528 = vpack.c.b16 %v1072, %v1066
    %v1529 = vpack.c.b16 %v1073, %v1067
    %v1530 = vpack.c.b16 %v1074, %v1068
    %v1531 = vpack.c.b16 %v1081, %v1075
    %v1532 = vpack.c.b16 %v1082, %v1076
    %v1533 = vpack.c.b16 %v1083, %v1077
    %v1534 = vpack.c.b16 %v1084, %v1078
    %v1535 = vpack.c.b16 %v1085, %v1079
    %v1536 = vpack.c.b16 %v1086, %v1080
    %v1537 = vpack.c.b16 %v1093, %v1087
    %v1538 = vpack.c.b16 %v1094, %v1088
    %v1539 = vpack.c.b16 %v1095, %v1089
    %v1540 = vpack.c.b16 %v1096, %v1090
    %v1541 = vpack.c.b16 %v1097, %v1091
    %v1542 = vpack.c.b16 %v1098, %v1092
    %v1543 = vpack.c.b16 %v1105, %v1099
    %v1544 = vpack.c.b16 %v1106, %v1100
    %v1545 = vpack.c.b16 %v1107, %v1101
    %v1546 = vpack.c.b16 %v1108, %v1102
    %v1547 = vpack.c.b16 %v1109, %v1103
    %v1548 = vpack.c.b16 %v1110, %v1104
    %v1549 = vpack.c.b16 %v1117, %v1111
    %v1550 = vpack.c.b16 %v1118, %v1112
    %v1551 = vpack.c.b16 %v1119, %v1113
    %v1552 = vpack.c.b16 %v1120, %v1114
    %v1553 = vpack.c.b16 %v1121, %v1115
    %v1554 = vpack.c.b16 %v1122, %v1116
    %v1555 = vpack.c.b16 %v1129, %v1123
    %v1556 = vpack.c.b16 %v1130, %v1124
    %v1557 = vpack.c.b16 %v1131, %v1125
    %v1558 = vpack.c.b16 %v1132, %v1126
    %v1559 = vpack.c.b16 %v1133, %v1127
    %v1560 = vpack.c.b16 %v1134, %v1128
    %v1561 = vpack.c.b16 %v1141, %v1135
    %v1562 = vpack.c.b16 %v1142, %v1136
    %v1563 = vpack.c.b16 %v1143, %v1137
    %v1564 = vpack.c.b16 %v1144, %v1138
    %v1565 = vpack.c.b16 %v1145, %v1139
    %v1566 = vpack.c.b16 %v1146, %v1140
    %v1567 = vpack.c.b16 %v1153, %v1147
    %v1568 = vpack.c.b16 %v1154, %v1148
    %v1569 = vpack.c.b16 %v1155, %v1149
    %v1570 = vpack.c.b16 %v1156, %v1150
    %v1571 = vpack.c.b16 %v1157, %v1151
    %v1572 = vpack.c.b16 %v1158, %v1152
    %v1573 = vpack.c.b16 %v1165, %v1159
    %v1574 = vpack.c.b16 %v1166, %v1160
    %v1575 = vpack.c.b16 %v1167, %v1161
    %v1576 = vpack.c.b16 %v1168, %v1162
    %v1577 = vpack.c.b16 %v1169, %v1163
    %v1578 = vpack.c.b16 %v1170, %v1164
    %v1579 = vpack.c.b16 %v1177, %v1171
    %v1580 = vpack.c.b16 %v1178, %v1172
    %v1581 = vpack.c.b16 %v1179, %v1173
    %v1582 = vpack.c.b16 %v1180, %v1174
    %v1583 = vpack.c.b16 %v1181, %v1175
    %v1584 = vpack.c.b16 %v1182, %v1176
    %v1585 = vpack.c.b16 %v1189, %v1183
    %v1586 = vpack.c.b16 %v1190, %v1184
    %v1587 = vpack.c.b16 %v1191, %v1185
    %v1588 = vpack.c.b16 %v1192, %v1186
    %v1589 = vpack.c.b16 %v1193, %v1187
    %v1590 = vpack.c.b16 %v1194, %v1188
    %v1591 = vpack.c.b16 %v1201, %v1195
    %v1592 = vpack.c.b16 %v1202, %v1196
    %v1593 = vpack.c.b16 %v1203, %v1197
    %v1594 = vpack.c.b16 %v1204, %v1198
    %v1595 = vpack.c.b16 %v1205, %v1199
    %v1596 = vpack.c.b16 %v1206, %v1200
    %v1597 = vpack.c.b16 %v1213, %v1207
    %v1598 = vpack.c.b16 %v1214, %v1208
    %v1599 = vpack.c.b16 %v1215, %v1209
    %v1600 = vpack.c.b16 %v1216, %v1210
    %v1601 = vpack.c.b16 %v1217, %v1211
    %v1602 = vpack.c.b16 %v1218, %v1212
    %v1603 = vpack.c.b16 %v1225, %v1219
    %v1604 = vpack.c.b16 %v1226, %v1220
    %v1605 = vpack.c.b16 %v1227, %v1221
    %v1606 = vpack.c.b16 %v1228, %v1222
    %v1607 = vpack.c.b16 %v1229, %v1223
    %v1608 = vpack.c.b16 %v1230, %v1224
    %v1609 = vpack.c.b16 %v1237, %v1231
    %v1610 = vpack.c.b16 %v1238, %v1232
    %v1611 = vpack.c.b16 %v1239, %v1233
    %v1612 = vpack.c.b16 %v1240, %v1234
    %v1613 = vpack.c.b16 %v1241, %v1235
    %v1614 = vpack.c.b16 %v1242, %v1236
    %v1615 = vpack.c.b16 %v1249, %v1243
    %v1616 = vpack.c.b16 %v1250, %v1244
    %v1617 = vpack.c.b16 %v1251, %v1245
    %v1618 = vpack.c.b16 %v1252, %v1246
    %v1619 = vpack.c.b16 %v1253, %v1247
    %v1620 = vpack.c.b16 %v1254, %v1248
    %v1621 = vpack.c.b16 %v1261, %v1255
    %v1622 = vpack.c.b16 %v1262, %v1256
    %v1623 = vpack.c.b16 %v1263, %v1257
    %v1624 = vpack.c.b16 %v1264, %v1258
    %v1625 = vpack.c.b16 %v1265, %v1259
    %v1626 = vpack.c.b16 %v1266, %v1260
    %v1627 = vpack.c.b16 %v1273, %v1267
    %v1628 = vpack.c.b16 %v1274, %v1268
    %v1629 = vpack.c.b16 %v1275, %v1269
    %v1630 = vpack.c.b16 %v1276, %v1270
    %v1631 = vpack.c.b16 %v1277, %v1271
    %v1632 = vpack.c.b16 %v1278, %v1272
    %v1633 = vpack.c.b16 %v1285, %v1279
    %v1634 = vpack.c.b16 %v1286, %v1280
    %v1635 = vpack.c.b16 %v1287, %v1281
    %v1636 = vpack.c.b16 %v1288, %v1282
    %v1637 = vpack.c.b16 %v1289, %v1283
    %v1638 = vpack.c.b16 %v1290, %v1284
    %v1639 = vpack.c.b16 %v1297, %v1291
    %v1640 = vpack.c.b16 %v1298, %v1292
    %v1641 = vpack.c.b16 %v1299, %v1293
    %v1642 = vpack.c.b16 %v1300, %v1294
    %v1643 = vpack.c.b16 %v1301, %v1295
    %v1644 = vpack.c.b16 %v1302, %v1296
    %v1645 = vpack.c.b16 %v1309, %v1303
    %v1646 = vpack.c.b16 %v1310, %v1304
    %v1647 = vpack.c.b16 %v1311, %v1305
    %v1648 = vpack.c.b16 %v1312, %v1306
    %v1649 = vpack.c.b16 %v1313, %v1307
    %v1650 = vpack.c.b16 %v1314, %v1308
    %v1651 = vpack.c.b16 %v1321, %v1315
    %v1652 = vpack.c.b16 %v1322, %v1316
    %v1653 = vpack.c.b16 %v1323, %v1317
    %v1654 = vpack.c.b16 %v1324, %v1318
    %v1655 = vpack.c.b16 %v1325, %v1319
    %v1656 = vpack.c.b16 %v1326, %v1320
    %v1657 = vpack.c.b16 %v1333, %v1327
    %v1658 = vpack.c.b16 %v1334, %v1328
    %v1659 = vpack.c.b16 %v1335, %v1329
    %v1660 = vpack.c.b16 %v1336, %v1330
    %v1661 = vpack.c.b16 %v1337, %v1331
    %v1662 = vpack.c.b16 %v1338, %v1332
    %v1663 = vpack.c.b16 %v1345, %v1339
    %v1664 = vpack.c.b16 %v1346, %v1340
    %v1665 = vpack.c.b16 %v1347, %v1341
    %v1666 = vpack.c.b16 %v1348, %v1342
    %v1667 = vpack.c.b16 %v1349, %v1343
    %v1668 = vpack.c.b16 %v1350, %v1344
    %v1669 = vpack.c.b16 %v1357, %v1351
    %v1670 = vpack.c.b16 %v1358, %v1352
    %v1671 = vpack.c.b16 %v1359, %v1353
    %v1672 = vpack.c.b16 %v1360, %v1354
    %v1673 = vpack.c.b16 %v1361, %v1355
    %v1674 = vpack.c.b16 %v1362, %v1356
    %v1675 = vpack.c.b16 %v1369, %v1363
    %v1676 = vpack.c.b16 %v1370, %v1364
    %v1677 = vpack.c.b16 %v1371, %v1365
    %v1678 = vpack.c.b16 %v1372, %v1366
    %v1679 = vpack.c.b16 %v1373, %v1367
    %v1680 = vpack.c.b16 %v1374, %v1368
    %v1681 = vpack.c.b16 %v1381, %v1375
    %v1682 = vpack.c.b16 %v1382, %v1376
    %v1683 = vpack.c.b16 %v1383, %v1377
    %v1684 = vpack.c.b16 %v1384, %v1378
    %v1685 = vpack.c.b16 %v1385, %v1379
    %v1686 = vpack.c.b16 %v1386, %v1380
    %v1687 = vpack.c.b16 %v1393, %v1387
    %v1688 = vpack.c.b16 %v1394, %v1388
    %v1689 = vpack.c.b16 %v1395, %v1389
    %v1690 = vpack.c.b16 %v1396, %v1390
    %v1691 = vpack.c.b16 %v1397, %v1391
    %v1692 = vpack.c.b16 %v1398, %v1392
    %vm1987 = vcmask 130048
    %v1989 = vsel %vm1987, %v190, 0
    %1991 = vmatprep.subr.bf16.mxu0 %v1400
    %1992 = vmatpush1.bf16.msra.mxu0 %v1399
    %1993 = vmatprep.subr.bf16.mxu0 %v1406
    %1994 = vmatpush1.bf16.msra.mxu0 %v1405
    %1995 = vmatprep.subr.bf16.mxu0 %v1412
    %1996 = vmatpush1.bf16.msra.mxu0 %v1411
    %1997 = vmatprep.subr.bf16.mxu0 %v1418
    %1998 = vmatpush1.bf16.msra.mxu0 %v1417
    %1999 = vmatprep.subr.bf16.mxu0 %v1424
    %2000 = vmatpush1.bf16.msra.mxu0 %v1423
    %2001 = vmatprep.subr.bf16.mxu0 %v1430
    %2002 = vmatpush1.bf16.msra.mxu0 %v1429
    %2003 = vmatprep.subr.bf16.mxu0 %v1436
    %2004 = vmatpush1.bf16.msra.mxu0 %v1435
    %2005 = vmatprep.subr.bf16.mxu0 %v1442
    %2006 = vmatpush1.bf16.msra.mxu0 %v1441
    %2007 = vmatprep.subr.bf16.mxu0 %v1448
    %2008 = vmatpush1.bf16.msra.mxu0 %v1447
    %2009 = vmatprep.subr.bf16.mxu0 %v1454
    %2010 = vmatpush1.bf16.msra.mxu0 %v1453
    %2011 = vmatprep.subr.bf16.mxu0 %v1460
    %2012 = vmatpush1.bf16.msra.mxu0 %v1459
    %2013 = vmatprep.subr.bf16.mxu0 %v1466
    %2014 = vmatpush1.bf16.msra.mxu0 %v1465
    %2015 = vmatprep.subr.bf16.mxu0 %v1472
    %2016 = vmatpush1.bf16.msra.mxu0 %v1471
    %2017 = vmatprep.subr.bf16.mxu0 %v1478
    %2018 = vmatpush1.bf16.msra.mxu0 %v1477
    %2019 = vmatprep.subr.bf16.mxu0 %v1484
    %2020 = vmatpush1.bf16.msra.mxu0 %v1483
    %2021 = vmatprep.subr.bf16.mxu0 %v1490
    %2022 = vmatpush1.bf16.msra.mxu0 %v1489
    %2023 = vmatprep.mubr.bf16.mxu0 %v185
    %2024 = vmatmul.mubr.bf16.gmra.mrb[0].mxu0 %v184
    %v2025 = vpop.f32.mrb[0].mxu0
    %v2026 = vadd.f32 %v490, %v2025
    %v2027 = vpop.f32.mrb[0].mxu0
    %v2028 = vadd.f32 %v494, %v2027
    %v2029 = vpop.f32.mrb[0].mxu0
    %v2030 = vpop.f32.mrb[0].mxu0
    %2031 = vdwg.mxu0
    %2032 = vmatprep.subr.bf16.mxu0 %v1496
    %2033 = vmatpush1.bf16.msra.mxu0 %v1495
    %2034 = vmatprep.subr.bf16.mxu0 %v1502
    %2035 = vmatpush1.bf16.msra.mxu0 %v1501
    %2036 = vmatprep.subr.bf16.mxu0 %v1508
    %2037 = vmatpush1.bf16.msra.mxu0 %v1507
    %2038 = vmatprep.subr.bf16.mxu0 %v1514
    %2039 = vmatpush1.bf16.msra.mxu0 %v1513
    %2040 = vmatprep.subr.bf16.mxu0 %v1520
    %2041 = vmatpush1.bf16.msra.mxu0 %v1519
    %2042 = vmatprep.subr.bf16.mxu0 %v1526
    %2043 = vmatpush1.bf16.msra.mxu0 %v1525
    %2044 = vmatprep.subr.bf16.mxu0 %v1532
    %2045 = vmatpush1.bf16.msra.mxu0 %v1531
    %2046 = vmatprep.subr.bf16.mxu0 %v1538
    %2047 = vmatpush1.bf16.msra.mxu0 %v1537
    %2048 = vmatprep.subr.bf16.mxu0 %v1544
    %2049 = vmatpush1.bf16.msra.mxu0 %v1543
    %2050 = vmatprep.subr.bf16.mxu0 %v1550
    %2051 = vmatpush1.bf16.msra.mxu0 %v1549
    %2052 = vmatprep.subr.bf16.mxu0 %v1556
    %2053 = vmatpush1.bf16.msra.mxu0 %v1555
    %2054 = vmatprep.subr.bf16.mxu0 %v1562
    %2055 = vmatpush1.bf16.msra.mxu0 %v1561
    %2056 = vmatprep.subr.bf16.mxu0 %v1568
    %2057 = vmatpush1.bf16.msra.mxu0 %v1567
    %2058 = vmatprep.subr.bf16.mxu0 %v1574
    %2059 = vmatpush1.bf16.msra.mxu0 %v1573
    %2060 = vmatprep.subr.bf16.mxu0 %v1580
    %2061 = vmatpush1.bf16.msra.mxu0 %v1579
    %2062 = vmatprep.subr.bf16.mxu0 %v1586
    %2063 = vmatpush1.bf16.msra.mxu0 %v1585
    %2064 = vmatprep.mubr.bf16.mxu0 %v187
    %2065 = vmatmul.mubr.bf16.gmra.mrb[0].mxu0 %v186
    %v2066 = vpop.f32.mrb[0].mxu0
    %v2067 = vadd.f32 %v2026, %v2066
    %v2068 = vpop.f32.mrb[0].mxu0
    %v2069 = vadd.f32 %v2028, %v2068
    %v2070 = vpop.f32.mrb[0].mxu0
    %v2071 = vpop.f32.mrb[0].mxu0
    %2072 = vdwg.mxu0
    %2073 = vmatprep.subr.bf16.mxu0 %v1592
    %2074 = vmatpush1.bf16.msra.mxu0 %v1591
    %2075 = vmatprep.subr.bf16.mxu0 %v1598
    %2076 = vmatpush1.bf16.msra.mxu0 %v1597
    %2077 = vmatprep.subr.bf16.mxu0 %v1604
    %2078 = vmatpush1.bf16.msra.mxu0 %v1603
    %2079 = vmatprep.subr.bf16.mxu0 %v1610
    %2080 = vmatpush1.bf16.msra.mxu0 %v1609
    %2081 = vmatprep.subr.bf16.mxu0 %v1616
    %2082 = vmatpush1.bf16.msra.mxu0 %v1615
    %2083 = vmatprep.subr.bf16.mxu0 %v1622
    %2084 = vmatpush1.bf16.msra.mxu0 %v1621
    %2085 = vmatprep.subr.bf16.mxu0 %v1628
    %2086 = vmatpush1.bf16.msra.mxu0 %v1627
    %2087 = vmatprep.subr.bf16.mxu0 %v1634
    %2088 = vmatpush1.bf16.msra.mxu0 %v1633
    %2089 = vmatprep.subr.bf16.mxu0 %v1640
    %2090 = vmatpush1.bf16.msra.mxu0 %v1639
    %2091 = vmatprep.subr.bf16.mxu0 %v1646
    %2092 = vmatpush1.bf16.msra.mxu0 %v1645
    %2093 = vmatprep.subr.bf16.mxu0 %v1652
    %2094 = vmatpush1.bf16.msra.mxu0 %v1651
    %2095 = vmatprep.subr.bf16.mxu0 %v1658
    %2096 = vmatpush1.bf16.msra.mxu0 %v1657
    %2097 = vmatprep.subr.bf16.mxu0 %v1664
    %2098 = vmatpush1.bf16.msra.mxu0 %v1663
    %2099 = vmatprep.subr.bf16.mxu0 %v1670
    %2100 = vmatpush1.bf16.msra.mxu0 %v1669
    %2101 = vmatprep.subr.bf16.mxu0 %v1676
    %2102 = vmatpush1.bf16.msra.mxu0 %v1675
    %2103 = vmatprep.subr.bf16.mxu0 %v1682
    %2104 = vmatpush1.bf16.msra.mxu0 %v1681
    %2105 = vmatprep.mubr.bf16.mxu0 %v189
    %2106 = vmatmul.mubr.bf16.gmra.mrb[0].mxu0 %v188
    %v2107 = vpop.f32.mrb[0].mxu0
    %v2108 = vadd.f32 %v2067, %v2107
    %v2109 = vpop.f32.mrb[0].mxu0
    %v2110 = vadd.f32 %v2069, %v2109
    %v2111 = vpop.f32.mrb[0].mxu0
    %v2112 = vpop.f32.mrb[0].mxu0
    %2113 = vdwg.mxu0
    %2114 = vmatprep.subr.bf16.mxu0 %v1688
    %2115 = vmatpush1.bf16.msra.mxu0 %v1687
    %2116 = vmatprep.subr.bf16.mxu0 0
    %2117 = vmatpush1.bf16.msra.mxu0 0
    %2118 = vmatprep.subr.bf16.mxu0 0
    %2119 = vmatpush1.bf16.msra.mxu0 0
    %2120 = vmatprep.subr.bf16.mxu0 0
    %2121 = vmatpush1.bf16.msra.mxu0 0
    %2122 = vmatprep.subr.bf16.mxu0 0
    %2123 = vmatpush1.bf16.msra.mxu0 0
    %2124 = vmatprep.subr.bf16.mxu0 0
    %2125 = vmatpush1.bf16.msra.mxu0 0
    %2126 = vmatprep.subr.bf16.mxu0 0
    %2127 = vmatpush1.bf16.msra.mxu0 0
    %2128 = vmatprep.subr.bf16.mxu0 0
    %2129 = vmatpush1.bf16.msra.mxu0 0
    %2130 = vmatprep.subr.bf16.mxu0 0
    %2131 = vmatpush1.bf16.msra.mxu0 0
    %2132 = vmatprep.subr.bf16.mxu0 0
    %2133 = vmatpush1.bf16.msra.mxu0 0
    %2134 = vmatprep.subr.bf16.mxu0 0
    %2135 = vmatpush1.bf16.msra.mxu0 0
    %2136 = vmatprep.subr.bf16.mxu0 0
    %2137 = vmatpush1.bf16.msra.mxu0 0
    %2138 = vmatprep.subr.bf16.mxu0 0
    %2139 = vmatpush1.bf16.msra.mxu0 0
    %2140 = vmatprep.subr.bf16.mxu0 0
    %2141 = vmatpush1.bf16.msra.mxu0 0
    %2142 = vmatprep.subr.bf16.mxu0 0
    %2143 = vmatpush1.bf16.msra.mxu0 0
    %2144 = vmatprep.subr.bf16.mxu0 0
    %2145 = vmatpush1.bf16.msra.mxu0 0
    %2146 = vmatprep.mubr.bf16.mxu0 0
    %2147 = vmatmul.mubr.bf16.gmra.mrb[0].mxu0 %v1989
    %v2148 = vpop.f32.mrb[0].mxu0
    %v2149 = vadd.f32 %v2108, %v2148
    %v2150 = vpop.f32.mrb[0].mxu0
    %v2151 = vadd.f32 %v2110, %v2150
    %v2152 = vpop.f32.mrb[0].mxu0
    %v2153 = vpop.f32.mrb[0].mxu0
    %2154 = vdwg.mxu0
    %2155 = vmatprep.subr.bf16.mxu0 %v1402
    %2156 = vmatpush1.bf16.msra.mxu0 %v1401
    %2157 = vmatprep.subr.bf16.mxu0 %v1408
    %2158 = vmatpush1.bf16.msra.mxu0 %v1407
    %2159 = vmatprep.subr.bf16.mxu0 %v1414
    %2160 = vmatpush1.bf16.msra.mxu0 %v1413
    %2161 = vmatprep.subr.bf16.mxu0 %v1420
    %2162 = vmatpush1.bf16.msra.mxu0 %v1419
    %2163 = vmatprep.subr.bf16.mxu0 %v1426
    %2164 = vmatpush1.bf16.msra.mxu0 %v1425
    %2165 = vmatprep.subr.bf16.mxu0 %v1432
    %2166 = vmatpush1.bf16.msra.mxu0 %v1431
    %2167 = vmatprep.subr.bf16.mxu0 %v1438
    %2168 = vmatpush1.bf16.msra.mxu0 %v1437
    %2169 = vmatprep.subr.bf16.mxu0 %v1444
    %2170 = vmatpush1.bf16.msra.mxu0 %v1443
    %2171 = vmatprep.subr.bf16.mxu0 %v1450
    %2172 = vmatpush1.bf16.msra.mxu0 %v1449
    %2173 = vmatprep.subr.bf16.mxu0 %v1456
    %2174 = vmatpush1.bf16.msra.mxu0 %v1455
    %2175 = vmatprep.subr.bf16.mxu0 %v1462
    %2176 = vmatpush1.bf16.msra.mxu0 %v1461
    %2177 = vmatprep.subr.bf16.mxu0 %v1468
    %2178 = vmatpush1.bf16.msra.mxu0 %v1467
    %2179 = vmatprep.subr.bf16.mxu0 %v1474
    %2180 = vmatpush1.bf16.msra.mxu0 %v1473
    %2181 = vmatprep.subr.bf16.mxu0 %v1480
    %2182 = vmatpush1.bf16.msra.mxu0 %v1479
    %2183 = vmatprep.subr.bf16.mxu0 %v1486
    %2184 = vmatpush1.bf16.msra.mxu0 %v1485
    %2185 = vmatprep.subr.bf16.mxu0 %v1492
    %2186 = vmatpush1.bf16.msra.mxu0 %v1491
    %2187 = vmatprep.mubr.bf16.mxu0 %v185
    %2188 = vmatmul.mubr.bf16.gmra.mrb[0].mxu0 %v184
    %v2189 = vpop.f32.mrb[0].mxu0
    %v2190 = vadd.f32 %v498, %v2189
    %v2191 = vpop.f32.mrb[0].mxu0
    %v2192 = vadd.f32 %v502, %v2191
    %v2193 = vpop.f32.mrb[0].mxu0
    %v2194 = vpop.f32.mrb[0].mxu0
    %2195 = vdwg.mxu0
    %2196 = vmatprep.subr.bf16.mxu0 %v1498
    %2197 = vmatpush1.bf16.msra.mxu0 %v1497
    %2198 = vmatprep.subr.bf16.mxu0 %v1504
    %2199 = vmatpush1.bf16.msra.mxu0 %v1503
    %2200 = vmatprep.subr.bf16.mxu0 %v1510
    %2201 = vmatpush1.bf16.msra.mxu0 %v1509
    %2202 = vmatprep.subr.bf16.mxu0 %v1516
    %2203 = vmatpush1.bf16.msra.mxu0 %v1515
    %2204 = vmatprep.subr.bf16.mxu0 %v1522
    %2205 = vmatpush1.bf16.msra.mxu0 %v1521
    %2206 = vmatprep.subr.bf16.mxu0 %v1528
    %2207 = vmatpush1.bf16.msra.mxu0 %v1527
    %2208 = vmatprep.subr.bf16.mxu0 %v1534
    %2209 = vmatpush1.bf16.msra.mxu0 %v1533
    %2210 = vmatprep.subr.bf16.mxu0 %v1540
    %2211 = vmatpush1.bf16.msra.mxu0 %v1539
    %2212 = vmatprep.subr.bf16.mxu0 %v1546
    %2213 = vmatpush1.bf16.msra.mxu0 %v1545
    %2214 = vmatprep.subr.bf16.mxu0 %v1552
    %2215 = vmatpush1.bf16.msra.mxu0 %v1551
    %2216 = vmatprep.subr.bf16.mxu0 %v1558
    %2217 = vmatpush1.bf16.msra.mxu0 %v1557
    %2218 = vmatprep.subr.bf16.mxu0 %v1564
    %2219 = vmatpush1.bf16.msra.mxu0 %v1563
    %2220 = vmatprep.subr.bf16.mxu0 %v1570
    %2221 = vmatpush1.bf16.msra.mxu0 %v1569
    %2222 = vmatprep.subr.bf16.mxu0 %v1576
    %2223 = vmatpush1.bf16.msra.mxu0 %v1575
    %2224 = vmatprep.subr.bf16.mxu0 %v1582
    %2225 = vmatpush1.bf16.msra.mxu0 %v1581
    %2226 = vmatprep.subr.bf16.mxu0 %v1588
    %2227 = vmatpush1.bf16.msra.mxu0 %v1587
    %2228 = vmatprep.mubr.bf16.mxu0 %v187
    %2229 = vmatmul.mubr.bf16.gmra.mrb[0].mxu0 %v186
    %v2230 = vpop.f32.mrb[0].mxu0
    %v2231 = vadd.f32 %v2190, %v2230
    %v2232 = vpop.f32.mrb[0].mxu0
    %v2233 = vadd.f32 %v2192, %v2232
    %v2234 = vpop.f32.mrb[0].mxu0
    %v2235 = vpop.f32.mrb[0].mxu0
    %2236 = vdwg.mxu0
    %2237 = vmatprep.subr.bf16.mxu0 %v1594
    %2238 = vmatpush1.bf16.msra.mxu0 %v1593
    %2239 = vmatprep.subr.bf16.mxu0 %v1600
    %2240 = vmatpush1.bf16.msra.mxu0 %v1599
    %2241 = vmatprep.subr.bf16.mxu0 %v1606
    %2242 = vmatpush1.bf16.msra.mxu0 %v1605
    %2243 = vmatprep.subr.bf16.mxu0 %v1612
    %2244 = vmatpush1.bf16.msra.mxu0 %v1611
    %2245 = vmatprep.subr.bf16.mxu0 %v1618
    %2246 = vmatpush1.bf16.msra.mxu0 %v1617
    %2247 = vmatprep.subr.bf16.mxu0 %v1624
    %2248 = vmatpush1.bf16.msra.mxu0 %v1623
    %2249 = vmatprep.subr.bf16.mxu0 %v1630
    %2250 = vmatpush1.bf16.msra.mxu0 %v1629
    %2251 = vmatprep.subr.bf16.mxu0 %v1636
    %2252 = vmatpush1.bf16.msra.mxu0 %v1635
    %2253 = vmatprep.subr.bf16.mxu0 %v1642
    %2254 = vmatpush1.bf16.msra.mxu0 %v1641
    %2255 = vmatprep.subr.bf16.mxu0 %v1648
    %2256 = vmatpush1.bf16.msra.mxu0 %v1647
    %2257 = vmatprep.subr.bf16.mxu0 %v1654
    %2258 = vmatpush1.bf16.msra.mxu0 %v1653
    %2259 = vmatprep.subr.bf16.mxu0 %v1660
    %2260 = vmatpush1.bf16.msra.mxu0 %v1659
    %2261 = vmatprep.subr.bf16.mxu0 %v1666
    %2262 = vmatpush1.bf16.msra.mxu0 %v1665
    %2263 = vmatprep.subr.bf16.mxu0 %v1672
    %2264 = vmatpush1.bf16.msra.mxu0 %v1671
    %2265 = vmatprep.subr.bf16.mxu0 %v1678
    %2266 = vmatpush1.bf16.msra.mxu0 %v1677
    %2267 = vmatprep.subr.bf16.mxu0 %v1684
    %2268 = vmatpush1.bf16.msra.mxu0 %v1683
    %2269 = vmatprep.mubr.bf16.mxu0 %v189
    %2270 = vmatmul.mubr.bf16.gmra.mrb[0].mxu0 %v188
    %v2271 = vpop.f32.mrb[0].mxu0
    %v2272 = vadd.f32 %v2231, %v2271
    %v2273 = vpop.f32.mrb[0].mxu0
    %v2274 = vadd.f32 %v2233, %v2273
    %v2275 = vpop.f32.mrb[0].mxu0
    %v2276 = vpop.f32.mrb[0].mxu0
    %2277 = vdwg.mxu0
    %2278 = vmatprep.subr.bf16.mxu0 %v1690
    %2279 = vmatpush1.bf16.msra.mxu0 %v1689
    %2280 = vmatprep.subr.bf16.mxu0 0
    %2281 = vmatpush1.bf16.msra.mxu0 0
    %2282 = vmatprep.subr.bf16.mxu0 0
    %2283 = vmatpush1.bf16.msra.mxu0 0
    %2284 = vmatprep.subr.bf16.mxu0 0
    %2285 = vmatpush1.bf16.msra.mxu0 0
    %2286 = vmatprep.subr.bf16.mxu0 0
    %2287 = vmatpush1.bf16.msra.mxu0 0
    %2288 = vmatprep.subr.bf16.mxu0 0
    %2289 = vmatpush1.bf16.msra.mxu0 0
    %2290 = vmatprep.subr.bf16.mxu0 0
    %2291 = vmatpush1.bf16.msra.mxu0 0
    %2292 = vmatprep.subr.bf16.mxu0 0
    %2293 = vmatpush1.bf16.msra.mxu0 0
    %2294 = vmatprep.subr.bf16.mxu0 0
    %2295 = vmatpush1.bf16.msra.mxu0 0
    %2296 = vmatprep.subr.bf16.mxu0 0
    %2297 = vmatpush1.bf16.msra.mxu0 0
    %2298 = vmatprep.subr.bf16.mxu0 0
    %2299 = vmatpush1.bf16.msra.mxu0 0
    %2300 = vmatprep.subr.bf16.mxu0 0
    %2301 = vmatpush1.bf16.msra.mxu0 0
    %2302 = vmatprep.subr.bf16.mxu0 0
    %2303 = vmatpush1.bf16.msra.mxu0 0
    %2304 = vmatprep.subr.bf16.mxu0 0
    %2305 = vmatpush1.bf16.msra.mxu0 0
    %2306 = vmatprep.subr.bf16.mxu0 0
    %2307 = vmatpush1.bf16.msra.mxu0 0
    %2308 = vmatprep.subr.bf16.mxu0 0
    %2309 = vmatpush1.bf16.msra.mxu0 0
    %2310 = vmatprep.mubr.bf16.mxu0 0
    %2311 = vmatmul.mubr.bf16.gmra.mrb[0].mxu0 %v1989
    %v2312 = vpop.f32.mrb[0].mxu0
    %v2313 = vadd.f32 %v2272, %v2312
    %v2314 = vpop.f32.mrb[0].mxu0
    %v2315 = vadd.f32 %v2274, %v2314
    %v2316 = vpop.f32.mrb[0].mxu0
    %v2317 = vpop.f32.mrb[0].mxu0
    %2318 = vdwg.mxu0
    %2319 = vmatprep.subr.bf16.mxu0 %v1404
    %2320 = vmatpush1.bf16.msra.mxu0 %v1403
    %2321 = vmatprep.subr.bf16.mxu0 %v1410
    %2322 = vmatpush1.bf16.msra.mxu0 %v1409
    %2323 = vmatprep.subr.bf16.mxu0 %v1416
    %2324 = vmatpush1.bf16.msra.mxu0 %v1415
    %2325 = vmatprep.subr.bf16.mxu0 %v1422
    %2326 = vmatpush1.bf16.msra.mxu0 %v1421
    %2327 = vmatprep.subr.bf16.mxu0 %v1428
    %2328 = vmatpush1.bf16.msra.mxu0 %v1427
    %2329 = vmatprep.subr.bf16.mxu0 %v1434
    %2330 = vmatpush1.bf16.msra.mxu0 %v1433
    %2331 = vmatprep.subr.bf16.mxu0 %v1440
    %2332 = vmatpush1.bf16.msra.mxu0 %v1439
    %2333 = vmatprep.subr.bf16.mxu0 %v1446
    %2334 = vmatpush1.bf16.msra.mxu0 %v1445
    %2335 = vmatprep.subr.bf16.mxu0 %v1452
    %2336 = vmatpush1.bf16.msra.mxu0 %v1451
    %2337 = vmatprep.subr.bf16.mxu0 %v1458
    %2338 = vmatpush1.bf16.msra.mxu0 %v1457
    %2339 = vmatprep.subr.bf16.mxu0 %v1464
    %2340 = vmatpush1.bf16.msra.mxu0 %v1463
    %2341 = vmatprep.subr.bf16.mxu0 %v1470
    %2342 = vmatpush1.bf16.msra.mxu0 %v1469
    %2343 = vmatprep.subr.bf16.mxu0 %v1476
    %2344 = vmatpush1.bf16.msra.mxu0 %v1475
    %2345 = vmatprep.subr.bf16.mxu0 %v1482
    %2346 = vmatpush1.bf16.msra.mxu0 %v1481
    %2347 = vmatprep.subr.bf16.mxu0 %v1488
    %2348 = vmatpush1.bf16.msra.mxu0 %v1487
    %2349 = vmatprep.subr.bf16.mxu0 %v1494
    %2350 = vmatpush1.bf16.msra.mxu0 %v1493
    %2351 = vmatprep.mubr.bf16.mxu0 %v185
    %2352 = vmatmul.mubr.bf16.gmra.mrb[0].mxu0 %v184
    %v2353 = vpop.f32.mrb[0].mxu0
    %v2354 = vadd.f32 %v506, %v2353
    %v2355 = vpop.f32.mrb[0].mxu0
    %v2356 = vadd.f32 %v510, %v2355
    %v2357 = vpop.f32.mrb[0].mxu0
    %v2358 = vpop.f32.mrb[0].mxu0
    %2359 = vdwg.mxu0
    %2360 = vmatprep.subr.bf16.mxu0 %v1500
    %2361 = vmatpush1.bf16.msra.mxu0 %v1499
    %2362 = vmatprep.subr.bf16.mxu0 %v1506
    %2363 = vmatpush1.bf16.msra.mxu0 %v1505
    %2364 = vmatprep.subr.bf16.mxu0 %v1512
    %2365 = vmatpush1.bf16.msra.mxu0 %v1511
    %2366 = vmatprep.subr.bf16.mxu0 %v1518
    %2367 = vmatpush1.bf16.msra.mxu0 %v1517
    %2368 = vmatprep.subr.bf16.mxu0 %v1524
    %2369 = vmatpush1.bf16.msra.mxu0 %v1523
    %2370 = vmatprep.subr.bf16.mxu0 %v1530
    %2371 = vmatpush1.bf16.msra.mxu0 %v1529
    %2372 = vmatprep.subr.bf16.mxu0 %v1536
    %2373 = vmatpush1.bf16.msra.mxu0 %v1535
    %2374 = vmatprep.subr.bf16.mxu0 %v1542
    %2375 = vmatpush1.bf16.msra.mxu0 %v1541
    %2376 = vmatprep.subr.bf16.mxu0 %v1548
    %2377 = vmatpush1.bf16.msra.mxu0 %v1547
    %2378 = vmatprep.subr.bf16.mxu0 %v1554
    %2379 = vmatpush1.bf16.msra.mxu0 %v1553
    %2380 = vmatprep.subr.bf16.mxu0 %v1560
    %2381 = vmatpush1.bf16.msra.mxu0 %v1559
    %2382 = vmatprep.subr.bf16.mxu0 %v1566
    %2383 = vmatpush1.bf16.msra.mxu0 %v1565
    %2384 = vmatprep.subr.bf16.mxu0 %v1572
    %2385 = vmatpush1.bf16.msra.mxu0 %v1571
    %2386 = vmatprep.subr.bf16.mxu0 %v1578
    %2387 = vmatpush1.bf16.msra.mxu0 %v1577
    %2388 = vmatprep.subr.bf16.mxu0 %v1584
    %2389 = vmatpush1.bf16.msra.mxu0 %v1583
    %2390 = vmatprep.subr.bf16.mxu0 %v1590
    %2391 = vmatpush1.bf16.msra.mxu0 %v1589
    %2392 = vmatprep.mubr.bf16.mxu0 %v187
    %2393 = vmatmul.mubr.bf16.gmra.mrb[0].mxu0 %v186
    %v2394 = vpop.f32.mrb[0].mxu0
    %v2395 = vadd.f32 %v2354, %v2394
    %v2396 = vpop.f32.mrb[0].mxu0
    %v2397 = vadd.f32 %v2356, %v2396
    %v2398 = vpop.f32.mrb[0].mxu0
    %v2399 = vpop.f32.mrb[0].mxu0
    %2400 = vdwg.mxu0
    %2401 = vmatprep.subr.bf16.mxu0 %v1596
    %2402 = vmatpush1.bf16.msra.mxu0 %v1595
    %2403 = vmatprep.subr.bf16.mxu0 %v1602
    %2404 = vmatpush1.bf16.msra.mxu0 %v1601
    %2405 = vmatprep.subr.bf16.mxu0 %v1608
    %2406 = vmatpush1.bf16.msra.mxu0 %v1607
    %2407 = vmatprep.subr.bf16.mxu0 %v1614
    %2408 = vmatpush1.bf16.msra.mxu0 %v1613
    %2409 = vmatprep.subr.bf16.mxu0 %v1620
    %2410 = vmatpush1.bf16.msra.mxu0 %v1619
    %2411 = vmatprep.subr.bf16.mxu0 %v1626
    %2412 = vmatpush1.bf16.msra.mxu0 %v1625
    %2413 = vmatprep.subr.bf16.mxu0 %v1632
    %2414 = vmatpush1.bf16.msra.mxu0 %v1631
    %2415 = vmatprep.subr.bf16.mxu0 %v1638
    %2416 = vmatpush1.bf16.msra.mxu0 %v1637
    %2417 = vmatprep.subr.bf16.mxu0 %v1644
    %2418 = vmatpush1.bf16.msra.mxu0 %v1643
    %2419 = vmatprep.subr.bf16.mxu0 %v1650
    %2420 = vmatpush1.bf16.msra.mxu0 %v1649
    %2421 = vmatprep.subr.bf16.mxu0 %v1656
    %2422 = vmatpush1.bf16.msra.mxu0 %v1655
    %2423 = vmatprep.subr.bf16.mxu0 %v1662
    %2424 = vmatpush1.bf16.msra.mxu0 %v1661
    %2425 = vmatprep.subr.bf16.mxu0 %v1668
    %2426 = vmatpush1.bf16.msra.mxu0 %v1667
    %2427 = vmatprep.subr.bf16.mxu0 %v1674
    %2428 = vmatpush1.bf16.msra.mxu0 %v1673
    %2429 = vmatprep.subr.bf16.mxu0 %v1680
    %2430 = vmatpush1.bf16.msra.mxu0 %v1679
    %2431 = vmatprep.subr.bf16.mxu0 %v1686
    %2432 = vmatpush1.bf16.msra.mxu0 %v1685
    %2433 = vmatprep.mubr.bf16.mxu0 %v189
    %2434 = vmatmul.mubr.bf16.gmra.mrb[0].mxu0 %v188
    %v2435 = vpop.f32.mrb[0].mxu0
    %v2436 = vadd.f32 %v2395, %v2435
    %v2437 = vpop.f32.mrb[0].mxu0
    %v2438 = vadd.f32 %v2397, %v2437
    %v2439 = vpop.f32.mrb[0].mxu0
    %v2440 = vpop.f32.mrb[0].mxu0
    %2441 = vdwg.mxu0
    %2442 = vmatprep.subr.bf16.mxu0 %v1692
    %2443 = vmatpush1.bf16.msra.mxu0 %v1691
    %2444 = vmatprep.subr.bf16.mxu0 0
    %2445 = vmatpush1.bf16.msra.mxu0 0
    %2446 = vmatprep.subr.bf16.mxu0 0
    %2447 = vmatpush1.bf16.msra.mxu0 0
    %2448 = vmatprep.subr.bf16.mxu0 0
    %2449 = vmatpush1.bf16.msra.mxu0 0
    %2450 = vmatprep.subr.bf16.mxu0 0
    %2451 = vmatpush1.bf16.msra.mxu0 0
    %2452 = vmatprep.subr.bf16.mxu0 0
    %2453 = vmatpush1.bf16.msra.mxu0 0
    %2454 = vmatprep.subr.bf16.mxu0 0
    %2455 = vmatpush1.bf16.msra.mxu0 0
    %2456 = vmatprep.subr.bf16.mxu0 0
    %2457 = vmatpush1.bf16.msra.mxu0 0
    %2458 = vmatprep.subr.bf16.mxu0 0
    %2459 = vmatpush1.bf16.msra.mxu0 0
    %2460 = vmatprep.subr.bf16.mxu0 0
    %2461 = vmatpush1.bf16.msra.mxu0 0
    %2462 = vmatprep.subr.bf16.mxu0 0
    %2463 = vmatpush1.bf16.msra.mxu0 0
    %2464 = vmatprep.subr.bf16.mxu0 0
    %2465 = vmatpush1.bf16.msra.mxu0 0
    %2466 = vmatprep.subr.bf16.mxu0 0
    %2467 = vmatpush1.bf16.msra.mxu0 0
    %2468 = vmatprep.subr.bf16.mxu0 0
    %2469 = vmatpush1.bf16.msra.mxu0 0
    %2470 = vmatprep.subr.bf16.mxu0 0
    %2471 = vmatpush1.bf16.msra.mxu0 0
    %2472 = vmatprep.subr.bf16.mxu0 0
    %2473 = vmatpush1.bf16.msra.mxu0 0
    %2474 = vmatprep.mubr.bf16.mxu0 0
    %2475 = vmatmul.mubr.bf16.gmra.mrb[0].mxu0 %v1989
    %v2476 = vpop.f32.mrb[0].mxu0
    %v2477 = vadd.f32 %v2436, %v2476
    %v2478 = vpop.f32.mrb[0].mxu0
    %v2479 = vadd.f32 %v2438, %v2478
    %v2480 = vpop.f32.mrb[0].mxu0
    %v2481 = vpop.f32.mrb[0].mxu0
    %2482 = vdwg.mxu0
    %v2483 = vmax.f32 %v2149, 0.0
    %v2484 = vmax.f32 %v2151, 0.0
    %v2485 = vmax.f32 %v2313, 0.0
    %v2486 = vmax.f32 %v2315, 0.0
    %v2487 = vmax.f32 %v2477, 0.0
    %v2488 = vmax.f32 %v2479, 0.0
    %v2489 = vpack.c.bf16 %v2483, %v2483
    %v2490 = vpack.c.bf16 %v2484, %v2484
    %v2491 = vpack.c.bf16 %v2485, %v2485
    %v2492 = vpack.c.bf16 %v2486, %v2486
    %v2493 = vpack.c.bf16 %v2487, %v2487
    %v2494 = vpack.c.bf16 %v2488, %v2488
    %v2495 = vld [vmem:[#allocation8] sm:$0xff]
    %v2496 = vld [vmem:[#allocation8 + $0x8] sm:$0xff]
    %v2497 = vld [vmem:[#allocation8 + $0x10] sm:$0xff]
    %v2498 = vld [vmem:[#allocation8 + $0x18] sm:$0xff]
    %v2499 = vld [vmem:[#allocation8 + $0x20] sm:$0xff]
    %v2500 = vld [vmem:[#allocation8 + $0x28] sm:$0xff]
    %v2501 = vld [vmem:[#allocation8 + $0x30] sm:$0xff]
    %v2502 = vld [vmem:[#allocation8 + $0x38] sm:$0xff]
    %v2503 = vld [vmem:[#allocation8 + $0x40] sm:$0xff]
    %v2504 = vld [vmem:[#allocation8 + $0x48] sm:$0xff]
    %v2505 = vld [vmem:[#allocation8 + $0x50] sm:$0xff]
    %v2506 = vld [vmem:[#allocation8 + $0x58] sm:$0xff]
    %v2507 = vld [vmem:[#allocation8 + $0x60] sm:$0xff]
    %v2508 = vld [vmem:[#allocation8 + $0x68] sm:$0xff]
    %v2509 = vld [vmem:[#allocation8 + $0x70] sm:$0xff]
    %v2510 = vld [vmem:[#allocation8 + $0x78] sm:$0xff]
    %v2511 = vld [vmem:[#allocation8 + $0x80] sm:$0xff]
    %v2512 = vld [vmem:[#allocation8 + $0x88] sm:$0xff]
    %v2513 = vld [vmem:[#allocation8 + $0x90] sm:$0xff]
    %v2514 = vld [vmem:[#allocation8 + $0x98] sm:$0xff]
    %v2515 = vld [vmem:[#allocation8 + $0xa0] sm:$0xff]
    %v2516 = vld [vmem:[#allocation8 + $0xa8] sm:$0xff]
    %v2517 = vld [vmem:[#allocation8 + $0xb0] sm:$0xff]
    %v2518 = vld [vmem:[#allocation8 + $0xb8] sm:$0xff]
    %v2519 = vld [vmem:[#allocation8 + $0xc0] sm:$0xff]
    %v2520 = vld [vmem:[#allocation8 + $0xc8] sm:$0xff]
    %v2521 = vld [vmem:[#allocation8 + $0xd0] sm:$0xff]
    %v2522 = vld [vmem:[#allocation8 + $0xd8] sm:$0xff]
    %v2523 = vld [vmem:[#allocation8 + $0xe0] sm:$0xff]
    %v2524 = vld [vmem:[#allocation8 + $0xe8] sm:$0xff]
    %v2525 = vld [vmem:[#allocation8 + $0xf0] sm:$0xff]
    %v2526 = vld [vmem:[#allocation8 + $0xf8] sm:$0xff]
    %v2527 = vld [vmem:[#allocation8 + $0x100] sm:$0xff]
    %v2528 = vld [vmem:[#allocation8 + $0x108] sm:$0xff]
    %v2529 = vld [vmem:[#allocation8 + $0x110] sm:$0xff]
    %v2530 = vld [vmem:[#allocation8 + $0x118] sm:$0xff]
    %v2531 = vld [vmem:[#allocation8 + $0x120] sm:$0xff]
    %v2532 = vld [vmem:[#allocation8 + $0x128] sm:$0xff]
    %v2533 = vld [vmem:[#allocation8 + $0x130] sm:$0xff]
    %v2534 = vld [vmem:[#allocation8 + $0x138] sm:$0xff]
    %v2535 = vld [vmem:[#allocation8 + $0x140] sm:$0xff]
    %v2536 = vld [vmem:[#allocation8 + $0x148] sm:$0xff]
    %v2537 = vld [vmem:[#allocation8 + $0x150] sm:$0xff]
    %v2538 = vld [vmem:[#allocation8 + $0x158] sm:$0xff]
    %v2539 = vld [vmem:[#allocation8 + $0x160] sm:$0xff]
    %v2540 = vld [vmem:[#allocation8 + $0x168] sm:$0xff]
    %v2541 = vld [vmem:[#allocation8 + $0x170] sm:$0xff]
    %v2542 = vld [vmem:[#allocation8 + $0x178] sm:$0xff]
    %v2543 = vld [vmem:[#allocation8 + $0x180] sm:$0xff]
    %v2544 = vld [vmem:[#allocation8 + $0x188] sm:$0xff]
    %v2545 = vld [vmem:[#allocation8 + $0x190] sm:$0xff]
    %v2546 = vld [vmem:[#allocation8 + $0x198] sm:$0xff]
    %v2547 = vld [vmem:[#allocation8 + $0x1a0] sm:$0xff]
    %v2548 = vld [vmem:[#allocation8 + $0x1a8] sm:$0xff]
    %v2549 = vld [vmem:[#allocation8 + $0x1b0] sm:$0xff]
    %v2550 = vld [vmem:[#allocation8 + $0x1b8] sm:$0xff]
    %v2551 = vld [vmem:[#allocation8 + $0x1c0] sm:$0xff]
    %v2552 = vld [vmem:[#allocation8 + $0x1c8] sm:$0xff]
    %v2553 = vld [vmem:[#allocation8 + $0x1d0] sm:$0xff]
    %v2554 = vld [vmem:[#allocation8 + $0x1d8] sm:$0xff]
    %v2555 = vld [vmem:[#allocation8 + $0x1e0] sm:$0xff]
    %v2556 = vld [vmem:[#allocation8 + $0x1e8] sm:$0xff]
    %v2557 = vld [vmem:[#allocation8 + $0x1f0] sm:$0xff]
    %v2558 = vld [vmem:[#allocation8 + $0x1f8] sm:$0xff]
    %v2559 = vld [vmem:[#allocation8 + $0x200] sm:$0xff]
    %v2560 = vld [vmem:[#allocation8 + $0x208] sm:$0xff]
    %v2561 = vld [vmem:[#allocation8 + $0x210] sm:$0xff]
    %v2562 = vld [vmem:[#allocation8 + $0x218] sm:$0xff]
    %v2563 = vld [vmem:[#allocation8 + $0x220] sm:$0xff]
    %v2564 = vld [vmem:[#allocation8 + $0x228] sm:$0xff]
    %v2565 = vld [vmem:[#allocation8 + $0x230] sm:$0xff]
    %v2566 = vld [vmem:[#allocation8 + $0x238] sm:$0xff]
    %v2567 = vld [vmem:[#allocation8 + $0x240] sm:$0xff]
    %v2568 = vld [vmem:[#allocation8 + $0x248] sm:$0xff]
    %v2569 = vld [vmem:[#allocation8 + $0x250] sm:$0xff]
    %v2570 = vld [vmem:[#allocation8 + $0x258] sm:$0xff]
    %v2571 = vld [vmem:[#allocation8 + $0x260] sm:$0xff]
    %v2572 = vld [vmem:[#allocation8 + $0x268] sm:$0xff]
    %v2573 = vld [vmem:[#allocation8 + $0x270] sm:$0xff]
    %v2574 = vld [vmem:[#allocation8 + $0x278] sm:$0xff]
    %v2575 = vld [vmem:[#allocation8 + $0x280] sm:$0xff]
    %v2576 = vld [vmem:[#allocation8 + $0x288] sm:$0xff]
    %v2577 = vld [vmem:[#allocation8 + $0x290] sm:$0xff]
    %v2578 = vld [vmem:[#allocation8 + $0x298] sm:$0xff]
    %v2579 = vld [vmem:[#allocation8 + $0x2a0] sm:$0xff]
    %v2580 = vld [vmem:[#allocation8 + $0x2a8] sm:$0xff]
    %v2581 = vld [vmem:[#allocation8 + $0x2b0] sm:$0xff]
    %v2582 = vld [vmem:[#allocation8 + $0x2b8] sm:$0xff]
    %v2583 = vld [vmem:[#allocation8 + $0x2c0] sm:$0xff]
    %v2584 = vld [vmem:[#allocation8 + $0x2c8] sm:$0xff]
    %v2585 = vld [vmem:[#allocation8 + $0x2d0] sm:$0xff]
    %v2586 = vld [vmem:[#allocation8 + $0x2d8] sm:$0xff]
    %v2587 = vld [vmem:[#allocation8 + $0x2e0] sm:$0xff]
    %v2588 = vld [vmem:[#allocation8 + $0x2e8] sm:$0xff]
    %v2589 = vld [vmem:[#allocation8 + $0x2f0] sm:$0xff]
    %v2590 = vld [vmem:[#allocation8 + $0x2f8] sm:$0xff]
    %v2591 = vld [vmem:[#allocation8 + $0x300] sm:$0xff]
    %v2592 = vld [vmem:[#allocation8 + $0x308] sm:$0xff]
    %v2593 = vld [vmem:[#allocation8 + $0x310] sm:$0xff]
    %v2594 = vld [vmem:[#allocation8 + $0x318] sm:$0xff]
    %v2595 = vld [vmem:[#allocation8 + $0x320] sm:$0xff]
    %v2596 = vld [vmem:[#allocation8 + $0x328] sm:$0xff]
    %v2597 = vld [vmem:[#allocation8 + $0x330] sm:$0xff]
    %v2598 = vld [vmem:[#allocation8 + $0x338] sm:$0xff]
    %v2599 = vld [vmem:[#allocation8 + $0x340] sm:$0xff]
    %v2600 = vld [vmem:[#allocation8 + $0x348] sm:$0xff]
    %v2601 = vld [vmem:[#allocation8 + $0x350] sm:$0xff]
    %v2602 = vld [vmem:[#allocation8 + $0x358] sm:$0xff]
    %v2603 = vld [vmem:[#allocation8 + $0x360] sm:$0xff]
    %v2604 = vld [vmem:[#allocation8 + $0x368] sm:$0xff]
    %v2605 = vld [vmem:[#allocation8 + $0x370] sm:$0xff]
    %v2606 = vld [vmem:[#allocation8 + $0x378] sm:$0xff]
    %v2607 = vld [vmem:[#allocation8 + $0x380] sm:$0xff]
    %v2608 = vld [vmem:[#allocation8 + $0x388] sm:$0xff]
    %v2609 = vld [vmem:[#allocation8 + $0x390] sm:$0xff]
    %v2610 = vld [vmem:[#allocation8 + $0x398] sm:$0xff]
    %v2611 = vld [vmem:[#allocation8 + $0x3a0] sm:$0xff]
    %v2612 = vld [vmem:[#allocation8 + $0x3a8] sm:$0xff]
    %v2613 = vld [vmem:[#allocation8 + $0x3b0] sm:$0xff]
    %v2614 = vld [vmem:[#allocation8 + $0x3b8] sm:$0xff]
    %v2615 = vld [vmem:[#allocation8 + $0x3c0] sm:$0xff]
    %v2616 = vld [vmem:[#allocation8 + $0x3c8] sm:$0xff]
    %v2617 = vld [vmem:[#allocation8 + $0x3d0] sm:$0xff]
    %v2618 = vld [vmem:[#allocation8 + $0x3d8] sm:$0xff]
    %v2619 = vld [vmem:[#allocation8 + $0x3e0] sm:$0xff]
    %v2620 = vld [vmem:[#allocation8 + $0x3e8] sm:$0xff]
    %v2621 = vld [vmem:[#allocation8 + $0x3f0] sm:$0xff]
    %v2622 = vld [vmem:[#allocation8 + $0x3f8] sm:$0xff]
    %v2623 = vld [vmem:[#allocation8 + $0x400] sm:$0xff]
    %v2624 = vld [vmem:[#allocation8 + $0x408] sm:$0xff]
    %v2625 = vld [vmem:[#allocation8 + $0x410] sm:$0xff]
    %v2626 = vld [vmem:[#allocation8 + $0x418] sm:$0xff]
    %v2627 = vld [vmem:[#allocation8 + $0x420] sm:$0xff]
    %v2628 = vld [vmem:[#allocation8 + $0x428] sm:$0xff]
    %v2629 = vld [vmem:[#allocation8 + $0x430] sm:$0xff]
    %v2630 = vld [vmem:[#allocation8 + $0x438] sm:$0xff]
    %v2631 = vld [vmem:[#allocation8 + $0x440] sm:$0xff]
    %v2632 = vld [vmem:[#allocation8 + $0x448] sm:$0xff]
    %v2633 = vld [vmem:[#allocation8 + $0x450] sm:$0xff]
    %v2634 = vld [vmem:[#allocation8 + $0x458] sm:$0xff]
    %v2635 = vld [vmem:[#allocation8 + $0x460] sm:$0xff]
    %v2636 = vld [vmem:[#allocation8 + $0x468] sm:$0xff]
    %v2637 = vld [vmem:[#allocation8 + $0x470] sm:$0xff]
    %v2638 = vld [vmem:[#allocation8 + $0x478] sm:$0xff]
    %v2639 = vld [vmem:[#allocation8 + $0x480] sm:$0xff]
    %v2640 = vld [vmem:[#allocation8 + $0x488] sm:$0xff]
    %v2641 = vld [vmem:[#allocation8 + $0x490] sm:$0xff]
    %v2642 = vld [vmem:[#allocation8 + $0x498] sm:$0xff]
    %v2643 = vld [vmem:[#allocation8 + $0x4a0] sm:$0xff]
    %v2644 = vld [vmem:[#allocation8 + $0x4a8] sm:$0xff]
    %v2645 = vld [vmem:[#allocation8 + $0x4b0] sm:$0xff]
    %v2646 = vld [vmem:[#allocation8 + $0x4b8] sm:$0xff]
    %v2647 = vld [vmem:[#allocation8 + $0x4c0] sm:$0xff]
    %v2648 = vld [vmem:[#allocation8 + $0x4c8] sm:$0xff]
    %v2649 = vld [vmem:[#allocation8 + $0x4d0] sm:$0xff]
    %v2650 = vld [vmem:[#allocation8 + $0x4d8] sm:$0xff]
    %v2651 = vld [vmem:[#allocation8 + $0x4e0] sm:$0xff]
    %v2652 = vld [vmem:[#allocation8 + $0x4e8] sm:$0xff]
    %v2653 = vld [vmem:[#allocation8 + $0x4f0] sm:$0xff]
    %v2654 = vld [vmem:[#allocation8 + $0x4f8] sm:$0xff]
    %v2655 = vld [vmem:[#allocation8 + $0x500] sm:$0xff]
    %v2656 = vld [vmem:[#allocation8 + $0x508] sm:$0xff]
    %v2657 = vld [vmem:[#allocation8 + $0x510] sm:$0xff]
    %v2658 = vld [vmem:[#allocation8 + $0x518] sm:$0xff]
    %v2659 = vld [vmem:[#allocation8 + $0x520] sm:$0xff]
    %v2660 = vld [vmem:[#allocation8 + $0x528] sm:$0xff]
    %v2661 = vld [vmem:[#allocation8 + $0x530] sm:$0xff]
    %v2662 = vld [vmem:[#allocation8 + $0x538] sm:$0xff]
    %v2663 = vld [vmem:[#allocation8 + $0x540] sm:$0xff]
    %v2664 = vld [vmem:[#allocation8 + $0x548] sm:$0xff]
    %v2665 = vld [vmem:[#allocation8 + $0x550] sm:$0xff]
    %v2666 = vld [vmem:[#allocation8 + $0x558] sm:$0xff]
    %v2667 = vld [vmem:[#allocation8 + $0x560] sm:$0xff]
    %v2668 = vld [vmem:[#allocation8 + $0x568] sm:$0xff]
    %v2669 = vld [vmem:[#allocation8 + $0x570] sm:$0xff]
    %v2670 = vld [vmem:[#allocation8 + $0x578] sm:$0xff]
    %v2671 = vld [vmem:[#allocation8 + $0x580] sm:$0xff]
    %v2672 = vld [vmem:[#allocation8 + $0x588] sm:$0xff]
    %v2673 = vld [vmem:[#allocation8 + $0x590] sm:$0xff]
    %v2674 = vld [vmem:[#allocation8 + $0x598] sm:$0xff]
    %v2675 = vld [vmem:[#allocation8 + $0x5a0] sm:$0xff]
    %v2676 = vld [vmem:[#allocation8 + $0x5a8] sm:$0xff]
    %v2677 = vld [vmem:[#allocation8 + $0x5b0] sm:$0xff]
    %v2678 = vld [vmem:[#allocation8 + $0x5b8] sm:$0xff]
    %v2679 = vld [vmem:[#allocation8 + $0x5c0] sm:$0xff]
    %v2680 = vld [vmem:[#allocation8 + $0x5c8] sm:$0xff]
    %v2681 = vld [vmem:[#allocation8 + $0x5d0] sm:$0xff]
    %v2682 = vld [vmem:[#allocation8 + $0x5d8] sm:$0xff]
    %v2683 = vld [vmem:[#allocation8 + $0x5e0] sm:$0xff]
    %v2684 = vld [vmem:[#allocation8 + $0x5e8] sm:$0xff]
    %v2685 = vld [vmem:[#allocation8 + $0x5f0] sm:$0xff]
    %v2686 = vld [vmem:[#allocation8 + $0x5f8] sm:$0xff]
    %v2687 = vld [vmem:[#allocation10] sm:$0xf]
    %v2689 = vlaneseq
    %v2690 = vshrl.u32 %v2689, 7
    %v2691 = vsub.s32 0, %v2690
    %v2692 = vrot.slane %v2687, %v2691
    %v2693 = vlaneseq
    %v2694 = vshrl.u32 %v2693, 7
    %v2695 = vsub.s32 1, %v2694
    %v2696 = vrot.slane %v2687, %v2695
    %v2697 = vlaneseq
    %v2698 = vshrl.u32 %v2697, 7
    %v2699 = vsub.s32 2, %v2698
    %v2700 = vrot.slane %v2687, %v2699
    %v2701 = vlaneseq
    %v2702 = vshrl.u32 %v2701, 7
    %v2703 = vsub.s32 3, %v2702
    %v2704 = vrot.slane %v2687, %v2703
    %v2901 = vunpack.c.l.b16 %v2495
    %v2902 = vunpack.c.h.b16 %v2495
    %v2903 = vunpack.c.l.b16 %v2496
    %v2904 = vunpack.c.h.b16 %v2496
    %v2905 = vunpack.c.l.b16 %v2497
    %v2906 = vunpack.c.h.b16 %v2497
    %v2907 = vunpack.c.l.b16 %v2498
    %v2908 = vunpack.c.h.b16 %v2498
    %v2909 = vunpack.c.l.b16 %v2499
    %v2910 = vunpack.c.h.b16 %v2499
    %v2911 = vunpack.c.l.b16 %v2500
    %v2912 = vunpack.c.h.b16 %v2500
    %v2913 = vunpack.c.l.b16 %v2501
    %v2914 = vunpack.c.h.b16 %v2501
    %v2915 = vunpack.c.l.b16 %v2502
    %v2916 = vunpack.c.h.b16 %v2502
    %v2917 = vunpack.c.l.b16 %v2503
    %v2918 = vunpack.c.h.b16 %v2503
    %v2919 = vunpack.c.l.b16 %v2504
    %v2920 = vunpack.c.h.b16 %v2504
    %v2921 = vunpack.c.l.b16 %v2505
    %v2922 = vunpack.c.h.b16 %v2505
    %v2923 = vunpack.c.l.b16 %v2506
    %v2924 = vunpack.c.h.b16 %v2506
    %v2925 = vunpack.c.l.b16 %v2507
    %v2926 = vunpack.c.h.b16 %v2507
    %v2927 = vunpack.c.l.b16 %v2508
    %v2928 = vunpack.c.h.b16 %v2508
    %v2929 = vunpack.c.l.b16 %v2509
    %v2930 = vunpack.c.h.b16 %v2509
    %v2931 = vunpack.c.l.b16 %v2510
    %v2932 = vunpack.c.h.b16 %v2510
    %v2933 = vunpack.c.l.b16 %v2511
    %v2934 = vunpack.c.h.b16 %v2511
    %v2935 = vunpack.c.l.b16 %v2512
    %v2936 = vunpack.c.h.b16 %v2512
    %v2937 = vunpack.c.l.b16 %v2513
    %v2938 = vunpack.c.h.b16 %v2513
    %v2939 = vunpack.c.l.b16 %v2514
    %v2940 = vunpack.c.h.b16 %v2514
    %v2941 = vunpack.c.l.b16 %v2515
    %v2942 = vunpack.c.h.b16 %v2515
    %v2943 = vunpack.c.l.b16 %v2516
    %v2944 = vunpack.c.h.b16 %v2516
    %v2945 = vunpack.c.l.b16 %v2517
    %v2946 = vunpack.c.h.b16 %v2517
    %v2947 = vunpack.c.l.b16 %v2518
    %v2948 = vunpack.c.h.b16 %v2518
    %v2949 = vunpack.c.l.b16 %v2519
    %v2950 = vunpack.c.h.b16 %v2519
    %v2951 = vunpack.c.l.b16 %v2520
    %v2952 = vunpack.c.h.b16 %v2520
    %v2953 = vunpack.c.l.b16 %v2521
    %v2954 = vunpack.c.h.b16 %v2521
    %v2955 = vunpack.c.l.b16 %v2522
    %v2956 = vunpack.c.h.b16 %v2522
    %v2957 = vunpack.c.l.b16 %v2523
    %v2958 = vunpack.c.h.b16 %v2523
    %v2959 = vunpack.c.l.b16 %v2524
    %v2960 = vunpack.c.h.b16 %v2524
    %v2961 = vunpack.c.l.b16 %v2525
    %v2962 = vunpack.c.h.b16 %v2525
    %v2963 = vunpack.c.l.b16 %v2526
    %v2964 = vunpack.c.h.b16 %v2526
    %v2965 = vunpack.c.l.b16 %v2527
    %v2966 = vunpack.c.h.b16 %v2527
    %v2967 = vunpack.c.l.b16 %v2528
    %v2968 = vunpack.c.h.b16 %v2528
    %v2969 = vunpack.c.l.b16 %v2529
    %v2970 = vunpack.c.h.b16 %v2529
    %v2971 = vunpack.c.l.b16 %v2530
    %v2972 = vunpack.c.h.b16 %v2530
    %v2973 = vunpack.c.l.b16 %v2531
    %v2974 = vunpack.c.h.b16 %v2531
    %v2975 = vunpack.c.l.b16 %v2532
    %v2976 = vunpack.c.h.b16 %v2532
    %v2977 = vunpack.c.l.b16 %v2533
    %v2978 = vunpack.c.h.b16 %v2533
    %v2979 = vunpack.c.l.b16 %v2534
    %v2980 = vunpack.c.h.b16 %v2534
    %v2981 = vunpack.c.l.b16 %v2535
    %v2982 = vunpack.c.h.b16 %v2535
    %v2983 = vunpack.c.l.b16 %v2536
    %v2984 = vunpack.c.h.b16 %v2536
    %v2985 = vunpack.c.l.b16 %v2537
    %v2986 = vunpack.c.h.b16 %v2537
    %v2987 = vunpack.c.l.b16 %v2538
    %v2988 = vunpack.c.h.b16 %v2538
    %v2989 = vunpack.c.l.b16 %v2539
    %v2990 = vunpack.c.h.b16 %v2539
    %v2991 = vunpack.c.l.b16 %v2540
    %v2992 = vunpack.c.h.b16 %v2540
    %v2993 = vunpack.c.l.b16 %v2541
    %v2994 = vunpack.c.h.b16 %v2541
    %v2995 = vunpack.c.l.b16 %v2542
    %v2996 = vunpack.c.h.b16 %v2542
    %v2997 = vunpack.c.l.b16 %v2543
    %v2998 = vunpack.c.h.b16 %v2543
    %v2999 = vunpack.c.l.b16 %v2544
    %v3000 = vunpack.c.h.b16 %v2544
    %v3001 = vunpack.c.l.b16 %v2545
    %v3002 = vunpack.c.h.b16 %v2545
    %v3003 = vunpack.c.l.b16 %v2546
    %v3004 = vunpack.c.h.b16 %v2546
    %v3005 = vunpack.c.l.b16 %v2547
    %v3006 = vunpack.c.h.b16 %v2547
    %v3007 = vunpack.c.l.b16 %v2548
    %v3008 = vunpack.c.h.b16 %v2548
    %v3009 = vunpack.c.l.b16 %v2549
    %v3010 = vunpack.c.h.b16 %v2549
    %v3011 = vunpack.c.l.b16 %v2550
    %v3012 = vunpack.c.h.b16 %v2550
    %v3013 = vunpack.c.l.b16 %v2551
    %v3014 = vunpack.c.h.b16 %v2551
    %v3015 = vunpack.c.l.b16 %v2552
    %v3016 = vunpack.c.h.b16 %v2552
    %v3017 = vunpack.c.l.b16 %v2553
    %v3018 = vunpack.c.h.b16 %v2553
    %v3019 = vunpack.c.l.b16 %v2554
    %v3020 = vunpack.c.h.b16 %v2554
    %v3021 = vunpack.c.l.b16 %v2555
    %v3022 = vunpack.c.h.b16 %v2555
    %v3023 = vunpack.c.l.b16 %v2556
    %v3024 = vunpack.c.h.b16 %v2556
    %v3025 = vunpack.c.l.b16 %v2557
    %v3026 = vunpack.c.h.b16 %v2557
    %v3027 = vunpack.c.l.b16 %v2558
    %v3028 = vunpack.c.h.b16 %v2558
    %v3029 = vunpack.c.l.b16 %v2559
    %v3030 = vunpack.c.h.b16 %v2559
    %v3031 = vunpack.c.l.b16 %v2560
    %v3032 = vunpack.c.h.b16 %v2560
    %v3033 = vunpack.c.l.b16 %v2561
    %v3034 = vunpack.c.h.b16 %v2561
    %v3035 = vunpack.c.l.b16 %v2562
    %v3036 = vunpack.c.h.b16 %v2562
    %v3037 = vunpack.c.l.b16 %v2563
    %v3038 = vunpack.c.h.b16 %v2563
    %v3039 = vunpack.c.l.b16 %v2564
    %v3040 = vunpack.c.h.b16 %v2564
    %v3041 = vunpack.c.l.b16 %v2565
    %v3042 = vunpack.c.h.b16 %v2565
    %v3043 = vunpack.c.l.b16 %v2566
    %v3044 = vunpack.c.h.b16 %v2566
    %v3045 = vunpack.c.l.b16 %v2567
    %v3046 = vunpack.c.h.b16 %v2567
    %v3047 = vunpack.c.l.b16 %v2568
    %v3048 = vunpack.c.h.b16 %v2568
    %v3049 = vunpack.c.l.b16 %v2569
    %v3050 = vunpack.c.h.b16 %v2569
    %v3051 = vunpack.c.l.b16 %v2570
    %v3052 = vunpack.c.h.b16 %v2570
    %v3053 = vunpack.c.l.b16 %v2571
    %v3054 = vunpack.c.h.b16 %v2571
    %v3055 = vunpack.c.l.b16 %v2572
    %v3056 = vunpack.c.h.b16 %v2572
    %v3057 = vunpack.c.l.b16 %v2573
    %v3058 = vunpack.c.h.b16 %v2573
    %v3059 = vunpack.c.l.b16 %v2574
    %v3060 = vunpack.c.h.b16 %v2574
    %v3061 = vunpack.c.l.b16 %v2575
    %v3062 = vunpack.c.h.b16 %v2575
    %v3063 = vunpack.c.l.b16 %v2576
    %v3064 = vunpack.c.h.b16 %v2576
    %v3065 = vunpack.c.l.b16 %v2577
    %v3066 = vunpack.c.h.b16 %v2577
    %v3067 = vunpack.c.l.b16 %v2578
    %v3068 = vunpack.c.h.b16 %v2578
    %v3069 = vunpack.c.l.b16 %v2579
    %v3070 = vunpack.c.h.b16 %v2579
    %v3071 = vunpack.c.l.b16 %v2580
    %v3072 = vunpack.c.h.b16 %v2580
    %v3073 = vunpack.c.l.b16 %v2581
    %v3074 = vunpack.c.h.b16 %v2581
    %v3075 = vunpack.c.l.b16 %v2582
    %v3076 = vunpack.c.h.b16 %v2582
    %v3077 = vunpack.c.l.b16 %v2583
    %v3078 = vunpack.c.h.b16 %v2583
    %v3079 = vunpack.c.l.b16 %v2584
    %v3080 = vunpack.c.h.b16 %v2584
    %v3081 = vunpack.c.l.b16 %v2585
    %v3082 = vunpack.c.h.b16 %v2585
    %v3083 = vunpack.c.l.b16 %v2586
    %v3084 = vunpack.c.h.b16 %v2586
    %v3085 = vunpack.c.l.b16 %v2587
    %v3086 = vunpack.c.h.b16 %v2587
    %v3087 = vunpack.c.l.b16 %v2588
    %v3088 = vunpack.c.h.b16 %v2588
    %v3089 = vunpack.c.l.b16 %v2589
    %v3090 = vunpack.c.h.b16 %v2589
    %v3091 = vunpack.c.l.b16 %v2590
    %v3092 = vunpack.c.h.b16 %v2590
    %v3093 = vunpack.c.l.b16 %v2591
    %v3094 = vunpack.c.h.b16 %v2591
    %v3095 = vunpack.c.l.b16 %v2592
    %v3096 = vunpack.c.h.b16 %v2592
    %v3097 = vunpack.c.l.b16 %v2593
    %v3098 = vunpack.c.h.b16 %v2593
    %v3099 = vunpack.c.l.b16 %v2594
    %v3100 = vunpack.c.h.b16 %v2594
    %v3101 = vunpack.c.l.b16 %v2595
    %v3102 = vunpack.c.h.b16 %v2595
    %v3103 = vunpack.c.l.b16 %v2596
    %v3104 = vunpack.c.h.b16 %v2596
    %v3105 = vunpack.c.l.b16 %v2597
    %v3106 = vunpack.c.h.b16 %v2597
    %v3107 = vunpack.c.l.b16 %v2598
    %v3108 = vunpack.c.h.b16 %v2598
    %v3109 = vunpack.c.l.b16 %v2599
    %v3110 = vunpack.c.h.b16 %v2599
    %v3111 = vunpack.c.l.b16 %v2600
    %v3112 = vunpack.c.h.b16 %v2600
    %v3113 = vunpack.c.l.b16 %v2601
    %v3114 = vunpack.c.h.b16 %v2601
    %v3115 = vunpack.c.l.b16 %v2602
    %v3116 = vunpack.c.h.b16 %v2602
    %v3117 = vunpack.c.l.b16 %v2603
    %v3118 = vunpack.c.h.b16 %v2603
    %v3119 = vunpack.c.l.b16 %v2604
    %v3120 = vunpack.c.h.b16 %v2604
    %v3121 = vunpack.c.l.b16 %v2605
    %v3122 = vunpack.c.h.b16 %v2605
    %v3123 = vunpack.c.l.b16 %v2606
    %v3124 = vunpack.c.h.b16 %v2606
    %v3125 = vunpack.c.l.b16 %v2607
    %v3126 = vunpack.c.h.b16 %v2607
    %v3127 = vunpack.c.l.b16 %v2608
    %v3128 = vunpack.c.h.b16 %v2608
    %v3129 = vunpack.c.l.b16 %v2609
    %v3130 = vunpack.c.h.b16 %v2609
    %v3131 = vunpack.c.l.b16 %v2610
    %v3132 = vunpack.c.h.b16 %v2610
    %v3133 = vunpack.c.l.b16 %v2611
    %v3134 = vunpack.c.h.b16 %v2611
    %v3135 = vunpack.c.l.b16 %v2612
    %v3136 = vunpack.c.h.b16 %v2612
    %v3137 = vunpack.c.l.b16 %v2613
    %v3138 = vunpack.c.h.b16 %v2613
    %v3139 = vunpack.c.l.b16 %v2614
    %v3140 = vunpack.c.h.b16 %v2614
    %v3141 = vunpack.c.l.b16 %v2615
    %v3142 = vunpack.c.h.b16 %v2615
    %v3143 = vunpack.c.l.b16 %v2616
    %v3144 = vunpack.c.h.b16 %v2616
    %v3145 = vunpack.c.l.b16 %v2617
    %v3146 = vunpack.c.h.b16 %v2617
    %v3147 = vunpack.c.l.b16 %v2618
    %v3148 = vunpack.c.h.b16 %v2618
    %v3149 = vunpack.c.l.b16 %v2619
    %v3150 = vunpack.c.h.b16 %v2619
    %v3151 = vunpack.c.l.b16 %v2620
    %v3152 = vunpack.c.h.b16 %v2620
    %v3153 = vunpack.c.l.b16 %v2621
    %v3154 = vunpack.c.h.b16 %v2621
    %v3155 = vunpack.c.l.b16 %v2622
    %v3156 = vunpack.c.h.b16 %v2622
    %v3157 = vunpack.c.l.b16 %v2623
    %v3158 = vunpack.c.h.b16 %v2623
    %v3159 = vunpack.c.l.b16 %v2624
    %v3160 = vunpack.c.h.b16 %v2624
    %v3161 = vunpack.c.l.b16 %v2625
    %v3162 = vunpack.c.h.b16 %v2625
    %v3163 = vunpack.c.l.b16 %v2626
    %v3164 = vunpack.c.h.b16 %v2626
    %v3165 = vunpack.c.l.b16 %v2627
    %v3166 = vunpack.c.h.b16 %v2627
    %v3167 = vunpack.c.l.b16 %v2628
    %v3168 = vunpack.c.h.b16 %v2628
    %v3169 = vunpack.c.l.b16 %v2629
    %v3170 = vunpack.c.h.b16 %v2629
    %v3171 = vunpack.c.l.b16 %v2630
    %v3172 = vunpack.c.h.b16 %v2630
    %v3173 = vunpack.c.l.b16 %v2631
    %v3174 = vunpack.c.h.b16 %v2631
    %v3175 = vunpack.c.l.b16 %v2632
    %v3176 = vunpack.c.h.b16 %v2632
    %v3177 = vunpack.c.l.b16 %v2633
    %v3178 = vunpack.c.h.b16 %v2633
    %v3179 = vunpack.c.l.b16 %v2634
    %v3180 = vunpack.c.h.b16 %v2634
    %v3181 = vunpack.c.l.b16 %v2635
    %v3182 = vunpack.c.h.b16 %v2635
    %v3183 = vunpack.c.l.b16 %v2636
    %v3184 = vunpack.c.h.b16 %v2636
    %v3185 = vunpack.c.l.b16 %v2637
    %v3186 = vunpack.c.h.b16 %v2637
    %v3187 = vunpack.c.l.b16 %v2638
    %v3188 = vunpack.c.h.b16 %v2638
    %v3189 = vunpack.c.l.b16 %v2639
    %v3190 = vunpack.c.h.b16 %v2639
    %v3191 = vunpack.c.l.b16 %v2640
    %v3192 = vunpack.c.h.b16 %v2640
    %v3193 = vunpack.c.l.b16 %v2641
    %v3194 = vunpack.c.h.b16 %v2641
    %v3195 = vunpack.c.l.b16 %v2642
    %v3196 = vunpack.c.h.b16 %v2642
    %v3197 = vunpack.c.l.b16 %v2643
    %v3198 = vunpack.c.h.b16 %v2643
    %v3199 = vunpack.c.l.b16 %v2644
    %v3200 = vunpack.c.h.b16 %v2644
    %v3201 = vunpack.c.l.b16 %v2645
    %v3202 = vunpack.c.h.b16 %v2645
    %v3203 = vunpack.c.l.b16 %v2646
    %v3204 = vunpack.c.h.b16 %v2646
    %v3205 = vunpack.c.l.b16 %v2647
    %v3206 = vunpack.c.h.b16 %v2647
    %v3207 = vunpack.c.l.b16 %v2648
    %v3208 = vunpack.c.h.b16 %v2648
    %v3209 = vunpack.c.l.b16 %v2649
    %v3210 = vunpack.c.h.b16 %v2649
    %v3211 = vunpack.c.l.b16 %v2650
    %v3212 = vunpack.c.h.b16 %v2650
    %v3213 = vunpack.c.l.b16 %v2651
    %v3214 = vunpack.c.h.b16 %v2651
    %v3215 = vunpack.c.l.b16 %v2652
    %v3216 = vunpack.c.h.b16 %v2652
    %v3217 = vunpack.c.l.b16 %v2653
    %v3218 = vunpack.c.h.b16 %v2653
    %v3219 = vunpack.c.l.b16 %v2654
    %v3220 = vunpack.c.h.b16 %v2654
    %v3221 = vunpack.c.l.b16 %v2655
    %v3222 = vunpack.c.h.b16 %v2655
    %v3223 = vunpack.c.l.b16 %v2656
    %v3224 = vunpack.c.h.b16 %v2656
    %v3225 = vunpack.c.l.b16 %v2657
    %v3226 = vunpack.c.h.b16 %v2657
    %v3227 = vunpack.c.l.b16 %v2658
    %v3228 = vunpack.c.h.b16 %v2658
    %v3229 = vunpack.c.l.b16 %v2659
    %v3230 = vunpack.c.h.b16 %v2659
    %v3231 = vunpack.c.l.b16 %v2660
    %v3232 = vunpack.c.h.b16 %v2660
    %v3233 = vunpack.c.l.b16 %v2661
    %v3234 = vunpack.c.h.b16 %v2661
    %v3235 = vunpack.c.l.b16 %v2662
    %v3236 = vunpack.c.h.b16 %v2662
    %v3237 = vunpack.c.l.b16 %v2663
    %v3238 = vunpack.c.h.b16 %v2663
    %v3239 = vunpack.c.l.b16 %v2664
    %v3240 = vunpack.c.h.b16 %v2664
    %v3241 = vunpack.c.l.b16 %v2665
    %v3242 = vunpack.c.h.b16 %v2665
    %v3243 = vunpack.c.l.b16 %v2666
    %v3244 = vunpack.c.h.b16 %v2666
    %v3245 = vunpack.c.l.b16 %v2667
    %v3246 = vunpack.c.h.b16 %v2667
    %v3247 = vunpack.c.l.b16 %v2668
    %v3248 = vunpack.c.h.b16 %v2668
    %v3249 = vunpack.c.l.b16 %v2669
    %v3250 = vunpack.c.h.b16 %v2669
    %v3251 = vunpack.c.l.b16 %v2670
    %v3252 = vunpack.c.h.b16 %v2670
    %v3253 = vunpack.c.l.b16 %v2671
    %v3254 = vunpack.c.h.b16 %v2671
    %v3255 = vunpack.c.l.b16 %v2672
    %v3256 = vunpack.c.h.b16 %v2672
    %v3257 = vunpack.c.l.b16 %v2673
    %v3258 = vunpack.c.h.b16 %v2673
    %v3259 = vunpack.c.l.b16 %v2674
    %v3260 = vunpack.c.h.b16 %v2674
    %v3261 = vunpack.c.l.b16 %v2675
    %v3262 = vunpack.c.h.b16 %v2675
    %v3263 = vunpack.c.l.b16 %v2676
    %v3264 = vunpack.c.h.b16 %v2676
    %v3265 = vunpack.c.l.b16 %v2677
    %v3266 = vunpack.c.h.b16 %v2677
    %v3267 = vunpack.c.l.b16 %v2678
    %v3268 = vunpack.c.h.b16 %v2678
    %v3269 = vunpack.c.l.b16 %v2679
    %v3270 = vunpack.c.h.b16 %v2679
    %v3271 = vunpack.c.l.b16 %v2680
    %v3272 = vunpack.c.h.b16 %v2680
    %v3273 = vunpack.c.l.b16 %v2681
    %v3274 = vunpack.c.h.b16 %v2681
    %v3275 = vunpack.c.l.b16 %v2682
    %v3276 = vunpack.c.h.b16 %v2682
    %v3277 = vunpack.c.l.b16 %v2683
    %v3278 = vunpack.c.h.b16 %v2683
    %v3279 = vunpack.c.l.b16 %v2684
    %v3280 = vunpack.c.h.b16 %v2684
    %v3281 = vunpack.c.l.b16 %v2685
    %v3282 = vunpack.c.h.b16 %v2685
    %v3283 = vunpack.c.l.b16 %v2686
    %v3284 = vunpack.c.h.b16 %v2686
    %v3285 = vpack.c.b16 %v2905, %v2901
    %v3286 = vpack.c.b16 %v2906, %v2902
    %v3287 = vpack.c.b16 %v2907, %v2903
    %v3288 = vpack.c.b16 %v2908, %v2904
    %v3289 = vpack.c.b16 %v2913, %v2909
    %v3290 = vpack.c.b16 %v2914, %v2910
    %v3291 = vpack.c.b16 %v2915, %v2911
    %v3292 = vpack.c.b16 %v2916, %v2912
    %v3293 = vpack.c.b16 %v2921, %v2917
    %v3294 = vpack.c.b16 %v2922, %v2918
    %v3295 = vpack.c.b16 %v2923, %v2919
    %v3296 = vpack.c.b16 %v2924, %v2920
    %v3297 = vpack.c.b16 %v2929, %v2925
    %v3298 = vpack.c.b16 %v2930, %v2926
    %v3299 = vpack.c.b16 %v2931, %v2927
    %v3300 = vpack.c.b16 %v2932, %v2928
    %v3301 = vpack.c.b16 %v2937, %v2933
    %v3302 = vpack.c.b16 %v2938, %v2934
    %v3303 = vpack.c.b16 %v2939, %v2935
    %v3304 = vpack.c.b16 %v2940, %v2936
    %v3305 = vpack.c.b16 %v2945, %v2941
    %v3306 = vpack.c.b16 %v2946, %v2942
    %v3307 = vpack.c.b16 %v2947, %v2943
    %v3308 = vpack.c.b16 %v2948, %v2944
    %v3309 = vpack.c.b16 %v2953, %v2949
    %v3310 = vpack.c.b16 %v2954, %v2950
    %v3311 = vpack.c.b16 %v2955, %v2951
    %v3312 = vpack.c.b16 %v2956, %v2952
    %v3313 = vpack.c.b16 %v2961, %v2957
    %v3314 = vpack.c.b16 %v2962, %v2958
    %v3315 = vpack.c.b16 %v2963, %v2959
    %v3316 = vpack.c.b16 %v2964, %v2960
    %v3317 = vpack.c.b16 %v2969, %v2965
    %v3318 = vpack.c.b16 %v2970, %v2966
    %v3319 = vpack.c.b16 %v2971, %v2967
    %v3320 = vpack.c.b16 %v2972, %v2968
    %v3321 = vpack.c.b16 %v2977, %v2973
    %v3322 = vpack.c.b16 %v2978, %v2974
    %v3323 = vpack.c.b16 %v2979, %v2975
    %v3324 = vpack.c.b16 %v2980, %v2976
    %v3325 = vpack.c.b16 %v2985, %v2981
    %v3326 = vpack.c.b16 %v2986, %v2982
    %v3327 = vpack.c.b16 %v2987, %v2983
    %v3328 = vpack.c.b16 %v2988, %v2984
    %v3329 = vpack.c.b16 %v2993, %v2989
    %v3330 = vpack.c.b16 %v2994, %v2990
    %v3331 = vpack.c.b16 %v2995, %v2991
    %v3332 = vpack.c.b16 %v2996, %v2992
    %v3333 = vpack.c.b16 %v3001, %v2997
    %v3334 = vpack.c.b16 %v3002, %v2998
    %v3335 = vpack.c.b16 %v3003, %v2999
    %v3336 = vpack.c.b16 %v3004, %v3000
    %v3337 = vpack.c.b16 %v3009, %v3005
    %v3338 = vpack.c.b16 %v3010, %v3006
    %v3339 = vpack.c.b16 %v3011, %v3007
    %v3340 = vpack.c.b16 %v3012, %v3008
    %v3341 = vpack.c.b16 %v3017, %v3013
    %v3342 = vpack.c.b16 %v3018, %v3014
    %v3343 = vpack.c.b16 %v3019, %v3015
    %v3344 = vpack.c.b16 %v3020, %v3016
    %v3345 = vpack.c.b16 %v3025, %v3021
    %v3346 = vpack.c.b16 %v3026, %v3022
    %v3347 = vpack.c.b16 %v3027, %v3023
    %v3348 = vpack.c.b16 %v3028, %v3024
    %v3349 = vpack.c.b16 %v3033, %v3029
    %v3350 = vpack.c.b16 %v3034, %v3030
    %v3351 = vpack.c.b16 %v3035, %v3031
    %v3352 = vpack.c.b16 %v3036, %v3032
    %v3353 = vpack.c.b16 %v3041, %v3037
    %v3354 = vpack.c.b16 %v3042, %v3038
    %v3355 = vpack.c.b16 %v3043, %v3039
    %v3356 = vpack.c.b16 %v3044, %v3040
    %v3357 = vpack.c.b16 %v3049, %v3045
    %v3358 = vpack.c.b16 %v3050, %v3046
    %v3359 = vpack.c.b16 %v3051, %v3047
    %v3360 = vpack.c.b16 %v3052, %v3048
    %v3361 = vpack.c.b16 %v3057, %v3053
    %v3362 = vpack.c.b16 %v3058, %v3054
    %v3363 = vpack.c.b16 %v3059, %v3055
    %v3364 = vpack.c.b16 %v3060, %v3056
    %v3365 = vpack.c.b16 %v3065, %v3061
    %v3366 = vpack.c.b16 %v3066, %v3062
    %v3367 = vpack.c.b16 %v3067, %v3063
    %v3368 = vpack.c.b16 %v3068, %v3064
    %v3369 = vpack.c.b16 %v3073, %v3069
    %v3370 = vpack.c.b16 %v3074, %v3070
    %v3371 = vpack.c.b16 %v3075, %v3071
    %v3372 = vpack.c.b16 %v3076, %v3072
    %v3373 = vpack.c.b16 %v3081, %v3077
    %v3374 = vpack.c.b16 %v3082, %v3078
    %v3375 = vpack.c.b16 %v3083, %v3079
    %v3376 = vpack.c.b16 %v3084, %v3080
    %v3377 = vpack.c.b16 %v3089, %v3085
    %v3378 = vpack.c.b16 %v3090, %v3086
    %v3379 = vpack.c.b16 %v3091, %v3087
    %v3380 = vpack.c.b16 %v3092, %v3088
    %v3381 = vpack.c.b16 %v3097, %v3093
    %v3382 = vpack.c.b16 %v3098, %v3094
    %v3383 = vpack.c.b16 %v3099, %v3095
    %v3384 = vpack.c.b16 %v3100, %v3096
    %v3385 = vpack.c.b16 %v3105, %v3101
    %v3386 = vpack.c.b16 %v3106, %v3102
    %v3387 = vpack.c.b16 %v3107, %v3103
    %v3388 = vpack.c.b16 %v3108, %v3104
    %v3389 = vpack.c.b16 %v3113, %v3109
    %v3390 = vpack.c.b16 %v3114, %v3110
    %v3391 = vpack.c.b16 %v3115, %v3111
    %v3392 = vpack.c.b16 %v3116, %v3112
    %v3393 = vpack.c.b16 %v3121, %v3117
    %v3394 = vpack.c.b16 %v3122, %v3118
    %v3395 = vpack.c.b16 %v3123, %v3119
    %v3396 = vpack.c.b16 %v3124, %v3120
    %v3397 = vpack.c.b16 %v3129, %v3125
    %v3398 = vpack.c.b16 %v3130, %v3126
    %v3399 = vpack.c.b16 %v3131, %v3127
    %v3400 = vpack.c.b16 %v3132, %v3128
    %v3401 = vpack.c.b16 %v3137, %v3133
    %v3402 = vpack.c.b16 %v3138, %v3134
    %v3403 = vpack.c.b16 %v3139, %v3135
    %v3404 = vpack.c.b16 %v3140, %v3136
    %v3405 = vpack.c.b16 %v3145, %v3141
    %v3406 = vpack.c.b16 %v3146, %v3142
    %v3407 = vpack.c.b16 %v3147, %v3143
    %v3408 = vpack.c.b16 %v3148, %v3144
    %v3409 = vpack.c.b16 %v3153, %v3149
    %v3410 = vpack.c.b16 %v3154, %v3150
    %v3411 = vpack.c.b16 %v3155, %v3151
    %v3412 = vpack.c.b16 %v3156, %v3152
    %v3413 = vpack.c.b16 %v3161, %v3157
    %v3414 = vpack.c.b16 %v3162, %v3158
    %v3415 = vpack.c.b16 %v3163, %v3159
    %v3416 = vpack.c.b16 %v3164, %v3160
    %v3417 = vpack.c.b16 %v3169, %v3165
    %v3418 = vpack.c.b16 %v3170, %v3166
    %v3419 = vpack.c.b16 %v3171, %v3167
    %v3420 = vpack.c.b16 %v3172, %v3168
    %v3421 = vpack.c.b16 %v3177, %v3173
    %v3422 = vpack.c.b16 %v3178, %v3174
    %v3423 = vpack.c.b16 %v3179, %v3175
    %v3424 = vpack.c.b16 %v3180, %v3176
    %v3425 = vpack.c.b16 %v3185, %v3181
    %v3426 = vpack.c.b16 %v3186, %v3182
    %v3427 = vpack.c.b16 %v3187, %v3183
    %v3428 = vpack.c.b16 %v3188, %v3184
    %v3429 = vpack.c.b16 %v3193, %v3189
    %v3430 = vpack.c.b16 %v3194, %v3190
    %v3431 = vpack.c.b16 %v3195, %v3191
    %v3432 = vpack.c.b16 %v3196, %v3192
    %v3433 = vpack.c.b16 %v3201, %v3197
    %v3434 = vpack.c.b16 %v3202, %v3198
    %v3435 = vpack.c.b16 %v3203, %v3199
    %v3436 = vpack.c.b16 %v3204, %v3200
    %v3437 = vpack.c.b16 %v3209, %v3205
    %v3438 = vpack.c.b16 %v3210, %v3206
    %v3439 = vpack.c.b16 %v3211, %v3207
    %v3440 = vpack.c.b16 %v3212, %v3208
    %v3441 = vpack.c.b16 %v3217, %v3213
    %v3442 = vpack.c.b16 %v3218, %v3214
    %v3443 = vpack.c.b16 %v3219, %v3215
    %v3444 = vpack.c.b16 %v3220, %v3216
    %v3445 = vpack.c.b16 %v3225, %v3221
    %v3446 = vpack.c.b16 %v3226, %v3222
    %v3447 = vpack.c.b16 %v3227, %v3223
    %v3448 = vpack.c.b16 %v3228, %v3224
    %v3449 = vpack.c.b16 %v3233, %v3229
    %v3450 = vpack.c.b16 %v3234, %v3230
    %v3451 = vpack.c.b16 %v3235, %v3231
    %v3452 = vpack.c.b16 %v3236, %v3232
    %v3453 = vpack.c.b16 %v3241, %v3237
    %v3454 = vpack.c.b16 %v3242, %v3238
    %v3455 = vpack.c.b16 %v3243, %v3239
    %v3456 = vpack.c.b16 %v3244, %v3240
    %v3457 = vpack.c.b16 %v3249, %v3245
    %v3458 = vpack.c.b16 %v3250, %v3246
    %v3459 = vpack.c.b16 %v3251, %v3247
    %v3460 = vpack.c.b16 %v3252, %v3248
    %v3461 = vpack.c.b16 %v3257, %v3253
    %v3462 = vpack.c.b16 %v3258, %v3254
    %v3463 = vpack.c.b16 %v3259, %v3255
    %v3464 = vpack.c.b16 %v3260, %v3256
    %v3465 = vpack.c.b16 %v3265, %v3261
    %v3466 = vpack.c.b16 %v3266, %v3262
    %v3467 = vpack.c.b16 %v3267, %v3263
    %v3468 = vpack.c.b16 %v3268, %v3264
    %v3469 = vpack.c.b16 %v3273, %v3269
    %v3470 = vpack.c.b16 %v3274, %v3270
    %v3471 = vpack.c.b16 %v3275, %v3271
    %v3472 = vpack.c.b16 %v3276, %v3272
    %v3473 = vpack.c.b16 %v3281, %v3277
    %v3474 = vpack.c.b16 %v3282, %v3278
    %v3475 = vpack.c.b16 %v3283, %v3279
    %v3476 = vpack.c.b16 %v3284, %v3280
    %3669 = vmatprep.subr.bf16.mxu0 %v3286
    %3670 = vmatpush1.bf16.msra.mxu0 %v3285
    %3671 = vmatprep.subr.bf16.mxu0 %v3290
    %3672 = vmatpush1.bf16.msra.mxu0 %v3289
    %3673 = vmatprep.subr.bf16.mxu0 %v3294
    %3674 = vmatpush1.bf16.msra.mxu0 %v3293
    %3675 = vmatprep.subr.bf16.mxu0 %v3298
    %3676 = vmatpush1.bf16.msra.mxu0 %v3297
    %3677 = vmatprep.subr.bf16.mxu0 %v3302
    %3678 = vmatpush1.bf16.msra.mxu0 %v3301
    %3679 = vmatprep.subr.bf16.mxu0 %v3306
    %3680 = vmatpush1.bf16.msra.mxu0 %v3305
    %3681 = vmatprep.subr.bf16.mxu0 %v3310
    %3682 = vmatpush1.bf16.msra.mxu0 %v3309
    %3683 = vmatprep.subr.bf16.mxu0 %v3314
    %3684 = vmatpush1.bf16.msra.mxu0 %v3313
    %3685 = vmatprep.subr.bf16.mxu0 %v3318
    %3686 = vmatpush1.bf16.msra.mxu0 %v3317
    %3687 = vmatprep.subr.bf16.mxu0 %v3322
    %3688 = vmatpush1.bf16.msra.mxu0 %v3321
    %3689 = vmatprep.subr.bf16.mxu0 %v3326
    %3690 = vmatpush1.bf16.msra.mxu0 %v3325
    %3691 = vmatprep.subr.bf16.mxu0 %v3330
    %3692 = vmatpush1.bf16.msra.mxu0 %v3329
    %3693 = vmatprep.subr.bf16.mxu0 %v3334
    %3694 = vmatpush1.bf16.msra.mxu0 %v3333
    %3695 = vmatprep.subr.bf16.mxu0 %v3338
    %3696 = vmatpush1.bf16.msra.mxu0 %v3337
    %3697 = vmatprep.subr.bf16.mxu0 %v3342
    %3698 = vmatpush1.bf16.msra.mxu0 %v3341
    %3699 = vmatprep.subr.bf16.mxu0 %v3346
    %3700 = vmatpush1.bf16.msra.mxu0 %v3345
    %3701 = vmatprep.mubr.bf16.mxu0 %v2490
    %3702 = vmatmul.mubr.bf16.gmra.mrb[0].mxu0 %v2489
    %v3703 = vpop.f32.mrb[0].mxu0
    %v3704 = vadd.f32 %v2692, %v3703
    %v3705 = vpop.f32.mrb[0].mxu0
    %v3706 = vadd.f32 %v2696, %v3705
    %v3707 = vpop.f32.mrb[0].mxu0
    %v3708 = vpop.f32.mrb[0].mxu0
    %3709 = vdwg.mxu0
    %3710 = vmatprep.subr.bf16.mxu0 %v3350
    %3711 = vmatpush1.bf16.msra.mxu0 %v3349
    %3712 = vmatprep.subr.bf16.mxu0 %v3354
    %3713 = vmatpush1.bf16.msra.mxu0 %v3353
    %3714 = vmatprep.subr.bf16.mxu0 %v3358
    %3715 = vmatpush1.bf16.msra.mxu0 %v3357
    %3716 = vmatprep.subr.bf16.mxu0 %v3362
    %3717 = vmatpush1.bf16.msra.mxu0 %v3361
    %3718 = vmatprep.subr.bf16.mxu0 %v3366
    %3719 = vmatpush1.bf16.msra.mxu0 %v3365
    %3720 = vmatprep.subr.bf16.mxu0 %v3370
    %3721 = vmatpush1.bf16.msra.mxu0 %v3369
    %3722 = vmatprep.subr.bf16.mxu0 %v3374
    %3723 = vmatpush1.bf16.msra.mxu0 %v3373
    %3724 = vmatprep.subr.bf16.mxu0 %v3378
    %3725 = vmatpush1.bf16.msra.mxu0 %v3377
    %3726 = vmatprep.subr.bf16.mxu0 %v3382
    %3727 = vmatpush1.bf16.msra.mxu0 %v3381
    %3728 = vmatprep.subr.bf16.mxu0 %v3386
    %3729 = vmatpush1.bf16.msra.mxu0 %v3385
    %3730 = vmatprep.subr.bf16.mxu0 %v3390
    %3731 = vmatpush1.bf16.msra.mxu0 %v3389
    %3732 = vmatprep.subr.bf16.mxu0 %v3394
    %3733 = vmatpush1.bf16.msra.mxu0 %v3393
    %3734 = vmatprep.subr.bf16.mxu0 %v3398
    %3735 = vmatpush1.bf16.msra.mxu0 %v3397
    %3736 = vmatprep.subr.bf16.mxu0 %v3402
    %3737 = vmatpush1.bf16.msra.mxu0 %v3401
    %3738 = vmatprep.subr.bf16.mxu0 %v3406
    %3739 = vmatpush1.bf16.msra.mxu0 %v3405
    %3740 = vmatprep.subr.bf16.mxu0 %v3410
    %3741 = vmatpush1.bf16.msra.mxu0 %v3409
    %3742 = vmatprep.mubr.bf16.mxu0 %v2492
    %3743 = vmatmul.mubr.bf16.gmra.mrb[0].mxu0 %v2491
    %v3744 = vpop.f32.mrb[0].mxu0
    %v3745 = vadd.f32 %v3704, %v3744
    %v3746 = vpop.f32.mrb[0].mxu0
    %v3747 = vadd.f32 %v3706, %v3746
    %v3748 = vpop.f32.mrb[0].mxu0
    %v3749 = vpop.f32.mrb[0].mxu0
    %3750 = vdwg.mxu0
    %3751 = vmatprep.subr.bf16.mxu0 %v3414
    %3752 = vmatpush1.bf16.msra.mxu0 %v3413
    %3753 = vmatprep.subr.bf16.mxu0 %v3418
    %3754 = vmatpush1.bf16.msra.mxu0 %v3417
    %3755 = vmatprep.subr.bf16.mxu0 %v3422
    %3756 = vmatpush1.bf16.msra.mxu0 %v3421
    %3757 = vmatprep.subr.bf16.mxu0 %v3426
    %3758 = vmatpush1.bf16.msra.mxu0 %v3425
    %3759 = vmatprep.subr.bf16.mxu0 %v3430
    %3760 = vmatpush1.bf16.msra.mxu0 %v3429
    %3761 = vmatprep.subr.bf16.mxu0 %v3434
    %3762 = vmatpush1.bf16.msra.mxu0 %v3433
    %3763 = vmatprep.subr.bf16.mxu0 %v3438
    %3764 = vmatpush1.bf16.msra.mxu0 %v3437
    %3765 = vmatprep.subr.bf16.mxu0 %v3442
    %3766 = vmatpush1.bf16.msra.mxu0 %v3441
    %3767 = vmatprep.subr.bf16.mxu0 %v3446
    %3768 = vmatpush1.bf16.msra.mxu0 %v3445
    %3769 = vmatprep.subr.bf16.mxu0 %v3450
    %3770 = vmatpush1.bf16.msra.mxu0 %v3449
    %3771 = vmatprep.subr.bf16.mxu0 %v3454
    %3772 = vmatpush1.bf16.msra.mxu0 %v3453
    %3773 = vmatprep.subr.bf16.mxu0 %v3458
    %3774 = vmatpush1.bf16.msra.mxu0 %v3457
    %3775 = vmatprep.subr.bf16.mxu0 %v3462
    %3776 = vmatpush1.bf16.msra.mxu0 %v3461
    %3777 = vmatprep.subr.bf16.mxu0 %v3466
    %3778 = vmatpush1.bf16.msra.mxu0 %v3465
    %3779 = vmatprep.subr.bf16.mxu0 %v3470
    %3780 = vmatpush1.bf16.msra.mxu0 %v3469
    %3781 = vmatprep.subr.bf16.mxu0 %v3474
    %3782 = vmatpush1.bf16.msra.mxu0 %v3473
    %3783 = vmatprep.mubr.bf16.mxu0 %v2494
    %3784 = vmatmul.mubr.bf16.gmra.mrb[0].mxu0 %v2493
    %v3785 = vpop.f32.mrb[0].mxu0
    %v3786 = vadd.f32 %v3745, %v3785
    %v3787 = vpop.f32.mrb[0].mxu0
    %v3788 = vadd.f32 %v3747, %v3787
    %v3789 = vpop.f32.mrb[0].mxu0
    %v3790 = vpop.f32.mrb[0].mxu0
    %3791 = vdwg.mxu0
    %3792 = vmatprep.subr.bf16.mxu0 %v3288
    %3793 = vmatpush1.bf16.msra.mxu0 %v3287
    %3794 = vmatprep.subr.bf16.mxu0 %v3292
    %3795 = vmatpush1.bf16.msra.mxu0 %v3291
    %3796 = vmatprep.subr.bf16.mxu0 %v3296
    %3797 = vmatpush1.bf16.msra.mxu0 %v3295
    %3798 = vmatprep.subr.bf16.mxu0 %v3300
    %3799 = vmatpush1.bf16.msra.mxu0 %v3299
    %3800 = vmatprep.subr.bf16.mxu0 %v3304
    %3801 = vmatpush1.bf16.msra.mxu0 %v3303
    %3802 = vmatprep.subr.bf16.mxu0 %v3308
    %3803 = vmatpush1.bf16.msra.mxu0 %v3307
    %3804 = vmatprep.subr.bf16.mxu0 %v3312
    %3805 = vmatpush1.bf16.msra.mxu0 %v3311
    %3806 = vmatprep.subr.bf16.mxu0 %v3316
    %3807 = vmatpush1.bf16.msra.mxu0 %v3315
    %3808 = vmatprep.subr.bf16.mxu0 %v3320
    %3809 = vmatpush1.bf16.msra.mxu0 %v3319
    %3810 = vmatprep.subr.bf16.mxu0 %v3324
    %3811 = vmatpush1.bf16.msra.mxu0 %v3323
    %3812 = vmatprep.subr.bf16.mxu0 %v3328
    %3813 = vmatpush1.bf16.msra.mxu0 %v3327
    %3814 = vmatprep.subr.bf16.mxu0 %v3332
    %3815 = vmatpush1.bf16.msra.mxu0 %v3331
    %3816 = vmatprep.subr.bf16.mxu0 %v3336
    %3817 = vmatpush1.bf16.msra.mxu0 %v3335
    %3818 = vmatprep.subr.bf16.mxu0 %v3340
    %3819 = vmatpush1.bf16.msra.mxu0 %v3339
    %3820 = vmatprep.subr.bf16.mxu0 %v3344
    %3821 = vmatpush1.bf16.msra.mxu0 %v3343
    %3822 = vmatprep.subr.bf16.mxu0 %v3348
    %3823 = vmatpush1.bf16.msra.mxu0 %v3347
    %3824 = vmatprep.mubr.bf16.mxu0 %v2490
    %3825 = vmatmul.mubr.bf16.gmra.mrb[0].mxu0 %v2489
    %v3826 = vpop.f32.mrb[0].mxu0
    %v3827 = vadd.f32 %v2700, %v3826
    %v3828 = vpop.f32.mrb[0].mxu0
    %v3829 = vadd.f32 %v2704, %v3828
    %v3830 = vpop.f32.mrb[0].mxu0
    %v3831 = vpop.f32.mrb[0].mxu0
    %3832 = vdwg.mxu0
    %3833 = vmatprep.subr.bf16.mxu0 %v3352
    %3834 = vmatpush1.bf16.msra.mxu0 %v3351
    %3835 = vmatprep.subr.bf16.mxu0 %v3356
    %3836 = vmatpush1.bf16.msra.mxu0 %v3355
    %3837 = vmatprep.subr.bf16.mxu0 %v3360
    %3838 = vmatpush1.bf16.msra.mxu0 %v3359
    %3839 = vmatprep.subr.bf16.mxu0 %v3364
    %3840 = vmatpush1.bf16.msra.mxu0 %v3363
    %3841 = vmatprep.subr.bf16.mxu0 %v3368
    %3842 = vmatpush1.bf16.msra.mxu0 %v3367
    %3843 = vmatprep.subr.bf16.mxu0 %v3372
    %3844 = vmatpush1.bf16.msra.mxu0 %v3371
    %3845 = vmatprep.subr.bf16.mxu0 %v3376
    %3846 = vmatpush1.bf16.msra.mxu0 %v3375
    %3847 = vmatprep.subr.bf16.mxu0 %v3380
    %3848 = vmatpush1.bf16.msra.mxu0 %v3379
    %3849 = vmatprep.subr.bf16.mxu0 %v3384
    %3850 = vmatpush1.bf16.msra.mxu0 %v3383
    %3851 = vmatprep.subr.bf16.mxu0 %v3388
    %3852 = vmatpush1.bf16.msra.mxu0 %v3387
    %3853 = vmatprep.subr.bf16.mxu0 %v3392
    %3854 = vmatpush1.bf16.msra.mxu0 %v3391
    %3855 = vmatprep.subr.bf16.mxu0 %v3396
    %3856 = vmatpush1.bf16.msra.mxu0 %v3395
    %3857 = vmatprep.subr.bf16.mxu0 %v3400
    %3858 = vmatpush1.bf16.msra.mxu0 %v3399
    %3859 = vmatprep.subr.bf16.mxu0 %v3404
    %3860 = vmatpush1.bf16.msra.mxu0 %v3403
    %3861 = vmatprep.subr.bf16.mxu0 %v3408
    %3862 = vmatpush1.bf16.msra.mxu0 %v3407
    %3863 = vmatprep.subr.bf16.mxu0 %v3412
    %3864 = vmatpush1.bf16.msra.mxu0 %v3411
    %3865 = vmatprep.mubr.bf16.mxu0 %v2492
    %3866 = vmatmul.mubr.bf16.gmra.mrb[0].mxu0 %v2491
    %v3867 = vpop.f32.mrb[0].mxu0
    %v3868 = vadd.f32 %v3827, %v3867
    %v3869 = vpop.f32.mrb[0].mxu0
    %v3870 = vadd.f32 %v3829, %v3869
    %v3871 = vpop.f32.mrb[0].mxu0
    %v3872 = vpop.f32.mrb[0].mxu0
    %3873 = vdwg.mxu0
    %3874 = vmatprep.subr.bf16.mxu0 %v3416
    %3875 = vmatpush1.bf16.msra.mxu0 %v3415
    %3876 = vmatprep.subr.bf16.mxu0 %v3420
    %3877 = vmatpush1.bf16.msra.mxu0 %v3419
    %3878 = vmatprep.subr.bf16.mxu0 %v3424
    %3879 = vmatpush1.bf16.msra.mxu0 %v3423
    %3880 = vmatprep.subr.bf16.mxu0 %v3428
    %3881 = vmatpush1.bf16.msra.mxu0 %v3427
    %3882 = vmatprep.subr.bf16.mxu0 %v3432
    %3883 = vmatpush1.bf16.msra.mxu0 %v3431
    %3884 = vmatprep.subr.bf16.mxu0 %v3436
    %3885 = vmatpush1.bf16.msra.mxu0 %v3435
    %3886 = vmatprep.subr.bf16.mxu0 %v3440
    %3887 = vmatpush1.bf16.msra.mxu0 %v3439
    %3888 = vmatprep.subr.bf16.mxu0 %v3444
    %3889 = vmatpush1.bf16.msra.mxu0 %v3443
    %3890 = vmatprep.subr.bf16.mxu0 %v3448
    %3891 = vmatpush1.bf16.msra.mxu0 %v3447
    %3892 = vmatprep.subr.bf16.mxu0 %v3452
    %3893 = vmatpush1.bf16.msra.mxu0 %v3451
    %3894 = vmatprep.subr.bf16.mxu0 %v3456
    %3895 = vmatpush1.bf16.msra.mxu0 %v3455
    %3896 = vmatprep.subr.bf16.mxu0 %v3460
    %3897 = vmatpush1.bf16.msra.mxu0 %v3459
    %3898 = vmatprep.subr.bf16.mxu0 %v3464
    %3899 = vmatpush1.bf16.msra.mxu0 %v3463
    %3900 = vmatprep.subr.bf16.mxu0 %v3468
    %3901 = vmatpush1.bf16.msra.mxu0 %v3467
    %3902 = vmatprep.subr.bf16.mxu0 %v3472
    %3903 = vmatpush1.bf16.msra.mxu0 %v3471
    %3904 = vmatprep.subr.bf16.mxu0 %v3476
    %3905 = vmatpush1.bf16.msra.mxu0 %v3475
    %3906 = vmatprep.mubr.bf16.mxu0 %v2494
    %3907 = vmatmul.mubr.bf16.gmra.mrb[0].mxu0 %v2493
    %v3908 = vpop.f32.mrb[0].mxu0
    %v3909 = vadd.f32 %v3868, %v3908
    %v3910 = vpop.f32.mrb[0].mxu0
    %v3911 = vadd.f32 %v3870, %v3910
    %v3912 = vpop.f32.mrb[0].mxu0
    %v3913 = vpop.f32.mrb[0].mxu0
    %3914 = vdwg.mxu0
    %v3915 = vmax.f32 %v3786, 0.0
    %v3916 = vmax.f32 %v3788, 0.0
    %v3917 = vmax.f32 %v3909, 0.0
    %v3918 = vmax.f32 %v3911, 0.0
    %v3919 = vpack.c.bf16 %v3915, %v3915
    %v3920 = vpack.c.bf16 %v3916, %v3916
    %v3921 = vpack.c.bf16 %v3917, %v3917
    %v3922 = vpack.c.bf16 %v3918, %v3918
    %v3923 = vld [vmem:[#allocation11] sm:$0xff]
    %v3924 = vld [vmem:[#allocation11 + $0x8] sm:$0xff]
    %v3925 = vld [vmem:[#allocation11 + $0x10] sm:$0xff]
    %v3926 = vld [vmem:[#allocation11 + $0x18] sm:$0xff]
    %v3927 = vld [vmem:[#allocation11 + $0x20] sm:$0xff]
    %v3928 = vld [vmem:[#allocation11 + $0x28] sm:$0xff]
    %v3929 = vld [vmem:[#allocation11 + $0x30] sm:$0xff]
    %v3930 = vld [vmem:[#allocation11 + $0x38] sm:$0xff]
    %v3931 = vld [vmem:[#allocation11 + $0x40] sm:$0xff]
    %v3932 = vld [vmem:[#allocation11 + $0x48] sm:$0xff]
    %v3933 = vld [vmem:[#allocation11 + $0x50] sm:$0xff]
    %v3934 = vld [vmem:[#allocation11 + $0x58] sm:$0xff]
    %v3935 = vld [vmem:[#allocation11 + $0x60] sm:$0xff]
    %v3936 = vld [vmem:[#allocation11 + $0x68] sm:$0xff]
    %v3937 = vld [vmem:[#allocation11 + $0x70] sm:$0xff]
    %v3938 = vld [vmem:[#allocation11 + $0x78] sm:$0xff]
    %v3939 = vld [vmem:[#allocation11 + $0x80] sm:$0xff]
    %v3940 = vld [vmem:[#allocation11 + $0x88] sm:$0xff]
    %v3941 = vld [vmem:[#allocation11 + $0x90] sm:$0xff]
    %v3942 = vld [vmem:[#allocation11 + $0x98] sm:$0xff]
    %v3943 = vld [vmem:[#allocation11 + $0xa0] sm:$0xff]
    %v3944 = vld [vmem:[#allocation11 + $0xa8] sm:$0xff]
    %v3945 = vld [vmem:[#allocation11 + $0xb0] sm:$0xff]
    %v3946 = vld [vmem:[#allocation11 + $0xb8] sm:$0xff]
    %v3947 = vld [vmem:[#allocation11 + $0xc0] sm:$0xff]
    %v3948 = vld [vmem:[#allocation11 + $0xc8] sm:$0xff]
    %v3949 = vld [vmem:[#allocation11 + $0xd0] sm:$0xff]
    %v3950 = vld [vmem:[#allocation11 + $0xd8] sm:$0xff]
    %v3951 = vld [vmem:[#allocation11 + $0xe0] sm:$0xff]
    %v3952 = vld [vmem:[#allocation11 + $0xe8] sm:$0xff]
    %v3953 = vld [vmem:[#allocation11 + $0xf0] sm:$0xff]
    %v3954 = vld [vmem:[#allocation11 + $0xf8] sm:$0xff]
    %v3955 = vld [vmem:[#allocation11 + $0x100] sm:$0xff]
    %v3956 = vld [vmem:[#allocation11 + $0x108] sm:$0xff]
    %v3957 = vld [vmem:[#allocation11 + $0x110] sm:$0xff]
    %v3958 = vld [vmem:[#allocation11 + $0x118] sm:$0xff]
    %v3959 = vld [vmem:[#allocation11 + $0x120] sm:$0xff]
    %v3960 = vld [vmem:[#allocation11 + $0x128] sm:$0xff]
    %v3961 = vld [vmem:[#allocation11 + $0x130] sm:$0xff]
    %v3962 = vld [vmem:[#allocation11 + $0x138] sm:$0xff]
    %v3963 = vld [vmem:[#allocation11 + $0x140] sm:$0xff]
    %v3964 = vld [vmem:[#allocation11 + $0x148] sm:$0xff]
    %v3965 = vld [vmem:[#allocation11 + $0x150] sm:$0xff]
    %v3966 = vld [vmem:[#allocation11 + $0x158] sm:$0xff]
    %v3967 = vld [vmem:[#allocation11 + $0x160] sm:$0xff]
    %v3968 = vld [vmem:[#allocation11 + $0x168] sm:$0xff]
    %v3969 = vld [vmem:[#allocation11 + $0x170] sm:$0xff]
    %v3970 = vld [vmem:[#allocation11 + $0x178] sm:$0xff]
    %v3971 = vld [vmem:[#allocation11 + $0x180] sm:$0xff]
    %v3972 = vld [vmem:[#allocation11 + $0x188] sm:$0xff]
    %v3973 = vld [vmem:[#allocation11 + $0x190] sm:$0xff]
    %v3974 = vld [vmem:[#allocation11 + $0x198] sm:$0xff]
    %v3975 = vld [vmem:[#allocation11 + $0x1a0] sm:$0xff]
    %v3976 = vld [vmem:[#allocation11 + $0x1a8] sm:$0xff]
    %v3977 = vld [vmem:[#allocation11 + $0x1b0] sm:$0xff]
    %v3978 = vld [vmem:[#allocation11 + $0x1b8] sm:$0xff]
    %v3979 = vld [vmem:[#allocation11 + $0x1c0] sm:$0xff]
    %v3980 = vld [vmem:[#allocation11 + $0x1c8] sm:$0xff]
    %v3981 = vld [vmem:[#allocation11 + $0x1d0] sm:$0xff]
    %v3982 = vld [vmem:[#allocation11 + $0x1d8] sm:$0xff]
    %v3983 = vld [vmem:[#allocation11 + $0x1e0] sm:$0xff]
    %v3984 = vld [vmem:[#allocation11 + $0x1e8] sm:$0xff]
    %v3985 = vld [vmem:[#allocation11 + $0x1f0] sm:$0xff]
    %v3986 = vld [vmem:[#allocation11 + $0x1f8] sm:$0xff]
    %v3987 = vld [vmem:[#allocation13] sm:$0x3]
    %v3989 = vlaneseq
    %v3990 = vshrl.u32 %v3989, 7
    %v3991 = vsub.s32 0, %v3990
    %v3992 = vrot.slane %v3987, %v3991
    %v3993 = vlaneseq
    %v3994 = vshrl.u32 %v3993, 7
    %v3995 = vsub.s32 1, %v3994
    %v3996 = vrot.slane %v3987, %v3995
    %v4063 = vunpack.c.l.b16 %v3923
    %v4064 = vunpack.c.h.b16 %v3923
    %v4065 = vunpack.c.l.b16 %v3924
    %v4066 = vunpack.c.h.b16 %v3924
    %v4067 = vunpack.c.l.b16 %v3925
    %v4068 = vunpack.c.h.b16 %v3925
    %v4069 = vunpack.c.l.b16 %v3926
    %v4070 = vunpack.c.h.b16 %v3926
    %v4071 = vunpack.c.l.b16 %v3927
    %v4072 = vunpack.c.h.b16 %v3927
    %v4073 = vunpack.c.l.b16 %v3928
    %v4074 = vunpack.c.h.b16 %v3928
    %v4075 = vunpack.c.l.b16 %v3929
    %v4076 = vunpack.c.h.b16 %v3929
    %v4077 = vunpack.c.l.b16 %v3930
    %v4078 = vunpack.c.h.b16 %v3930
    %v4079 = vunpack.c.l.b16 %v3931
    %v4080 = vunpack.c.h.b16 %v3931
    %v4081 = vunpack.c.l.b16 %v3932
    %v4082 = vunpack.c.h.b16 %v3932
    %v4083 = vunpack.c.l.b16 %v3933
    %v4084 = vunpack.c.h.b16 %v3933
    %v4085 = vunpack.c.l.b16 %v3934
    %v4086 = vunpack.c.h.b16 %v3934
    %v4087 = vunpack.c.l.b16 %v3935
    %v4088 = vunpack.c.h.b16 %v3935
    %v4089 = vunpack.c.l.b16 %v3936
    %v4090 = vunpack.c.h.b16 %v3936
    %v4091 = vunpack.c.l.b16 %v3937
    %v4092 = vunpack.c.h.b16 %v3937
    %v4093 = vunpack.c.l.b16 %v3938
    %v4094 = vunpack.c.h.b16 %v3938
    %v4095 = vunpack.c.l.b16 %v3939
    %v4096 = vunpack.c.h.b16 %v3939
    %v4097 = vunpack.c.l.b16 %v3940
    %v4098 = vunpack.c.h.b16 %v3940
    %v4099 = vunpack.c.l.b16 %v3941
    %v4100 = vunpack.c.h.b16 %v3941
    %v4101 = vunpack.c.l.b16 %v3942
    %v4102 = vunpack.c.h.b16 %v3942
    %v4103 = vunpack.c.l.b16 %v3943
    %v4104 = vunpack.c.h.b16 %v3943
    %v4105 = vunpack.c.l.b16 %v3944
    %v4106 = vunpack.c.h.b16 %v3944
    %v4107 = vunpack.c.l.b16 %v3945
    %v4108 = vunpack.c.h.b16 %v3945
    %v4109 = vunpack.c.l.b16 %v3946
    %v4110 = vunpack.c.h.b16 %v3946
    %v4111 = vunpack.c.l.b16 %v3947
    %v4112 = vunpack.c.h.b16 %v3947
    %v4113 = vunpack.c.l.b16 %v3948
    %v4114 = vunpack.c.h.b16 %v3948
    %v4115 = vunpack.c.l.b16 %v3949
    %v4116 = vunpack.c.h.b16 %v3949
    %v4117 = vunpack.c.l.b16 %v3950
    %v4118 = vunpack.c.h.b16 %v3950
    %v4119 = vunpack.c.l.b16 %v3951
    %v4120 = vunpack.c.h.b16 %v3951
    %v4121 = vunpack.c.l.b16 %v3952
    %v4122 = vunpack.c.h.b16 %v3952
    %v4123 = vunpack.c.l.b16 %v3953
    %v4124 = vunpack.c.h.b16 %v3953
    %v4125 = vunpack.c.l.b16 %v3954
    %v4126 = vunpack.c.h.b16 %v3954
    %v4127 = vunpack.c.l.b16 %v3955
    %v4128 = vunpack.c.h.b16 %v3955
    %v4129 = vunpack.c.l.b16 %v3956
    %v4130 = vunpack.c.h.b16 %v3956
    %v4131 = vunpack.c.l.b16 %v3957
    %v4132 = vunpack.c.h.b16 %v3957
    %v4133 = vunpack.c.l.b16 %v3958
    %v4134 = vunpack.c.h.b16 %v3958
    %v4135 = vunpack.c.l.b16 %v3959
    %v4136 = vunpack.c.h.b16 %v3959
    %v4137 = vunpack.c.l.b16 %v3960
    %v4138 = vunpack.c.h.b16 %v3960
    %v4139 = vunpack.c.l.b16 %v3961
    %v4140 = vunpack.c.h.b16 %v3961
    %v4141 = vunpack.c.l.b16 %v3962
    %v4142 = vunpack.c.h.b16 %v3962
    %v4143 = vunpack.c.l.b16 %v3963
    %v4144 = vunpack.c.h.b16 %v3963
    %v4145 = vunpack.c.l.b16 %v3964
    %v4146 = vunpack.c.h.b16 %v3964
    %v4147 = vunpack.c.l.b16 %v3965
    %v4148 = vunpack.c.h.b16 %v3965
    %v4149 = vunpack.c.l.b16 %v3966
    %v4150 = vunpack.c.h.b16 %v3966
    %v4151 = vunpack.c.l.b16 %v3967
    %v4152 = vunpack.c.h.b16 %v3967
    %v4153 = vunpack.c.l.b16 %v3968
    %v4154 = vunpack.c.h.b16 %v3968
    %v4155 = vunpack.c.l.b16 %v3969
    %v4156 = vunpack.c.h.b16 %v3969
    %v4157 = vunpack.c.l.b16 %v3970
    %v4158 = vunpack.c.h.b16 %v3970
    %v4159 = vunpack.c.l.b16 %v3971
    %v4160 = vunpack.c.h.b16 %v3971
    %v4161 = vunpack.c.l.b16 %v3972
    %v4162 = vunpack.c.h.b16 %v3972
    %v4163 = vunpack.c.l.b16 %v3973
    %v4164 = vunpack.c.h.b16 %v3973
    %v4165 = vunpack.c.l.b16 %v3974
    %v4166 = vunpack.c.h.b16 %v3974
    %v4167 = vunpack.c.l.b16 %v3975
    %v4168 = vunpack.c.h.b16 %v3975
    %v4169 = vunpack.c.l.b16 %v3976
    %v4170 = vunpack.c.h.b16 %v3976
    %v4171 = vunpack.c.l.b16 %v3977
    %v4172 = vunpack.c.h.b16 %v3977
    %v4173 = vunpack.c.l.b16 %v3978
    %v4174 = vunpack.c.h.b16 %v3978
    %v4175 = vunpack.c.l.b16 %v3979
    %v4176 = vunpack.c.h.b16 %v3979
    %v4177 = vunpack.c.l.b16 %v3980
    %v4178 = vunpack.c.h.b16 %v3980
    %v4179 = vunpack.c.l.b16 %v3981
    %v4180 = vunpack.c.h.b16 %v3981
    %v4181 = vunpack.c.l.b16 %v3982
    %v4182 = vunpack.c.h.b16 %v3982
    %v4183 = vunpack.c.l.b16 %v3983
    %v4184 = vunpack.c.h.b16 %v3983
    %v4185 = vunpack.c.l.b16 %v3984
    %v4186 = vunpack.c.h.b16 %v3984
    %v4187 = vunpack.c.l.b16 %v3985
    %v4188 = vunpack.c.h.b16 %v3985
    %v4189 = vunpack.c.l.b16 %v3986
    %v4190 = vunpack.c.h.b16 %v3986
    %v4191 = vpack.c.b16 %v4065, %v4063
    %v4192 = vpack.c.b16 %v4066, %v4064
    %v4193 = vpack.c.b16 %v4069, %v4067
    %v4194 = vpack.c.b16 %v4070, %v4068
    %v4195 = vpack.c.b16 %v4073, %v4071
    %v4196 = vpack.c.b16 %v4074, %v4072
    %v4197 = vpack.c.b16 %v4077, %v4075
    %v4198 = vpack.c.b16 %v4078, %v4076
    %v4199 = vpack.c.b16 %v4081, %v4079
    %v4200 = vpack.c.b16 %v4082, %v4080
    %v4201 = vpack.c.b16 %v4085, %v4083
    %v4202 = vpack.c.b16 %v4086, %v4084
    %v4203 = vpack.c.b16 %v4089, %v4087
    %v4204 = vpack.c.b16 %v4090, %v4088
    %v4205 = vpack.c.b16 %v4093, %v4091
    %v4206 = vpack.c.b16 %v4094, %v4092
    %v4207 = vpack.c.b16 %v4097, %v4095
    %v4208 = vpack.c.b16 %v4098, %v4096
    %v4209 = vpack.c.b16 %v4101, %v4099
    %v4210 = vpack.c.b16 %v4102, %v4100
    %v4211 = vpack.c.b16 %v4105, %v4103
    %v4212 = vpack.c.b16 %v4106, %v4104
    %v4213 = vpack.c.b16 %v4109, %v4107
    %v4214 = vpack.c.b16 %v4110, %v4108
    %v4215 = vpack.c.b16 %v4113, %v4111
    %v4216 = vpack.c.b16 %v4114, %v4112
    %v4217 = vpack.c.b16 %v4117, %v4115
    %v4218 = vpack.c.b16 %v4118, %v4116
    %v4219 = vpack.c.b16 %v4121, %v4119
    %v4220 = vpack.c.b16 %v4122, %v4120
    %v4221 = vpack.c.b16 %v4125, %v4123
    %v4222 = vpack.c.b16 %v4126, %v4124
    %v4223 = vpack.c.b16 %v4129, %v4127
    %v4224 = vpack.c.b16 %v4130, %v4128
    %v4225 = vpack.c.b16 %v4133, %v4131
    %v4226 = vpack.c.b16 %v4134, %v4132
    %v4227 = vpack.c.b16 %v4137, %v4135
    %v4228 = vpack.c.b16 %v4138, %v4136
    %v4229 = vpack.c.b16 %v4141, %v4139
    %v4230 = vpack.c.b16 %v4142, %v4140
    %v4231 = vpack.c.b16 %v4145, %v4143
    %v4232 = vpack.c.b16 %v4146, %v4144
    %v4233 = vpack.c.b16 %v4149, %v4147
    %v4234 = vpack.c.b16 %v4150, %v4148
    %v4235 = vpack.c.b16 %v4153, %v4151
    %v4236 = vpack.c.b16 %v4154, %v4152
    %v4237 = vpack.c.b16 %v4157, %v4155
    %v4238 = vpack.c.b16 %v4158, %v4156
    %v4239 = vpack.c.b16 %v4161, %v4159
    %v4240 = vpack.c.b16 %v4162, %v4160
    %v4241 = vpack.c.b16 %v4165, %v4163
    %v4242 = vpack.c.b16 %v4166, %v4164
    %v4243 = vpack.c.b16 %v4169, %v4167
    %v4244 = vpack.c.b16 %v4170, %v4168
    %v4245 = vpack.c.b16 %v4173, %v4171
    %v4246 = vpack.c.b16 %v4174, %v4172
    %v4247 = vpack.c.b16 %v4177, %v4175
    %v4248 = vpack.c.b16 %v4178, %v4176
    %v4249 = vpack.c.b16 %v4181, %v4179
    %v4250 = vpack.c.b16 %v4182, %v4180
    %v4251 = vpack.c.b16 %v4185, %v4183
    %v4252 = vpack.c.b16 %v4186, %v4184
    %v4253 = vpack.c.b16 %v4189, %v4187
    %v4254 = vpack.c.b16 %v4190, %v4188
    %4319 = vmatprep.subr.bf16.mxu0 %v4192
    %4320 = vmatpush1.bf16.msra.mxu0 %v4191
    %4321 = vmatprep.subr.bf16.mxu0 %v4194
    %4322 = vmatpush1.bf16.msra.mxu0 %v4193
    %4323 = vmatprep.subr.bf16.mxu0 %v4196
    %4324 = vmatpush1.bf16.msra.mxu0 %v4195
    %4325 = vmatprep.subr.bf16.mxu0 %v4198
    %4326 = vmatpush1.bf16.msra.mxu0 %v4197
    %4327 = vmatprep.subr.bf16.mxu0 %v4200
    %4328 = vmatpush1.bf16.msra.mxu0 %v4199
    %4329 = vmatprep.subr.bf16.mxu0 %v4202
    %4330 = vmatpush1.bf16.msra.mxu0 %v4201
    %4331 = vmatprep.subr.bf16.mxu0 %v4204
    %4332 = vmatpush1.bf16.msra.mxu0 %v4203
    %4333 = vmatprep.subr.bf16.mxu0 %v4206
    %4334 = vmatpush1.bf16.msra.mxu0 %v4205
    %4335 = vmatprep.subr.bf16.mxu0 %v4208
    %4336 = vmatpush1.bf16.msra.mxu0 %v4207
    %4337 = vmatprep.subr.bf16.mxu0 %v4210
    %4338 = vmatpush1.bf16.msra.mxu0 %v4209
    %4339 = vmatprep.subr.bf16.mxu0 %v4212
    %4340 = vmatpush1.bf16.msra.mxu0 %v4211
    %4341 = vmatprep.subr.bf16.mxu0 %v4214
    %4342 = vmatpush1.bf16.msra.mxu0 %v4213
    %4343 = vmatprep.subr.bf16.mxu0 %v4216
    %4344 = vmatpush1.bf16.msra.mxu0 %v4215
    %4345 = vmatprep.subr.bf16.mxu0 %v4218
    %4346 = vmatpush1.bf16.msra.mxu0 %v4217
    %4347 = vmatprep.subr.bf16.mxu0 %v4220
    %4348 = vmatpush1.bf16.msra.mxu0 %v4219
    %4349 = vmatprep.subr.bf16.mxu0 %v4222
    %4350 = vmatpush1.bf16.msra.mxu0 %v4221
    %4351 = vmatprep.mubr.bf16.mxu0 %v3920
    %4352 = vmatmul.mubr.bf16.gmra.mrb[0].mxu0 %v3919
    %v4353 = vpop.f32.mrb[0].mxu0
    %v4354 = vadd.f32 %v3992, %v4353
    %v4355 = vpop.f32.mrb[0].mxu0
    %v4356 = vadd.f32 %v3996, %v4355
    %v4357 = vpop.f32.mrb[0].mxu0
    %v4358 = vpop.f32.mrb[0].mxu0
    %4359 = vdwg.mxu0
    %4360 = vmatprep.subr.bf16.mxu0 %v4224
    %4361 = vmatpush1.bf16.msra.mxu0 %v4223
    %4362 = vmatprep.subr.bf16.mxu0 %v4226
    %4363 = vmatpush1.bf16.msra.mxu0 %v4225
    %4364 = vmatprep.subr.bf16.mxu0 %v4228
    %4365 = vmatpush1.bf16.msra.mxu0 %v4227
    %4366 = vmatprep.subr.bf16.mxu0 %v4230
    %4367 = vmatpush1.bf16.msra.mxu0 %v4229
    %4368 = vmatprep.subr.bf16.mxu0 %v4232
    %4369 = vmatpush1.bf16.msra.mxu0 %v4231
    %4370 = vmatprep.subr.bf16.mxu0 %v4234
    %4371 = vmatpush1.bf16.msra.mxu0 %v4233
    %4372 = vmatprep.subr.bf16.mxu0 %v4236
    %4373 = vmatpush1.bf16.msra.mxu0 %v4235
    %4374 = vmatprep.subr.bf16.mxu0 %v4238
    %4375 = vmatpush1.bf16.msra.mxu0 %v4237
    %4376 = vmatprep.subr.bf16.mxu0 %v4240
    %4377 = vmatpush1.bf16.msra.mxu0 %v4239
    %4378 = vmatprep.subr.bf16.mxu0 %v4242
    %4379 = vmatpush1.bf16.msra.mxu0 %v4241
    %4380 = vmatprep.subr.bf16.mxu0 %v4244
    %4381 = vmatpush1.bf16.msra.mxu0 %v4243
    %4382 = vmatprep.subr.bf16.mxu0 %v4246
    %4383 = vmatpush1.bf16.msra.mxu0 %v4245
    %4384 = vmatprep.subr.bf16.mxu0 %v4248
    %4385 = vmatpush1.bf16.msra.mxu0 %v4247
    %4386 = vmatprep.subr.bf16.mxu0 %v4250
    %4387 = vmatpush1.bf16.msra.mxu0 %v4249
    %4388 = vmatprep.subr.bf16.mxu0 %v4252
    %4389 = vmatpush1.bf16.msra.mxu0 %v4251
    %4390 = vmatprep.subr.bf16.mxu0 %v4254
    %4391 = vmatpush1.bf16.msra.mxu0 %v4253
    %4392 = vmatprep.mubr.bf16.mxu0 %v3922
    %4393 = vmatmul.mubr.bf16.gmra.mrb[0].mxu0 %v3921
    %v4394 = vpop.f32.mrb[0].mxu0
    %v4395 = vadd.f32 %v4354, %v4394
    %v4396 = vpop.f32.mrb[0].mxu0
    %v4397 = vadd.f32 %v4356, %v4396
    %v4398 = vpop.f32.mrb[0].mxu0
    %v4399 = vpop.f32.mrb[0].mxu0
    %4400 = vdwg.mxu0
    %v4401 = vmax.f32 %v4395, 0.0
    %v4402 = vmax.f32 %v4397, 0.0
    %v4403 = vpack.c.bf16 %v4401, %v4401
    %v4404 = vpack.c.bf16 %v4402, %v4402
    %v4405 = vld [vmem:[#allocation14] sm:$0xf]
    %v4406 = vld [vmem:[#allocation14 + $0x4] sm:$0xf]
    %v4407 = vld [vmem:[#allocation14 + $0x8] sm:$0xf]
    %v4408 = vld [vmem:[#allocation14 + $0xc] sm:$0xf]
    %v4409 = vld [vmem:[#allocation14 + $0x10] sm:$0xf]
    %v4410 = vld [vmem:[#allocation14 + $0x14] sm:$0xf]
    %v4411 = vld [vmem:[#allocation14 + $0x18] sm:$0xf]
    %v4412 = vld [vmem:[#allocation14 + $0x1c] sm:$0xf]
    %v4413 = vld [vmem:[#allocation14 + $0x20] sm:$0xf]
    %v4414 = vld [vmem:[#allocation14 + $0x24] sm:$0xf]
    %v4415 = vld [vmem:[#allocation14 + $0x28] sm:$0xf]
    %v4416 = vld [vmem:[#allocation14 + $0x2c] sm:$0xf]
    %v4417 = vld [vmem:[#allocation14 + $0x30] sm:$0xf]
    %v4418 = vld [vmem:[#allocation14 + $0x34] sm:$0xf]
    %v4419 = vld [vmem:[#allocation14 + $0x38] sm:$0xf]
    %v4420 = vld [vmem:[#allocation14 + $0x3c] sm:$0xf]
    %v4421 = vld [vmem:[#allocation14 + $0x40] sm:$0xf]
    %v4422 = vld [vmem:[#allocation14 + $0x44] sm:$0xf]
    %v4423 = vld [vmem:[#allocation14 + $0x48] sm:$0xf]
    %v4424 = vld [vmem:[#allocation14 + $0x4c] sm:$0xf]
    %v4425 = vld [vmem:[#allocation14 + $0x50] sm:$0xf]
    %v4426 = vld [vmem:[#allocation14 + $0x54] sm:$0xf]
    %v4427 = vld [vmem:[#allocation14 + $0x58] sm:$0xf]
    %v4428 = vld [vmem:[#allocation14 + $0x5c] sm:$0xf]
    %v4429 = vld [vmem:[#allocation14 + $0x60] sm:$0xf]
    %v4430 = vld [vmem:[#allocation14 + $0x64] sm:$0xf]
    %v4431 = vld [vmem:[#allocation14 + $0x68] sm:$0xf]
    %v4432 = vld [vmem:[#allocation14 + $0x6c] sm:$0xf]
    %v4433 = vld [vmem:[#allocation14 + $0x70] sm:$0xf]
    %v4434 = vld [vmem:[#allocation14 + $0x74] sm:$0xf]
    %v4435 = vld [vmem:[#allocation14 + $0x78] sm:$0xf]
    %v4436 = vld [vmem:[#allocation14 + $0x7c] sm:$0xf]
    %v4437 = vld [vmem:[#allocation16] sm:$0x1]
    %v4439 = vlaneseq
    %v4440 = vshrl.u32 %v4439, 7
    %v4441 = vsub.s32 0, %v4440
    %v4442 = vrot.slane %v4437, %v4441
    %v4476 = vunpack.c.l.b16 %v4405
    %v4477 = vunpack.c.l.b16 %v4406
    %v4478 = vunpack.c.l.b16 %v4407
    %v4479 = vunpack.c.l.b16 %v4408
    %v4480 = vunpack.c.l.b16 %v4409
    %v4481 = vunpack.c.l.b16 %v4410
    %v4482 = vunpack.c.l.b16 %v4411
    %v4483 = vunpack.c.l.b16 %v4412
    %v4484 = vunpack.c.l.b16 %v4413
    %v4485 = vunpack.c.l.b16 %v4414
    %v4486 = vunpack.c.l.b16 %v4415
    %v4487 = vunpack.c.l.b16 %v4416
    %v4488 = vunpack.c.l.b16 %v4417
    %v4489 = vunpack.c.l.b16 %v4418
    %v4490 = vunpack.c.l.b16 %v4419
    %v4491 = vunpack.c.l.b16 %v4420
    %v4492 = vunpack.c.l.b16 %v4421
    %v4493 = vunpack.c.l.b16 %v4422
    %v4494 = vunpack.c.l.b16 %v4423
    %v4495 = vunpack.c.l.b16 %v4424
    %v4496 = vunpack.c.l.b16 %v4425
    %v4497 = vunpack.c.l.b16 %v4426
    %v4498 = vunpack.c.l.b16 %v4427
    %v4499 = vunpack.c.l.b16 %v4428
    %v4500 = vunpack.c.l.b16 %v4429
    %v4501 = vunpack.c.l.b16 %v4430
    %v4502 = vunpack.c.l.b16 %v4431
    %v4503 = vunpack.c.l.b16 %v4432
    %v4504 = vunpack.c.l.b16 %v4433
    %v4505 = vunpack.c.l.b16 %v4434
    %v4506 = vunpack.c.l.b16 %v4435
    %v4507 = vunpack.c.l.b16 %v4436
    %v4508 = vpack.c.b16 %v4477, %v4476
    %v4509 = vpack.c.b16 %v4479, %v4478
    %v4510 = vpack.c.b16 %v4481, %v4480
    %v4511 = vpack.c.b16 %v4483, %v4482
    %v4512 = vpack.c.b16 %v4485, %v4484
    %v4513 = vpack.c.b16 %v4487, %v4486
    %v4514 = vpack.c.b16 %v4489, %v4488
    %v4515 = vpack.c.b16 %v4491, %v4490
    %v4516 = vpack.c.b16 %v4493, %v4492
    %v4517 = vpack.c.b16 %v4495, %v4494
    %v4518 = vpack.c.b16 %v4497, %v4496
    %v4519 = vpack.c.b16 %v4499, %v4498
    %v4520 = vpack.c.b16 %v4501, %v4500
    %v4521 = vpack.c.b16 %v4503, %v4502
    %v4522 = vpack.c.b16 %v4505, %v4504
    %v4523 = vpack.c.b16 %v4507, %v4506
    %4540 = vmatprep.subr.bf16.mxu0 0
    %4541 = vmatpush1.bf16.msra.mxu0 %v4508
    %4542 = vmatprep.subr.bf16.mxu0 0
    %4543 = vmatpush1.bf16.msra.mxu0 %v4509
    %4544 = vmatprep.subr.bf16.mxu0 0
    %4545 = vmatpush1.bf16.msra.mxu0 %v4510
    %4546 = vmatprep.subr.bf16.mxu0 0
    %4547 = vmatpush1.bf16.msra.mxu0 %v4511
    %4548 = vmatprep.subr.bf16.mxu0 0
    %4549 = vmatpush1.bf16.msra.mxu0 %v4512
    %4550 = vmatprep.subr.bf16.mxu0 0
    %4551 = vmatpush1.bf16.msra.mxu0 %v4513
    %4552 = vmatprep.subr.bf16.mxu0 0
    %4553 = vmatpush1.bf16.msra.mxu0 %v4514
    %4554 = vmatprep.subr.bf16.mxu0 0
    %4555 = vmatpush1.bf16.msra.mxu0 %v4515
    %4556 = vmatprep.subr.bf16.mxu0 0
    %4557 = vmatpush1.bf16.msra.mxu0 %v4516
    %4558 = vmatprep.subr.bf16.mxu0 0
    %4559 = vmatpush1.bf16.msra.mxu0 %v4517
    %4560 = vmatprep.subr.bf16.mxu0 0
    %4561 = vmatpush1.bf16.msra.mxu0 %v4518
    %4562 = vmatprep.subr.bf16.mxu0 0
    %4563 = vmatpush1.bf16.msra.mxu0 %v4519
    %4564 = vmatprep.subr.bf16.mxu0 0
    %4565 = vmatpush1.bf16.msra.mxu0 %v4520
    %4566 = vmatprep.subr.bf16.mxu0 0
    %4567 = vmatpush1.bf16.msra.mxu0 %v4521
    %4568 = vmatprep.subr.bf16.mxu0 0
    %4569 = vmatpush1.bf16.msra.mxu0 %v4522
    %4570 = vmatprep.subr.bf16.mxu0 0
    %4571 = vmatpush1.bf16.msra.mxu0 %v4523
    %4572 = vmatprep.mubr.bf16.mxu0 %v4404
    %4573 = vmatmul.mubr.bf16.gmra.mrb[0].mxu0 %v4403
    %v4574 = vpop.f32.mrb[0].mxu0
    %v4575 = vadd.f32 %v4442, %v4574
    %v4576 = vpop.f32.mrb[0].mxu0
    %v4577 = vpop.f32.mrb[0].mxu0
    %v4578 = vpop.f32.mrb[0].mxu0
    %4579 = vdwg.mxu0
    %v4580 = vmax.f32 %v4575, 0.0
    %v4581 = vpack.c.bf16 %v4580, %v4580
    %v4582 = vld [vmem:[#allocation17] sm:$0xf]
    %v4583 = vld [vmem:[#allocation17 + $0x4] sm:$0xf]
    %v4584 = vld [vmem:[#allocation17 + $0x8] sm:$0xf]
    %v4585 = vld [vmem:[#allocation17 + $0xc] sm:$0xf]
    %v4586 = vld [vmem:[#allocation17 + $0x10] sm:$0xf]
    %v4587 = vld [vmem:[#allocation17 + $0x14] sm:$0xf]
    %v4588 = vld [vmem:[#allocation17 + $0x18] sm:$0xf]
    %v4589 = vld [vmem:[#allocation17 + $0x1c] sm:$0xf]
    %v4590 = vld [vmem:[#allocation17 + $0x20] sm:$0xf]
    %v4591 = vld [vmem:[#allocation17 + $0x24] sm:$0xf]
    %v4592 = vld [vmem:[#allocation17 + $0x28] sm:$0xf]
    %v4593 = vld [vmem:[#allocation17 + $0x2c] sm:$0xf]
    %v4594 = vld [vmem:[#allocation17 + $0x30] sm:$0xf]
    %v4595 = vld [vmem:[#allocation17 + $0x34] sm:$0xf]
    %v4596 = vld [vmem:[#allocation17 + $0x38] sm:$0xf]
    %v4597 = vld [vmem:[#allocation17 + $0x3c] sm:$0xf]
    %v4598 = vld [vmem:[#allocation19] sm:$0x1]
    %v4600 = vlaneseq
    %v4601 = vshrl.u32 %v4600, 7
    %v4602 = vsub.s32 0, %v4601
    %v4603 = vrot.slane %v4598, %v4602
    %v4621 = vunpack.c.l.b16 %v4582
    %v4622 = vunpack.c.l.b16 %v4583
    %v4623 = vunpack.c.l.b16 %v4584
    %v4624 = vunpack.c.l.b16 %v4585
    %v4625 = vunpack.c.l.b16 %v4586
    %v4626 = vunpack.c.l.b16 %v4587
    %v4627 = vunpack.c.l.b16 %v4588
    %v4628 = vunpack.c.l.b16 %v4589
    %v4629 = vunpack.c.l.b16 %v4590
    %v4630 = vunpack.c.l.b16 %v4591
    %v4631 = vunpack.c.l.b16 %v4592
    %v4632 = vunpack.c.l.b16 %v4593
    %v4633 = vunpack.c.l.b16 %v4594
    %v4634 = vunpack.c.l.b16 %v4595
    %v4635 = vunpack.c.l.b16 %v4596
    %v4636 = vunpack.c.l.b16 %v4597
    %v4637 = vpack.c.b16 %v4622, %v4621
    %v4638 = vpack.c.b16 %v4624, %v4623
    %v4639 = vpack.c.b16 %v4626, %v4625
    %v4640 = vpack.c.b16 %v4628, %v4627
    %v4641 = vpack.c.b16 %v4630, %v4629
    %v4642 = vpack.c.b16 %v4632, %v4631
    %v4643 = vpack.c.b16 %v4634, %v4633
    %v4644 = vpack.c.b16 %v4636, %v4635
    %4653 = vmatprep.subr.bf16.mxu0 0
    %4654 = vmatpush1.bf16.msra.mxu0 %v4637
    %4655 = vmatprep.subr.bf16.mxu0 0
    %4656 = vmatpush1.bf16.msra.mxu0 %v4638
    %4657 = vmatprep.subr.bf16.mxu0 0
    %4658 = vmatpush1.bf16.msra.mxu0 %v4639
    %4659 = vmatprep.subr.bf16.mxu0 0
    %4660 = vmatpush1.bf16.msra.mxu0 %v4640
    %4661 = vmatprep.subr.bf16.mxu0 0
    %4662 = vmatpush1.bf16.msra.mxu0 %v4641
    %4663 = vmatprep.subr.bf16.mxu0 0
    %4664 = vmatpush1.bf16.msra.mxu0 %v4642
    %4665 = vmatprep.subr.bf16.mxu0 0
    %4666 = vmatpush1.bf16.msra.mxu0 %v4643
    %4667 = vmatprep.subr.bf16.mxu0 0
    %4668 = vmatpush1.bf16.msra.mxu0 %v4644
    %4669 = vmatprep.subr.bf16.mxu0 0
    %4670 = vmatpush1.bf16.msra.mxu0 0
    %4671 = vmatprep.subr.bf16.mxu0 0
    %4672 = vmatpush1.bf16.msra.mxu0 0
    %4673 = vmatprep.subr.bf16.mxu0 0
    %4674 = vmatpush1.bf16.msra.mxu0 0
    %4675 = vmatprep.subr.bf16.mxu0 0
    %4676 = vmatpush1.bf16.msra.mxu0 0
    %4677 = vmatprep.subr.bf16.mxu0 0
    %4678 = vmatpush1.bf16.msra.mxu0 0
    %4679 = vmatprep.subr.bf16.mxu0 0
    %4680 = vmatpush1.bf16.msra.mxu0 0
    %4681 = vmatprep.subr.bf16.mxu0 0
    %4682 = vmatpush1.bf16.msra.mxu0 0
    %4683 = vmatprep.subr.bf16.mxu0 0
    %4684 = vmatpush1.bf16.msra.mxu0 0
    %4685 = vmatprep.mubr.bf16.mxu0 0
    %4686 = vmatmul.mubr.bf16.gmra.mrb[0].mxu0 %v4581
    %v4687 = vpop.f32.mrb[0].mxu0
    %v4688 = vadd.f32 %v4603, %v4687
    %v4689 = vpop.f32.mrb[0].mxu0
    %v4690 = vpop.f32.mrb[0].mxu0
    %v4691 = vpop.f32.mrb[0].mxu0
    %4692 = vdwg.mxu0
    %4693 = vst [vmem:[#allocation20] sm:$0xff] %v4688
    // Predicated region
    $region90: #{tpu_custom_call.1} parent=1 // pred_check
      _
    $region91: #{tpu_custom_call.1} parent=1 // pred_check_branch
      %4695 = sbr.rel (0) target = $region93
    $region92: #{tpu_custom_call.1} parent=1 // pred_region
      %s4697 = ssub.s32 128, 128
      %4698 = vsyncadd [#allocation4], %s4697
      %s4700 = sshll.u32 [#allocation20], 4
      %s4701 = int_to_ptr.vmem [resolvable:$true] %s4700
      %4703 = dma.vmem_to_hbm [thread:$0]  %s4701, 128, %s11, [#allocation4]
    $region93: #{tpu_custom_call.1} parent=1 // pred_fallthru
      _
    // Predicated region
    $region94: #{tpu_custom_call.1} parent=1 // pred_check
      _
    $region95: #{tpu_custom_call.1} parent=1 // pred_check_branch
      %4705 = sbr.rel (0) target = $region97
    $region96: #{tpu_custom_call.1} parent=1 // pred_region
      %4706 = dma.done [#allocation4], 128
    $region97: #{tpu_custom_call.1} parent=1 // pred_fallthru
      _
    %4707 = vsyncpa [#allocation3], 1
    %4708 = vsyncpa [#allocation6], 1
    %4709 = vsyncpa [#allocation9], 1
    %4710 = vsyncpa [#allocation12], 1
    %4711 = vsyncpa [#allocation15], 1
    %4712 = vsyncpa [#allocation18], 1
    %4713 = vsyncpa [#allocation4], 1

</llo_original>
